<compile_context>
chip_gen: v5e
topology: v5e:2x2
jax: 0.10.0
libtpu: 0.0.40
codegen_flags: <defaults>
</compile_context>

<pallas_src>
import functools

import jax
import jax.numpy as jnp
from jax.experimental import pallas as pl
from jax.experimental.pallas import tpu as pltpu

_BN_EPS = 1e-5


# ----------------------------------------------------------------------------
# Fused AttentionFusionModule kernel body
# ----------------------------------------------------------------------------
def _afm_body(x_ref, low_ref, wx_ref, wl_ref, wa_ref, wf_ref, bf_ref,
              out_ref, feat_scr, sum_scr, att_scr, *, bm, inv_m):
    p = pl.program_id(0)          # 0: project + column-sum, 1: attention apply
    i = pl.program_id(1)          # row-block index
    nblk = pl.num_programs(1)
    off = pl.multiple_of(i * bm, bm)

    @pl.when(p == 0)
    def _project():
        @pl.when(i == 0)
        def _init():
            sum_scr[...] = jnp.zeros_like(sum_scr)

        # bf16 operands, f32 accumulation on the MXU.
        xp = jnp.maximum(
            jnp.dot(x_ref[...], wx_ref[...],
                    preferred_element_type=jnp.float32), 0.0)
        lp = jnp.maximum(
            jnp.dot(low_ref[...], wl_ref[...],
                    preferred_element_type=jnp.float32), 0.0)
        feat = xp + lp
        feat_scr[pl.ds(off, bm), :] = feat                    # resident in VMEM
        sum_scr[...] += jnp.sum(feat, axis=0, keepdims=True)  # GAP accumulator

        @pl.when(i == nblk - 1)
        def _attention_vector():
            gap = sum_scr[...] * inv_m                        # global avg pool
            logits = jnp.dot(gap, wa_ref[...],
                             preferred_element_type=jnp.float32)
            att_scr[...] = 1.0 / (1.0 + jnp.exp(-logits))     # sigmoid

    @pl.when(p == 1)
    def _apply():
        feat = feat_scr[pl.ds(off, bm), :]
        applied = feat * att_scr[...] + feat
        if wf_ref is not None:   # afm3: fold the decoder's final 1x1 conv+bias
            applied = (jnp.dot(applied.astype(wf_ref.dtype), wf_ref[...],
                               preferred_element_type=jnp.float32)
                       + bf_ref[...])
        out_ref[...] = applied.astype(out_ref.dtype)


# ----------------------------------------------------------------------------
# pallas_call wrapper for one AttentionFusionModule (+ optional folded conv)
# ----------------------------------------------------------------------------
def _pick_block_m(m):
    # Largest lane/sublane-friendly row tile dividing M (cap 512: per-step
    # overhead dominates below ~256 rows; VMEM pressure grows beyond ~512).
    for bm in (512, 256, 128, 64, 32, 16):
        if m % bm == 0:
            return bm
    return m  # odd M: single full-extent block


def attention_fusion(params, x_nhwc, low_nhwc, *, final_w=None, final_b=None):
    n, hl, wl_, cl = low_nhwc.shape
    x_up = _bilinear_resize_nhwc(x_nhwc, hl, wl_)
    m = n * hl * wl_
    cx = x_up.shape[-1]

    # bf16 MXU operands; accumulation stays f32 inside the kernel.
    x2d = x_up.reshape(m, cx).astype(jnp.bfloat16)
    low2d = low_nhwc.reshape(m, cl).astype(jnp.bfloat16)
    wx = params["wx"].astype(jnp.bfloat16)
    wl = params["wl"].astype(jnp.bfloat16)
    wa = params["wa"]                      # tiny (1,Co)@(Co,Co) matmul, keep f32
    co = wx.shape[1]

    fold_final = final_w is not None
    bm = _pick_block_m(m)
    nblk = m // bm
    inv_m = 1.0 / float(m)

    # Pass 1 reads only the VMEM-resident feat scratch, so collapse the input
    # index maps to block 0 during pass 1 (no redundant HBM re-fetch).  The
    # output index stays at block 0 through pass 0 (no garbage write-backs) and
    # only advances during pass 1.
    row_map = lambda p, i: (i * (1 - p), 0)
    rep_map = lambda p, i: (0, 0)
    out_map = lambda p, i: (i * p, 0)

    in_specs = [
        pl.BlockSpec((bm, cx), row_map),
        pl.BlockSpec((bm, cl), row_map),
        pl.BlockSpec((cx, co), rep_map),
        pl.BlockSpec((cl, co), rep_map),
        pl.BlockSpec((co, co), rep_map),
    ]
    args = [x2d, low2d, wx, wl, wa]
    co_out = co
    if fold_final:
        co_out = final_w.shape[1]
        in_specs += [pl.BlockSpec((co, co_out), rep_map),
                     pl.BlockSpec((1, co_out), rep_map)]
        args += [final_w.astype(jnp.bfloat16), final_b]

    if fold_final:
        def kernel(x_r, l_r, wx_r, wl_r, wa_r, wf_r, bf_r, o_r, f_s, s_s, a_s):
            _afm_body(x_r, l_r, wx_r, wl_r, wa_r, wf_r, bf_r,
                      o_r, f_s, s_s, a_s, bm=bm, inv_m=inv_m)
    else:
        def kernel(x_r, l_r, wx_r, wl_r, wa_r, o_r, f_s, s_s, a_s):
            _afm_body(x_r, l_r, wx_r, wl_r, wa_r, None, None,
                      o_r, f_s, s_s, a_s, bm=bm, inv_m=inv_m)

    out2d = pl.pallas_call(
        kernel,
        out_shape=jax.ShapeDtypeStruct((m, co_out), jnp.float32),
        grid_spec=pltpu.PrefetchScalarGridSpec(
            num_scalar_prefetch=0,
            grid=(2, nblk),
            in_specs=in_specs,
            out_specs=pl.BlockSpec((bm, co_out), out_map),
            scratch_shapes=[
                pltpu.VMEM((m, co), jnp.float32),   # feat, resident across passes
                pltpu.VMEM((1, co), jnp.float32),   # per-channel column sums
                pltpu.VMEM((1, co), jnp.float32),   # sigmoid attention vector
            ],
        ),
        # Sequential execution is required by the resident column-sum
        # accumulator and cross-pass feat scratch.
        # TODO(synk): for v7x megacore at production M, emit per-block partial
        # sums and mark the row axis "parallel".
        compiler_params=pltpu.CompilerParams(
            dimension_semantics=("arbitrary", "arbitrary")),
    )(*args)
    return out2d.reshape(n, hl, wl_, co_out)


# ----------------------------------------------------------------------------
# Plain-JAX glue: bilinear upsample (align_corners=True), module composition
# ----------------------------------------------------------------------------
def _bilinear_resize_nhwc(x, out_h, out_w):
    """F.interpolate(..., mode='bilinear', align_corners=True) on NHWC."""
    n, h, w, c = x.shape
    if h == out_h and w == out_w:
        return x

    def grid(out_size, in_size):
        if out_size == 1 or in_size == 1:
            return jnp.zeros((out_size,), jnp.float32)
        return jnp.arange(out_size, dtype=jnp.float32) * ((in_size - 1) / (out_size - 1))

    ys = grid(out_h, h)
    xs = grid(out_w, w)
    y0 = jnp.floor(ys).astype(jnp.int32)
    y1 = jnp.minimum(y0 + 1, h - 1)
    x0 = jnp.floor(xs).astype(jnp.int32)
    x1 = jnp.minimum(x0 + 1, w - 1)
    wy = (ys - y0.astype(jnp.float32)).reshape(1, out_h, 1, 1)
    wx = (xs - x0.astype(jnp.float32)).reshape(1, 1, out_w, 1)

    r0 = x[:, y0, :, :]
    r1 = x[:, y1, :, :]
    top = r0[:, :, x0, :] * (1.0 - wx) + r0[:, :, x1, :] * wx
    bot = r1[:, :, x0, :] * (1.0 - wx) + r1[:, :, x1, :] * wx
    return top * (1.0 - wy) + bot * wy
    # TODO(synk): the x-branch 1x1 conv could be commuted before this upsample
    # (both are linear) to cut x-branch MXU FLOPs by the upsample ratio.


def decoder_forward(params, x, low1, low2, low3, *, num_classes):
    """Inputs in PyTorch NCHW; output in NCHW."""
    to_nhwc = lambda t: jnp.transpose(t, (0, 2, 3, 1))
    x_n = to_nhwc(x)
    l1, l2, l3 = to_nhwc(low1), to_nhwc(low2), to_nhwc(low3)

    y = attention_fusion(params["afm1"], x_n, l3)
    y = attention_fusion(params["afm2"], y, l2)
    # afm3 also folds the final 1x1 conv + bias (lane-padded to 128 channels).
    y = attention_fusion(params["afm3"], y, l1,
                         final_w=params["final_w"], final_b=params["final_b"])
    y = y[..., :num_classes]               # drop lane padding
    return jnp.transpose(y, (0, 3, 1, 2))  # back to NCHW


# ----------------------------------------------------------------------------
# Deterministic parameter init (kaiming_normal_ for convs, BN folded as scale)
# ----------------------------------------------------------------------------
def _round_up(n, mult):
    return ((n + mult - 1) // mult) * mult


def _kaiming(key, fan_in, fan_out):
    # PyTorch kaiming_normal_: std = sqrt(2 / fan_in); stored as (in, out).
    return jax.random.normal(key, (fan_in, fan_out), jnp.float32) * jnp.sqrt(2.0 / fan_in)


def _make_afm_params(key, x_ch, in_ch, out_ch, out_pad=None):
    k1, k2, k3 = jax.random.split(key, 3)
    co = out_pad if out_pad is not None else out_ch
    pad = co - out_ch
    bn_scale = 1.0 / jnp.sqrt(1.0 + _BN_EPS)  # BN gamma=1, beta=0, mean=0, var=1
    wx = _kaiming(k1, x_ch, out_ch) * bn_scale
    wl = _kaiming(k2, in_ch, out_ch) * bn_scale
    wa = _kaiming(k3, out_ch, out_ch) * bn_scale
    # Lane-pad the output-channel axis (and wa's input axis) with zeros.
    return {
        "wx": jnp.pad(wx, ((0, 0), (0, pad))),
        "wl": jnp.pad(wl, ((0, 0), (0, pad))),
        "wa": jnp.pad(wa, ((0, pad), (0, pad))),
    }


def make_decoder_params(key, num_classes, x_channels=256,
                        low_ch1=256, low_ch2=512, low_ch3=1024):
    k1, k2, k3, k4, k5 = jax.random.split(key, 5)
    ncp = _round_up(num_classes, 128)      # lane-dense padded class count
    pad = ncp - num_classes
    final_w = jnp.pad(_kaiming(k4, num_classes, num_classes), ((0, pad), (0, pad)))
    final_b = jnp.pad(jax.random.normal(k5, (1, num_classes), jnp.float32) * 0.01,
                      ((0, 0), (0, pad)))
    return {
        "afm1": _make_afm_params(k1, x_channels, low_ch3, 256),
        "afm2": _make_afm_params(k2, 256, low_ch2, 256),
        "afm3": _make_afm_params(k3, 256, low_ch1, num_classes, out_pad=ncp),
        "final_w": final_w,
        "final_b": final_b,
    }


# ----------------------------------------------------------------------------
# Pure-JAX reference (f32) for a loose correctness check
# ----------------------------------------------------------------------------
def _decoder_reference(params, x, low1, low2, low3, *, num_classes):
    to_nhwc = lambda t: jnp.transpose(t, (0, 2, 3, 1))

    def afm(p, xin, low):
        n, h, w, _ = low.shape
        x_up = _bilinear_resize_nhwc(xin, h, w)
        m = n * h * w
        x2d = x_up.reshape(m, -1)
        low2d = low.reshape(m, -1)
        feat = (jnp.maximum(x2d @ p["wx"], 0.0)
                + jnp.maximum(low2d @ p["wl"], 0.0))
        gap = jnp.mean(feat, axis=0, keepdims=True)
        atten = jax.nn.sigmoid(gap @ p["wa"])
        return (feat * atten + feat).reshape(n, h, w, -1)

    y = afm(params["afm1"], to_nhwc(x), to_nhwc(low3))
    y = afm(params["afm2"], y, to_nhwc(low2))
    y = afm(params["afm3"], y, to_nhwc(low1))
    n, h, w, c = y.shape
    y2d = y.reshape(n * h * w, c) @ params["final_w"] + params["final_b"]
    y = y2d.reshape(n, h, w, -1)[..., :num_classes]
    return jnp.transpose(y, (0, 3, 1, 2))


# ----------------------------------------------------------------------------
if __name__ == "__main__":
    key = jax.random.PRNGKey(0)
    k_x, k_l1, k_l2, k_l3, k_p = jax.random.split(key, 5)

    num_classes = 8
    # Small shapes consistent with ResNet-backbone DeepLab strides:
    # x (ASPP out, 256ch) and low3 (1024ch) at 4x4, low2 (512ch) at 8x8,
    # low1 (256ch) at 16x16.
    x = jax.random.normal(k_x, (1, 256, 4, 4), jnp.float32)
    low1 = jax.random.normal(k_l1, (1, 256, 16, 16), jnp.float32)
    low2 = jax.random.normal(k_l2, (1, 512, 8, 8), jnp.float32)
    low3 = jax.random.normal(k_l3, (1, 1024, 4, 4), jnp.float32)

    params = make_decoder_params(k_p, num_classes)

    fwd = jax.jit(functools.partial(decoder_forward, params, num_classes=num_classes))
    out = jax.block_until_ready(fwd(x, low1, low2, low3))

    assert out.shape == (1, num_classes, 16, 16), out.shape
    assert bool(jnp.all(jnp.isfinite(out)))

    # Loose check vs f32 reference (difference comes only from bf16 MXU feeds).
    ref = _decoder_reference(params, x, low1, low2, low3, num_classes=num_classes)
    rel = float(jnp.linalg.norm(out - ref) / (jnp.linalg.norm(ref) + 1e-6))
    assert rel < 0.05, rel

    print("KERNEL_OK")
</pallas_src>

<mosaic_0001>
module attributes {stable_mosaic.version = 11 : i64} {
  func.func @kernel(%arg0: i32, %arg1: i32, %arg2: memref<16x256xbf16, #tpu.memory_space<vmem>>, %arg3: memref<16x1024xbf16, #tpu.memory_space<vmem>>, %arg4: memref<256x256xbf16, #tpu.memory_space<vmem>>, %arg5: memref<1024x256xbf16, #tpu.memory_space<vmem>>, %arg6: memref<256x256xf32, #tpu.memory_space<vmem>>, %arg7: memref<16x256xf32, #tpu.memory_space<vmem>>, %arg8: memref<16x256xf32, #tpu.memory_space<vmem>>, %arg9: memref<1x256xf32, #tpu.memory_space<vmem>>, %arg10: memref<1x256xf32, #tpu.memory_space<vmem>>) attributes {dimension_semantics = [#tpu.dimension_semantics<arbitrary>, #tpu.dimension_semantics<arbitrary>], iteration_bounds = array<i64: 2, 1>, scalar_prefetch = 0 : i64, scratch_operands = 3 : i64, tpu.core_type = #tpu.core_type<tc>, window_params = [{transform_indices = @transform_0, window_bounds = array<i64: 16, 256>}, {transform_indices = @transform_1, window_bounds = array<i64: 16, 1024>}, {pipeline_mode = #tpu.pipeline_mode<synchronous>, transform_indices = @transform_2, window_bounds = array<i64: 256, 256>}, {pipeline_mode = #tpu.pipeline_mode<synchronous>, transform_indices = @transform_3, window_bounds = array<i64: 1024, 256>}, {pipeline_mode = #tpu.pipeline_mode<synchronous>, transform_indices = @transform_4, window_bounds = array<i64: 256, 256>}, {transform_indices = @transform_5, window_bounds = array<i64: 16, 256>}]} {
    %c16_i32 = arith.constant 16 : i32
    %0 = arith.muli %arg1, %c16_i32 : i32
    %1 = tpu.assume_multiple %0, 16 : i32
    %c0_i32 = arith.constant 0 : i32
    %2 = arith.cmpi eq, %arg0, %c0_i32 : i32
    %3 = arith.extui %2 : i1 to i32
    %c0_i32_0 = arith.constant 0 : i32
    %4 = arith.cmpi ne, %3, %c0_i32_0 : i32
    scf.if %4 {
      %c0_i32_2 = arith.constant 0 : i32
      %8 = arith.cmpi eq, %arg1, %c0_i32_2 : i32
      %9 = arith.extui %8 : i1 to i32
      %c0_i32_3 = arith.constant 0 : i32
      %10 = arith.cmpi ne, %9, %c0_i32_3 : i32
      scf.if %10 {
        %cst_22 = arith.constant 0.000000e+00 : f32
        %32 = vector.broadcast %cst_22 : f32 to vector<1x256xf32>
        %c0_23 = arith.constant 0 : index
        %c0_24 = arith.constant 0 : index
        %33 = vector.load %arg9[%c0_23, %c0_24] : memref<1x256xf32, #tpu.memory_space<vmem>>, vector<1x256xf32>
        tpu.vector_store %arg9[%c0_23, %c0_24], %32 {strides = array<i32>} : memref<1x256xf32, #tpu.memory_space<vmem>>, vector<1x256xf32>,
      } else {
      }
      %c0 = arith.constant 0 : index
      %c0_4 = arith.constant 0 : index
      %11 = vector.load %arg2[%c0, %c0_4] : memref<16x256xbf16, #tpu.memory_space<vmem>>, vector<16x256xbf16>
      %c0_5 = arith.constant 0 : index
      %c0_6 = arith.constant 0 : index
      %12 = vector.load %arg4[%c0_5, %c0_6] : memref<256x256xbf16, #tpu.memory_space<vmem>>, vector<256x256xbf16>
      %cst = arith.constant dense<0.000000e+00> : vector<16x256xf32>
      %13 = tpu.matmul %11, %12, %cst {dimension_numbers = #tpu.dot_dimension_numbers<[1], [0], [0], [1], [0, 0, 1, 1], [], []>} : vector<16x256xbf16>, vector<256x256xbf16>, vector<16x256xf32> -> vector<16x256xf32>
      %cst_7 = arith.constant 0.000000e+00 : f32
      %14 = vector.broadcast %cst_7 : f32 to vector<16x256xf32>
      %15 = arith.maximumf %13, %14 : vector<16x256xf32>
      %c0_8 = arith.constant 0 : index
      %c0_9 = arith.constant 0 : index
      %16 = vector.load %arg3[%c0_8, %c0_9] : memref<16x1024xbf16, #tpu.memory_space<vmem>>, vector<16x1024xbf16>
      %c0_10 = arith.constant 0 : index
      %c0_11 = arith.constant 0 : index
      %17 = vector.load %arg5[%c0_10, %c0_11] : memref<1024x256xbf16, #tpu.memory_space<vmem>>, vector<1024x256xbf16>
      %cst_12 = arith.constant dense<0.000000e+00> : vector<16x256xf32>
      %18 = tpu.matmul %16, %17, %cst_12 {dimension_numbers = #tpu.dot_dimension_numbers<[1], [0], [0], [1], [0, 0, 1, 1], [], []>} : vector<16x1024xbf16>, vector<1024x256xbf16>, vector<16x256xf32> -> vector<16x256xf32>
      %cst_13 = arith.constant 0.000000e+00 : f32
      %19 = vector.broadcast %cst_13 : f32 to vector<16x256xf32>
      %20 = arith.maximumf %18, %19 : vector<16x256xf32>
      %21 = arith.addf %15, %20 : vector<16x256xf32>
      %22 = arith.index_cast %1 : i32 to index
      %c0_14 = arith.constant 0 : index
      %23 = vector.load %arg8[%22, %c0_14] : memref<16x256xf32, #tpu.memory_space<vmem>>, vector<16x256xf32>
      tpu.vector_store %arg8[%22, %c0_14], %21 {strides = array<i32>} : memref<16x256xf32, #tpu.memory_space<vmem>>, vector<16x256xf32>,
      %c0_15 = arith.constant 0 : index
      %c0_16 = arith.constant 0 : index
      %24 = vector.load %arg9[%c0_15, %c0_16] : memref<1x256xf32, #tpu.memory_space<vmem>>, vector<1x256xf32>
      %cst_17 = arith.constant dense<0.000000e+00> : vector<256xf32>
      %25 = vector.multi_reduction <add>, %21, %cst_17 [0] : vector<16x256xf32> to vector<256xf32>
      %26 = vector.shape_cast %25 : vector<256xf32> to vector<1x256xf32>
      %27 = arith.addf %24, %26 : vector<1x256xf32>
      %c0_18 = arith.constant 0 : index
      %c0_19 = arith.constant 0 : index
      %28 = vector.load %arg9[%c0_18, %c0_19] : memref<1x256xf32, #tpu.memory_space<vmem>>, vector<1x256xf32>
      tpu.vector_store %arg9[%c0_18, %c0_19], %27 {strides = array<i32>} : memref<1x256xf32, #tpu.memory_space<vmem>>, vector<1x256xf32>,
      %c0_i32_20 = arith.constant 0 : i32
      %29 = arith.cmpi eq, %arg1, %c0_i32_20 : i32
      %30 = arith.extui %29 : i1 to i32
      %c0_i32_21 = arith.constant 0 : i32
      %31 = arith.cmpi ne, %30, %c0_i32_21 : i32
      scf.if %31 {
        %c0_22 = arith.constant 0 : index
        %c0_23 = arith.constant 0 : index
        %32 = vector.load %arg9[%c0_22, %c0_23] : memref<1x256xf32, #tpu.memory_space<vmem>>, vector<1x256xf32>
        %cst_24 = arith.constant 6.250000e-02 : f32
        %33 = vector.broadcast %cst_24 : f32 to vector<1x256xf32>
        %34 = arith.mulf %32, %33 : vector<1x256xf32>
        %c0_25 = arith.constant 0 : index
        %c0_26 = arith.constant 0 : index
        %35 = vector.load %arg6[%c0_25, %c0_26] : memref<256x256xf32, #tpu.memory_space<vmem>>, vector<256x256xf32>
        %cst_27 = arith.constant dense<0.000000e+00> : vector<1x256xf32>
        %36 = tpu.matmul %34, %35, %cst_27 {dimension_numbers = #tpu.dot_dimension_numbers<[1], [0], [0], [1], [0, 0, 1, 1], [], []>} : vector<1x256xf32>, vector<256x256xf32>, vector<1x256xf32> -> vector<1x256xf32>
        %cst_28 = arith.constant 0.000000e+00 : f32
        %37 = vector.broadcast %cst_28 : f32 to vector<1x256xf32>
        %38 = arith.subf %37, %36 : vector<1x256xf32>
        %39 = math.exp %38 : vector<1x256xf32>
        %cst_29 = arith.constant 1.000000e+00 : f32
        %40 = vector.broadcast %cst_29 : f32 to vector<1x256xf32>
        %41 = arith.addf %40, %39 : vector<1x256xf32>
        %cst_30 = arith.constant 1.000000e+00 : f32
        %42 = vector.broadcast %cst_30 : f32 to vector<1x256xf32>
        %43 = arith.divf %42, %41 : vector<1x256xf32>
        %c0_31 = arith.constant 0 : index
        %c0_32 = arith.constant 0 : index
        %44 = vector.load %arg10[%c0_31, %c0_32] : memref<1x256xf32, #tpu.memory_space<vmem>>, vector<1x256xf32>
        tpu.vector_store %arg10[%c0_31, %c0_32], %43 {strides = array<i32>} : memref<1x256xf32, #tpu.memory_space<vmem>>, vector<1x256xf32>,
      } else {
      }
    } else {
    }
    %c1_i32 = arith.constant 1 : i32
    %5 = arith.cmpi eq, %arg0, %c1_i32 : i32
    %6 = arith.extui %5 : i1 to i32
    %c0_i32_1 = arith.constant 0 : i32
    %7 = arith.cmpi ne, %6, %c0_i32_1 : i32
    scf.if %7 {
      %8 = arith.index_cast %1 : i32 to index
      %c0 = arith.constant 0 : index
      %9 = vector.load %arg8[%8, %c0] : memref<16x256xf32, #tpu.memory_space<vmem>>, vector<16x256xf32>
      %c0_2 = arith.constant 0 : index
      %c0_3 = arith.constant 0 : index
      %10 = vector.load %arg10[%c0_2, %c0_3] : memref<1x256xf32, #tpu.memory_space<vmem>>, vector<1x256xf32>
      %11 = vector.broadcast %10 : vector<1x256xf32> to vector<16x256xf32>
      %12 = arith.mulf %9, %11 : vector<16x256xf32>
      %13 = arith.addf %12, %9 : vector<16x256xf32>
      %c0_4 = arith.constant 0 : index
      %c0_5 = arith.constant 0 : index
      %14 = vector.load %arg7[%c0_4, %c0_5] : memref<16x256xf32, #tpu.memory_space<vmem>>, vector<16x256xf32>
      tpu.vector_store %arg7[%c0_4, %c0_5], %13 {strides = array<i32>} : memref<16x256xf32, #tpu.memory_space<vmem>>, vector<16x256xf32>,
    } else {
    }
    return
  }
  func.func @transform_0(%arg0: i32, %arg1: i32) -> (i32, i32) {
    %c1_i32 = arith.constant 1 : i32
    %0 = arith.subi %c1_i32, %arg0 : i32
    %1 = arith.muli %arg1, %0 : i32
    %c0_i32 = arith.constant 0 : i32
    %c0_i32_0 = arith.constant 0 : i32
    return %1, %c0_i32 : i32, i32
  }
  func.func @transform_1(%arg0: i32, %arg1: i32) -> (i32, i32) {
    %c1_i32 = arith.constant 1 : i32
    %0 = arith.subi %c1_i32, %arg0 : i32
    %1 = arith.muli %arg1, %0 : i32
    %c0_i32 = arith.constant 0 : i32
    %c0_i32_0 = arith.constant 0 : i32
    return %1, %c0_i32 : i32, i32
  }
  func.func @transform_2(%arg0: i32, %arg1: i32) -> (i32, i32) {
    %c0_i32 = arith.constant 0 : i32
    %c0_i32_0 = arith.constant 0 : i32
    %c0_i32_1 = arith.constant 0 : i32
    return %c0_i32, %c0_i32_0 : i32, i32
  }
  func.func @transform_3(%arg0: i32, %arg1: i32) -> (i32, i32) {
    %c0_i32 = arith.constant 0 : i32
    %c0_i32_0 = arith.constant 0 : i32
    %c0_i32_1 = arith.constant 0 : i32
    return %c0_i32, %c0_i32_0 : i32, i32
  }
  func.func @transform_4(%arg0: i32, %arg1: i32) -> (i32, i32) {
    %c0_i32 = arith.constant 0 : i32
    %c0_i32_0 = arith.constant 0 : i32
    %c0_i32_1 = arith.constant 0 : i32
    return %c0_i32, %c0_i32_0 : i32, i32
  }
  func.func @transform_5(%arg0: i32, %arg1: i32) -> (i32, i32) {
    %0 = arith.muli %arg1, %arg0 : i32
    %c0_i32 = arith.constant 0 : i32
    %c0_i32_0 = arith.constant 0 : i32
    return %0, %c0_i32 : i32, i32
  }
}

module attributes {stable_mosaic.version = 11 : i64} {
  func.func @kernel(%arg0: i32, %arg1: i32, %arg2: memref<64x256xbf16, #tpu.memory_space<vmem>>, %arg3: memref<64x512xbf16, #tpu.memory_space<vmem>>, %arg4: memref<256x256xbf16, #tpu.memory_space<vmem>>, %arg5: memref<512x256xbf16, #tpu.memory_space<vmem>>, %arg6: memref<256x256xf32, #tpu.memory_space<vmem>>, %arg7: memref<64x256xf32, #tpu.memory_space<vmem>>, %arg8: memref<64x256xf32, #tpu.memory_space<vmem>>, %arg9: memref<1x256xf32, #tpu.memory_space<vmem>>, %arg10: memref<1x256xf32, #tpu.memory_space<vmem>>) attributes {dimension_semantics = [#tpu.dimension_semantics<arbitrary>, #tpu.dimension_semantics<arbitrary>], iteration_bounds = array<i64: 2, 1>, scalar_prefetch = 0 : i64, scratch_operands = 3 : i64, tpu.core_type = #tpu.core_type<tc>, window_params = [{transform_indices = @transform_0, window_bounds = array<i64: 64, 256>}, {transform_indices = @transform_1, window_bounds = array<i64: 64, 512>}, {pipeline_mode = #tpu.pipeline_mode<synchronous>, transform_indices = @transform_2, window_bounds = array<i64: 256, 256>}, {pipeline_mode = #tpu.pipeline_mode<synchronous>, transform_indices = @transform_3, window_bounds = array<i64: 512, 256>}, {pipeline_mode = #tpu.pipeline_mode<synchronous>, transform_indices = @transform_4, window_bounds = array<i64: 256, 256>}, {transform_indices = @transform_5, window_bounds = array<i64: 64, 256>}]} {
    %c64_i32 = arith.constant 64 : i32
    %0 = arith.muli %arg1, %c64_i32 : i32
    %1 = tpu.assume_multiple %0, 64 : i32
    %c0_i32 = arith.constant 0 : i32
    %2 = arith.cmpi eq, %arg0, %c0_i32 : i32
    %3 = arith.extui %2 : i1 to i32
    %c0_i32_0 = arith.constant 0 : i32
    %4 = arith.cmpi ne, %3, %c0_i32_0 : i32
    scf.if %4 {
      %c0_i32_2 = arith.constant 0 : i32
      %8 = arith.cmpi eq, %arg1, %c0_i32_2 : i32
      %9 = arith.extui %8 : i1 to i32
      %c0_i32_3 = arith.constant 0 : i32
      %10 = arith.cmpi ne, %9, %c0_i32_3 : i32
      scf.if %10 {
        %cst_22 = arith.constant 0.000000e+00 : f32
        %32 = vector.broadcast %cst_22 : f32 to vector<1x256xf32>
        %c0_23 = arith.constant 0 : index
        %c0_24 = arith.constant 0 : index
        %33 = vector.load %arg9[%c0_23, %c0_24] : memref<1x256xf32, #tpu.memory_space<vmem>>, vector<1x256xf32>
        tpu.vector_store %arg9[%c0_23, %c0_24], %32 {strides = array<i32>} : memref<1x256xf32, #tpu.memory_space<vmem>>, vector<1x256xf32>,
      } else {
      }
      %c0 = arith.constant 0 : index
      %c0_4 = arith.constant 0 : index
      %11 = vector.load %arg2[%c0, %c0_4] : memref<64x256xbf16, #tpu.memory_space<vmem>>, vector<64x256xbf16>
      %c0_5 = arith.constant 0 : index
      %c0_6 = arith.constant 0 : index
      %12 = vector.load %arg4[%c0_5, %c0_6] : memref<256x256xbf16, #tpu.memory_space<vmem>>, vector<256x256xbf16>
      %cst = arith.constant dense<0.000000e+00> : vector<64x256xf32>
      %13 = tpu.matmul %11, %12, %cst {dimension_numbers = #tpu.dot_dimension_numbers<[1], [0], [0], [1], [0, 0, 1, 1], [], []>} : vector<64x256xbf16>, vector<256x256xbf16>, vector<64x256xf32> -> vector<64x256xf32>
      %cst_7 = arith.constant 0.000000e+00 : f32
      %14 = vector.broadcast %cst_7 : f32 to vector<64x256xf32>
      %15 = arith.maximumf %13, %14 : vector<64x256xf32>
      %c0_8 = arith.constant 0 : index
      %c0_9 = arith.constant 0 : index
      %16 = vector.load %arg3[%c0_8, %c0_9] : memref<64x512xbf16, #tpu.memory_space<vmem>>, vector<64x512xbf16>
      %c0_10 = arith.constant 0 : index
      %c0_11 = arith.constant 0 : index
      %17 = vector.load %arg5[%c0_10, %c0_11] : memref<512x256xbf16, #tpu.memory_space<vmem>>, vector<512x256xbf16>
      %cst_12 = arith.constant dense<0.000000e+00> : vector<64x256xf32>
      %18 = tpu.matmul %16, %17, %cst_12 {dimension_numbers = #tpu.dot_dimension_numbers<[1], [0], [0], [1], [0, 0, 1, 1], [], []>} : vector<64x512xbf16>, vector<512x256xbf16>, vector<64x256xf32> -> vector<64x256xf32>
      %cst_13 = arith.constant 0.000000e+00 : f32
      %19 = vector.broadcast %cst_13 : f32 to vector<64x256xf32>
      %20 = arith.maximumf %18, %19 : vector<64x256xf32>
      %21 = arith.addf %15, %20 : vector<64x256xf32>
      %22 = arith.index_cast %1 : i32 to index
      %c0_14 = arith.constant 0 : index
      %23 = vector.load %arg8[%22, %c0_14] : memref<64x256xf32, #tpu.memory_space<vmem>>, vector<64x256xf32>
      tpu.vector_store %arg8[%22, %c0_14], %21 {strides = array<i32>} : memref<64x256xf32, #tpu.memory_space<vmem>>, vector<64x256xf32>,
      %c0_15 = arith.constant 0 : index
      %c0_16 = arith.constant 0 : index
      %24 = vector.load %arg9[%c0_15, %c0_16] : memref<1x256xf32, #tpu.memory_space<vmem>>, vector<1x256xf32>
      %cst_17 = arith.constant dense<0.000000e+00> : vector<256xf32>
      %25 = vector.multi_reduction <add>, %21, %cst_17 [0] : vector<64x256xf32> to vector<256xf32>
      %26 = vector.shape_cast %25 : vector<256xf32> to vector<1x256xf32>
      %27 = arith.addf %24, %26 : vector<1x256xf32>
      %c0_18 = arith.constant 0 : index
      %c0_19 = arith.constant 0 : index
      %28 = vector.load %arg9[%c0_18, %c0_19] : memref<1x256xf32, #tpu.memory_space<vmem>>, vector<1x256xf32>
      tpu.vector_store %arg9[%c0_18, %c0_19], %27 {strides = array<i32>} : memref<1x256xf32, #tpu.memory_space<vmem>>, vector<1x256xf32>,
      %c0_i32_20 = arith.constant 0 : i32
      %29 = arith.cmpi eq, %arg1, %c0_i32_20 : i32
      %30 = arith.extui %29 : i1 to i32
      %c0_i32_21 = arith.constant 0 : i32
      %31 = arith.cmpi ne, %30, %c0_i32_21 : i32
      scf.if %31 {
        %c0_22 = arith.constant 0 : index
        %c0_23 = arith.constant 0 : index
        %32 = vector.load %arg9[%c0_22, %c0_23] : memref<1x256xf32, #tpu.memory_space<vmem>>, vector<1x256xf32>
        %cst_24 = arith.constant 1.562500e-02 : f32
        %33 = vector.broadcast %cst_24 : f32 to vector<1x256xf32>
        %34 = arith.mulf %32, %33 : vector<1x256xf32>
        %c0_25 = arith.constant 0 : index
        %c0_26 = arith.constant 0 : index
        %35 = vector.load %arg6[%c0_25, %c0_26] : memref<256x256xf32, #tpu.memory_space<vmem>>, vector<256x256xf32>
        %cst_27 = arith.constant dense<0.000000e+00> : vector<1x256xf32>
        %36 = tpu.matmul %34, %35, %cst_27 {dimension_numbers = #tpu.dot_dimension_numbers<[1], [0], [0], [1], [0, 0, 1, 1], [], []>} : vector<1x256xf32>, vector<256x256xf32>, vector<1x256xf32> -> vector<1x256xf32>
        %cst_28 = arith.constant 0.000000e+00 : f32
        %37 = vector.broadcast %cst_28 : f32 to vector<1x256xf32>
        %38 = arith.subf %37, %36 : vector<1x256xf32>
        %39 = math.exp %38 : vector<1x256xf32>
        %cst_29 = arith.constant 1.000000e+00 : f32
        %40 = vector.broadcast %cst_29 : f32 to vector<1x256xf32>
        %41 = arith.addf %40, %39 : vector<1x256xf32>
        %cst_30 = arith.constant 1.000000e+00 : f32
        %42 = vector.broadcast %cst_30 : f32 to vector<1x256xf32>
        %43 = arith.divf %42, %41 : vector<1x256xf32>
        %c0_31 = arith.constant 0 : index
        %c0_32 = arith.constant 0 : index
        %44 = vector.load %arg10[%c0_31, %c0_32] : memref<1x256xf32, #tpu.memory_space<vmem>>, vector<1x256xf32>
        tpu.vector_store %arg10[%c0_31, %c0_32], %43 {strides = array<i32>} : memref<1x256xf32, #tpu.memory_space<vmem>>, vector<1x256xf32>,
      } else {
      }
    } else {
    }
    %c1_i32 = arith.constant 1 : i32
    %5 = arith.cmpi eq, %arg0, %c1_i32 : i32
    %6 = arith.extui %5 : i1 to i32
    %c0_i32_1 = arith.constant 0 : i32
    %7 = arith.cmpi ne, %6, %c0_i32_1 : i32
    scf.if %7 {
      %8 = arith.index_cast %1 : i32 to index
      %c0 = arith.constant 0 : index
      %9 = vector.load %arg8[%8, %c0] : memref<64x256xf32, #tpu.memory_space<vmem>>, vector<64x256xf32>
      %c0_2 = arith.constant 0 : index
      %c0_3 = arith.constant 0 : index
      %10 = vector.load %arg10[%c0_2, %c0_3] : memref<1x256xf32, #tpu.memory_space<vmem>>, vector<1x256xf32>
      %11 = vector.broadcast %10 : vector<1x256xf32> to vector<64x256xf32>
      %12 = arith.mulf %9, %11 : vector<64x256xf32>
      %13 = arith.addf %12, %9 : vector<64x256xf32>
      %c0_4 = arith.constant 0 : index
      %c0_5 = arith.constant 0 : index
      %14 = vector.load %arg7[%c0_4, %c0_5] : memref<64x256xf32, #tpu.memory_space<vmem>>, vector<64x256xf32>
      tpu.vector_store %arg7[%c0_4, %c0_5], %13 {strides = array<i32>} : memref<64x256xf32, #tpu.memory_space<vmem>>, vector<64x256xf32>,
    } else {
    }
    return
  }
  func.func @transform_0(%arg0: i32, %arg1: i32) -> (i32, i32) {
    %c1_i32 = arith.constant 1 : i32
    %0 = arith.subi %c1_i32, %arg0 : i32
    %1 = arith.muli %arg1, %0 : i32
    %c0_i32 = arith.constant 0 : i32
    %c0_i32_0 = arith.constant 0 : i32
    return %1, %c0_i32 : i32, i32
  }
  func.func @transform_1(%arg0: i32, %arg1: i32) -> (i32, i32) {
    %c1_i32 = arith.constant 1 : i32
    %0 = arith.subi %c1_i32, %arg0 : i32
    %1 = arith.muli %arg1, %0 : i32
    %c0_i32 = arith.constant 0 : i32
    %c0_i32_0 = arith.constant 0 : i32
    return %1, %c0_i32 : i32, i32
  }
  func.func @transform_2(%arg0: i32, %arg1: i32) -> (i32, i32) {
    %c0_i32 = arith.constant 0 : i32
    %c0_i32_0 = arith.constant 0 : i32
    %c0_i32_1 = arith.constant 0 : i32
    return %c0_i32, %c0_i32_0 : i32, i32
  }
  func.func @transform_3(%arg0: i32, %arg1: i32) -> (i32, i32) {
    %c0_i32 = arith.constant 0 : i32
    %c0_i32_0 = arith.constant 0 : i32
    %c0_i32_1 = arith.constant 0 : i32
    return %c0_i32, %c0_i32_0 : i32, i32
  }
  func.func @transform_4(%arg0: i32, %arg1: i32) -> (i32, i32) {
    %c0_i32 = arith.constant 0 : i32
    %c0_i32_0 = arith.constant 0 : i32
    %c0_i32_1 = arith.constant 0 : i32
    return %c0_i32, %c0_i32_0 : i32, i32
  }
  func.func @transform_5(%arg0: i32, %arg1: i32) -> (i32, i32) {
    %0 = arith.muli %arg1, %arg0 : i32
    %c0_i32 = arith.constant 0 : i32
    %c0_i32_0 = arith.constant 0 : i32
    return %0, %c0_i32 : i32, i32
  }
}

module attributes {stable_mosaic.version = 11 : i64} {
  func.func @kernel(%arg0: i32, %arg1: i32, %arg2: memref<256x256xbf16, #tpu.memory_space<vmem>>, %arg3: memref<256x256xbf16, #tpu.memory_space<vmem>>, %arg4: memref<256x128xbf16, #tpu.memory_space<vmem>>, %arg5: memref<256x128xbf16, #tpu.memory_space<vmem>>, %arg6: memref<128x128xf32, #tpu.memory_space<vmem>>, %arg7: memref<128x128xbf16, #tpu.memory_space<vmem>>, %arg8: memref<1x128xf32, #tpu.memory_space<vmem>>, %arg9: memref<256x128xf32, #tpu.memory_space<vmem>>, %arg10: memref<256x128xf32, #tpu.memory_space<vmem>>, %arg11: memref<1x128xf32, #tpu.memory_space<vmem>>, %arg12: memref<1x128xf32, #tpu.memory_space<vmem>>) attributes {dimension_semantics = [#tpu.dimension_semantics<arbitrary>, #tpu.dimension_semantics<arbitrary>], iteration_bounds = array<i64: 2, 1>, scalar_prefetch = 0 : i64, scratch_operands = 3 : i64, tpu.core_type = #tpu.core_type<tc>, window_params = [{transform_indices = @transform_0, window_bounds = array<i64: 256, 256>}, {transform_indices = @transform_1, window_bounds = array<i64: 256, 256>}, {pipeline_mode = #tpu.pipeline_mode<synchronous>, transform_indices = @transform_2, window_bounds = array<i64: 256, 128>}, {pipeline_mode = #tpu.pipeline_mode<synchronous>, transform_indices = @transform_3, window_bounds = array<i64: 256, 128>}, {pipeline_mode = #tpu.pipeline_mode<synchronous>, transform_indices = @transform_4, window_bounds = array<i64: 128, 128>}, {pipeline_mode = #tpu.pipeline_mode<synchronous>, transform_indices = @transform_5, window_bounds = array<i64: 128, 128>}, {pipeline_mode = #tpu.pipeline_mode<synchronous>, transform_indices = @transform_6, window_bounds = array<i64: 1, 128>}, {transform_indices = @transform_7, window_bounds = array<i64: 256, 128>}]} {
    %c256_i32 = arith.constant 256 : i32
    %0 = arith.muli %arg1, %c256_i32 : i32
    %1 = tpu.assume_multiple %0, 256 : i32
    %c0_i32 = arith.constant 0 : i32
    %2 = arith.cmpi eq, %arg0, %c0_i32 : i32
    %3 = arith.extui %2 : i1 to i32
    %c0_i32_0 = arith.constant 0 : i32
    %4 = arith.cmpi ne, %3, %c0_i32_0 : i32
    scf.if %4 {
      %c0_i32_2 = arith.constant 0 : i32
      %8 = arith.cmpi eq, %arg1, %c0_i32_2 : i32
      %9 = arith.extui %8 : i1 to i32
      %c0_i32_3 = arith.constant 0 : i32
      %10 = arith.cmpi ne, %9, %c0_i32_3 : i32
      scf.if %10 {
        %cst_22 = arith.constant 0.000000e+00 : f32
        %32 = vector.broadcast %cst_22 : f32 to vector<1x128xf32>
        %c0_23 = arith.constant 0 : index
        %c0_24 = arith.constant 0 : index
        %33 = vector.load %arg11[%c0_23, %c0_24] : memref<1x128xf32, #tpu.memory_space<vmem>>, vector<1x128xf32>
        tpu.vector_store %arg11[%c0_23, %c0_24], %32 {strides = array<i32>} : memref<1x128xf32, #tpu.memory_space<vmem>>, vector<1x128xf32>,
      } else {
      }
      %c0 = arith.constant 0 : index
      %c0_4 = arith.constant 0 : index
      %11 = vector.load %arg2[%c0, %c0_4] : memref<256x256xbf16, #tpu.memory_space<vmem>>, vector<256x256xbf16>
      %c0_5 = arith.constant 0 : index
      %c0_6 = arith.constant 0 : index
      %12 = vector.load %arg4[%c0_5, %c0_6] : memref<256x128xbf16, #tpu.memory_space<vmem>>, vector<256x128xbf16>
      %cst = arith.constant dense<0.000000e+00> : vector<256x128xf32>
      %13 = tpu.matmul %11, %12, %cst {dimension_numbers = #tpu.dot_dimension_numbers<[1], [0], [0], [1], [0, 0, 1, 1], [], []>} : vector<256x256xbf16>, vector<256x128xbf16>, vector<256x128xf32> -> vector<256x128xf32>
      %cst_7 = arith.constant 0.000000e+00 : f32
      %14 = vector.broadcast %cst_7 : f32 to vector<256x128xf32>
      %15 = arith.maximumf %13, %14 : vector<256x128xf32>
      %c0_8 = arith.constant 0 : index
      %c0_9 = arith.constant 0 : index
      %16 = vector.load %arg3[%c0_8, %c0_9] : memref<256x256xbf16, #tpu.memory_space<vmem>>, vector<256x256xbf16>
      %c0_10 = arith.constant 0 : index
      %c0_11 = arith.constant 0 : index
      %17 = vector.load %arg5[%c0_10, %c0_11] : memref<256x128xbf16, #tpu.memory_space<vmem>>, vector<256x128xbf16>
      %cst_12 = arith.constant dense<0.000000e+00> : vector<256x128xf32>
      %18 = tpu.matmul %16, %17, %cst_12 {dimension_numbers = #tpu.dot_dimension_numbers<[1], [0], [0], [1], [0, 0, 1, 1], [], []>} : vector<256x256xbf16>, vector<256x128xbf16>, vector<256x128xf32> -> vector<256x128xf32>
      %cst_13 = arith.constant 0.000000e+00 : f32
      %19 = vector.broadcast %cst_13 : f32 to vector<256x128xf32>
      %20 = arith.maximumf %18, %19 : vector<256x128xf32>
      %21 = arith.addf %15, %20 : vector<256x128xf32>
      %22 = arith.index_cast %1 : i32 to index
      %c0_14 = arith.constant 0 : index
      %23 = vector.load %arg10[%22, %c0_14] : memref<256x128xf32, #tpu.memory_space<vmem>>, vector<256x128xf32>
      tpu.vector_store %arg10[%22, %c0_14], %21 {strides = array<i32>} : memref<256x128xf32, #tpu.memory_space<vmem>>, vector<256x128xf32>,
      %c0_15 = arith.constant 0 : index
      %c0_16 = arith.constant 0 : index
      %24 = vector.load %arg11[%c0_15, %c0_16] : memref<1x128xf32, #tpu.memory_space<vmem>>, vector<1x128xf32>
      %cst_17 = arith.constant dense<0.000000e+00> : vector<128xf32>
      %25 = vector.multi_reduction <add>, %21, %cst_17 [0] : vector<256x128xf32> to vector<128xf32>
      %26 = vector.shape_cast %25 : vector<128xf32> to vector<1x128xf32>
      %27 = arith.addf %24, %26 : vector<1x128xf32>
      %c0_18 = arith.constant 0 : index
      %c0_19 = arith.constant 0 : index
      %28 = vector.load %arg11[%c0_18, %c0_19] : memref<1x128xf32, #tpu.memory_space<vmem>>, vector<1x128xf32>
      tpu.vector_store %arg11[%c0_18, %c0_19], %27 {strides = array<i32>} : memref<1x128xf32, #tpu.memory_space<vmem>>, vector<1x128xf32>,
      %c0_i32_20 = arith.constant 0 : i32
      %29 = arith.cmpi eq, %arg1, %c0_i32_20 : i32
      %30 = arith.extui %29 : i1 to i32
      %c0_i32_21 = arith.constant 0 : i32
      %31 = arith.cmpi ne, %30, %c0_i32_21 : i32
      scf.if %31 {
        %c0_22 = arith.constant 0 : index
        %c0_23 = arith.constant 0 : index
        %32 = vector.load %arg11[%c0_22, %c0_23] : memref<1x128xf32, #tpu.memory_space<vmem>>, vector<1x128xf32>
        %cst_24 = arith.constant 3.906250e-03 : f32
        %33 = vector.broadcast %cst_24 : f32 to vector<1x128xf32>
        %34 = arith.mulf %32, %33 : vector<1x128xf32>
        %c0_25 = arith.constant 0 : index
        %c0_26 = arith.constant 0 : index
        %35 = vector.load %arg6[%c0_25, %c0_26] : memref<128x128xf32, #tpu.memory_space<vmem>>, vector<128x128xf32>
        %cst_27 = arith.constant dense<0.000000e+00> : vector<1x128xf32>
        %36 = tpu.matmul %34, %35, %cst_27 {dimension_numbers = #tpu.dot_dimension_numbers<[1], [0], [0], [1], [0, 0, 1, 1], [], []>} : vector<1x128xf32>, vector<128x128xf32>, vector<1x128xf32> -> vector<1x128xf32>
        %cst_28 = arith.constant 0.000000e+00 : f32
        %37 = vector.broadcast %cst_28 : f32 to vector<1x128xf32>
        %38 = arith.subf %37, %36 : vector<1x128xf32>
        %39 = math.exp %38 : vector<1x128xf32>
        %cst_29 = arith.constant 1.000000e+00 : f32
        %40 = vector.broadcast %cst_29 : f32 to vector<1x128xf32>
        %41 = arith.addf %40, %39 : vector<1x128xf32>
        %cst_30 = arith.constant 1.000000e+00 : f32
        %42 = vector.broadcast %cst_30 : f32 to vector<1x128xf32>
        %43 = arith.divf %42, %41 : vector<1x128xf32>
        %c0_31 = arith.constant 0 : index
        %c0_32 = arith.constant 0 : index
        %44 = vector.load %arg12[%c0_31, %c0_32] : memref<1x128xf32, #tpu.memory_space<vmem>>, vector<1x128xf32>
        tpu.vector_store %arg12[%c0_31, %c0_32], %43 {strides = array<i32>} : memref<1x128xf32, #tpu.memory_space<vmem>>, vector<1x128xf32>,
      } else {
      }
    } else {
    }
    %c1_i32 = arith.constant 1 : i32
    %5 = arith.cmpi eq, %arg0, %c1_i32 : i32
    %6 = arith.extui %5 : i1 to i32
    %c0_i32_1 = arith.constant 0 : i32
    %7 = arith.cmpi ne, %6, %c0_i32_1 : i32
    scf.if %7 {
      %8 = arith.index_cast %1 : i32 to index
      %c0 = arith.constant 0 : index
      %9 = vector.load %arg10[%8, %c0] : memref<256x128xf32, #tpu.memory_space<vmem>>, vector<256x128xf32>
      %c0_2 = arith.constant 0 : index
      %c0_3 = arith.constant 0 : index
      %10 = vector.load %arg12[%c0_2, %c0_3] : memref<1x128xf32, #tpu.memory_space<vmem>>, vector<1x128xf32>
      %11 = vector.broadcast %10 : vector<1x128xf32> to vector<256x128xf32>
      %12 = arith.mulf %9, %11 : vector<256x128xf32>
      %13 = arith.addf %12, %9 : vector<256x128xf32>
      %14 = arith.truncf %13 : vector<256x128xf32> to vector<256x128xbf16>
      %c0_4 = arith.constant 0 : index
      %c0_5 = arith.constant 0 : index
      %15 = vector.load %arg7[%c0_4, %c0_5] : memref<128x128xbf16, #tpu.memory_space<vmem>>, vector<128x128xbf16>
      %cst = arith.constant dense<0.000000e+00> : vector<256x128xf32>
      %16 = tpu.matmul %14, %15, %cst {dimension_numbers = #tpu.dot_dimension_numbers<[1], [0], [0], [1], [0, 0, 1, 1], [], []>} : vector<256x128xbf16>, vector<128x128xbf16>, vector<256x128xf32> -> vector<256x128xf32>
      %c0_6 = arith.constant 0 : index
      %c0_7 = arith.constant 0 : index
      %17 = vector.load %arg8[%c0_6, %c0_7] : memref<1x128xf32, #tpu.memory_space<vmem>>, vector<1x128xf32>
      %18 = vector.broadcast %17 : vector<1x128xf32> to vector<256x128xf32>
      %19 = arith.addf %16, %18 : vector<256x128xf32>
      %c0_8 = arith.constant 0 : index
      %c0_9 = arith.constant 0 : index
      %20 = vector.load %arg9[%c0_8, %c0_9] : memref<256x128xf32, #tpu.memory_space<vmem>>, vector<256x128xf32>
      tpu.vector_store %arg9[%c0_8, %c0_9], %19 {strides = array<i32>} : memref<256x128xf32, #tpu.memory_space<vmem>>, vector<256x128xf32>,
    } else {
    }
    return
  }
  func.func @transform_0(%arg0: i32, %arg1: i32) -> (i32, i32) {
    %c1_i32 = arith.constant 1 : i32
    %0 = arith.subi %c1_i32, %arg0 : i32
    %1 = arith.muli %arg1, %0 : i32
    %c0_i32 = arith.constant 0 : i32
    %c0_i32_0 = arith.constant 0 : i32
    return %1, %c0_i32 : i32, i32
  }
  func.func @transform_1(%arg0: i32, %arg1: i32) -> (i32, i32) {
    %c1_i32 = arith.constant 1 : i32
    %0 = arith.subi %c1_i32, %arg0 : i32
    %1 = arith.muli %arg1, %0 : i32
    %c0_i32 = arith.constant 0 : i32
    %c0_i32_0 = arith.constant 0 : i32
    return %1, %c0_i32 : i32, i32
  }
  func.func @transform_2(%arg0: i32, %arg1: i32) -> (i32, i32) {
    %c0_i32 = arith.constant 0 : i32
    %c0_i32_0 = arith.constant 0 : i32
    %c0_i32_1 = arith.constant 0 : i32
    return %c0_i32, %c0_i32_0 : i32, i32
  }
  func.func @transform_3(%arg0: i32, %arg1: i32) -> (i32, i32) {
    %c0_i32 = arith.constant 0 : i32
    %c0_i32_0 = arith.constant 0 : i32
    %c0_i32_1 = arith.constant 0 : i32
    return %c0_i32, %c0_i32_0 : i32, i32
  }
  func.func @transform_4(%arg0: i32, %arg1: i32) -> (i32, i32) {
    %c0_i32 = arith.constant 0 : i32
    %c0_i32_0 = arith.constant 0 : i32
    %c0_i32_1 = arith.constant 0 : i32
    return %c0_i32, %c0_i32_0 : i32, i32
  }
  func.func @transform_5(%arg0: i32, %arg1: i32) -> (i32, i32) {
    %c0_i32 = arith.constant 0 : i32
    %c0_i32_0 = arith.constant 0 : i32
    %c0_i32_1 = arith.constant 0 : i32
    return %c0_i32, %c0_i32_0 : i32, i32
  }
  func.func @transform_6(%arg0: i32, %arg1: i32) -> (i32, i32) {
    %c0_i32 = arith.constant 0 : i32
    %c0_i32_0 = arith.constant 0 : i32
    %c0_i32_1 = arith.constant 0 : i32
    return %c0_i32, %c0_i32_0 : i32, i32
  }
  func.func @transform_7(%arg0: i32, %arg1: i32) -> (i32, i32) {
    %0 = arith.muli %arg1, %arg0 : i32
    %c0_i32 = arith.constant 0 : i32
    %c0_i32_0 = arith.constant 0 : i32
    return %0, %c0_i32 : i32, i32
  }
}

</mosaic_0001>

<llo_original>
// kernel: decoder_forward.4
$region0: #{decoder_forward.4}
  #allocation0 [shape = 'u32[]', space=smem, size = 0x4, offset = 0x4, fixed_abs, tag = 'smem constant byte address 0x4 - core index']
  #allocation1 [shape = 'u32[72,128]{1,0:T(1,128)}', space=vmem, size = 0x9000, scoped, tag = 'internal scratch']
  #allocation2 [shape = 'f32[64,256]{1,0:T(8,128)}', space=vmem, size = 0x10000, scoped, tag = 'scratch operand']
  #allocation3 [shape = 'f32[1,256]{1,0:T(1,128)}', space=vmem, size = 0x400, scoped, tag = 'scratch operand']
  #allocation4 [shape = 'f32[1,256]{1,0:T(1,128)}', space=vmem, size = 0x400, scoped, tag = 'scratch operand']
  %s0 = inlined_call_operand.vmem [shape: bf16[64,256], index: 0, kind: input, shape index: {}]
  %s1 = inlined_call_operand.vmem [shape: bf16[64,512], index: 1, kind: input, shape index: {}]
  %s2 = inlined_call_operand.vmem [shape: bf16[256,256], index: 2, kind: input, shape index: {}]
  %s3 = inlined_call_operand.vmem [shape: bf16[512,256], index: 3, kind: input, shape index: {}]
  %s4 = inlined_call_operand.vmem [shape: f32[256,256], index: 4, kind: input, shape index: {}]
  %s5 = inlined_call_operand.vmem [shape: f32[64,256], index: 5, kind: output, shape index: {}]
  %s6 = sld [smem:[#allocation0]]
  $region69: #{decoder_forward.4} parent=0
    _
  %s8 = ssub.s32 1, %s6
  %s9 = scalar_select 0, %s8, %s6
  loop: start=0, step=1, limit=4
  $region2: #{decoder_forward.4} parent=0 // loop_pre_header
    _
  $region3: #{decoder_forward.4} parent=0 // loop_header
    %s11 = sphi 0, %s15
    %p12 = scmp.ge.s32.totalorder %s11, 4
    %s18 = sphi 0, %s30
    %s19 = sphi 0, %s26
    %s20 = sphi 0, %s18
    %s21 = sphi 0, %s19
    %s22 = sphi 0, %s20
    %s23 = sphi 0, %s21
    %s37 = sphi 0, %s39
    %s40 = sphi 0, %s37
    %s41 = sphi 0, %s40
    %s57 = sphi 0, %s41
    %s67 = sphi 0, %s69
    %s70 = sphi 0, %s67
    %s71 = sphi 0, %s70
    %s87 = sphi 0, %s71
    %s91 = sphi 0, %s91
    %s93 = sphi 0, %s91
    %s94 = sphi 0, %s93
    %s108 = sphi 0, %s94
    %s112 = sphi 0, %s112
    %s114 = sphi 0, %s112
    %s115 = sphi 0, %s114
    %s129 = sphi 0, %s115
    %s133 = sphi 0, %s133
    %s135 = sphi 0, %s133
    %s136 = sphi 0, %s135
    %s150 = sphi 0, %s136
    %s158 = sphi 0, %s160
    %s161 = sphi 0, %s158
    %s162 = sphi 0, %s161
    %s178 = sphi 0, %s162
  $region4: #{decoder_forward.4} parent=0 // loop_header_branch
    %14 = sbr.rel (%p12) target = $region8
  $region5: #{decoder_forward.4} parent=0 // loop_body
    %s16 = ssub.s32 %s11, 1
    %s17 = ssub.s32 %s11, 2
    %s24 = sadd.s32 1, %s19
    %p25 = scmp.ge.s32.totalorder %s24, 1
    %s26 = scalar_select %p25, 0, %s24
    %s27 = sadd.s32 1, %s18
    %s28 = scalar_select %p25, %s27, %s18
    %p29 = scmp.ge.s32.totalorder %s28, 2
    %s30 = scalar_select %p29, 0, %s28
    %s31 = ssub.s32 1, %s18
    %s32 = smul.u32 %s19, %s31
    %s33 = ssub.s32 1, %s30
    %s34 = smul.u32 %s26, %s33
    %s35 = ssub.s32 %s32, %s34
    %p36 = scmp.eq.s32.totalorder %s35, 0
    %s38 = sadd.s32 %s37, 1
    %s39 = scalar_select %p36, %s37, %s38
    %p42 = pneg %p36
    %p43 = scmp.eq.s32.totalorder %s11, 1
    %p44 = por %p42, %p43
    %p45 = scmp.ne.s32.totalorder %s37, %s40
    %p46 = scmp.eq.s32.totalorder %s11, 0
    %p47 = por %p45, %p46
    %p48 = scmp.ne.s32.totalorder %s37, %s40
    %p49 = scmp.eq.s32.totalorder %s16, 1
    %p50 = por %p48, %p49
    %p51 = scmp.ne.s32.totalorder %s40, %s41
    %p52 = scmp.eq.s32.totalorder %s16, 0
    %p53 = por %p51, %p52
    %p54 = scmp.ne.s32.totalorder %s40, %s41
    %p55 = scmp.eq.s32.totalorder %s17, 1
    %p56 = por %p54, %p55
    %p58 = scmp.ne.s32.totalorder %s41, %s57
    %p59 = scmp.eq.s32.totalorder %s17, 0
    %p60 = por %p58, %p59
    %s61 = ssub.s32 1, %s18
    %s62 = smul.u32 %s19, %s61
    %s63 = ssub.s32 1, %s30
    %s64 = smul.u32 %s26, %s63
    %s65 = ssub.s32 %s62, %s64
    %p66 = scmp.eq.s32.totalorder %s65, 0
    %s68 = sadd.s32 %s67, 1
    %s69 = scalar_select %p66, %s67, %s68
    %p72 = pneg %p66
    %p73 = scmp.eq.s32.totalorder %s11, 1
    %p74 = por %p72, %p73
    %p75 = scmp.ne.s32.totalorder %s67, %s70
    %p76 = scmp.eq.s32.totalorder %s11, 0
    %p77 = por %p75, %p76
    %p78 = scmp.ne.s32.totalorder %s67, %s70
    %p79 = scmp.eq.s32.totalorder %s16, 1
    %p80 = por %p78, %p79
    %p81 = scmp.ne.s32.totalorder %s70, %s71
    %p82 = scmp.eq.s32.totalorder %s16, 0
    %p83 = por %p81, %p82
    %p84 = scmp.ne.s32.totalorder %s70, %s71
    %p85 = scmp.eq.s32.totalorder %s17, 1
    %p86 = por %p84, %p85
    %p88 = scmp.ne.s32.totalorder %s71, %s87
    %p89 = scmp.eq.s32.totalorder %s17, 0
    %p90 = por %p88, %p89
    %s92 = sadd.s32 %s91, 1
    %p95 = scmp.eq.s32.totalorder %s11, 1
    %p96 = scmp.ne.s32.totalorder %s91, %s93
    %p97 = scmp.eq.s32.totalorder %s11, 0
    %p98 = por %p96, %p97
    %p99 = scmp.ne.s32.totalorder %s91, %s93
    %p100 = scmp.eq.s32.totalorder %s16, 1
    %p101 = por %p99, %p100
    %p102 = scmp.ne.s32.totalorder %s93, %s94
    %p103 = scmp.eq.s32.totalorder %s16, 0
    %p104 = por %p102, %p103
    %p105 = scmp.ne.s32.totalorder %s93, %s94
    %p106 = scmp.eq.s32.totalorder %s17, 1
    %p107 = por %p105, %p106
    %p109 = scmp.ne.s32.totalorder %s94, %s108
    %p110 = scmp.eq.s32.totalorder %s17, 0
    %p111 = por %p109, %p110
    %s113 = sadd.s32 %s112, 1
    %p116 = scmp.eq.s32.totalorder %s11, 1
    %p117 = scmp.ne.s32.totalorder %s112, %s114
    %p118 = scmp.eq.s32.totalorder %s11, 0
    %p119 = por %p117, %p118
    %p120 = scmp.ne.s32.totalorder %s112, %s114
    %p121 = scmp.eq.s32.totalorder %s16, 1
    %p122 = por %p120, %p121
    %p123 = scmp.ne.s32.totalorder %s114, %s115
    %p124 = scmp.eq.s32.totalorder %s16, 0
    %p125 = por %p123, %p124
    %p126 = scmp.ne.s32.totalorder %s114, %s115
    %p127 = scmp.eq.s32.totalorder %s17, 1
    %p128 = por %p126, %p127
    %p130 = scmp.ne.s32.totalorder %s115, %s129
    %p131 = scmp.eq.s32.totalorder %s17, 0
    %p132 = por %p130, %p131
    %s134 = sadd.s32 %s133, 1
    %p137 = scmp.eq.s32.totalorder %s11, 1
    %p138 = scmp.ne.s32.totalorder %s133, %s135
    %p139 = scmp.eq.s32.totalorder %s11, 0
    %p140 = por %p138, %p139
    %p141 = scmp.ne.s32.totalorder %s133, %s135
    %p142 = scmp.eq.s32.totalorder %s16, 1
    %p143 = por %p141, %p142
    %p144 = scmp.ne.s32.totalorder %s135, %s136
    %p145 = scmp.eq.s32.totalorder %s16, 0
    %p146 = por %p144, %p145
    %p147 = scmp.ne.s32.totalorder %s135, %s136
    %p148 = scmp.eq.s32.totalorder %s17, 1
    %p149 = por %p147, %p148
    %p151 = scmp.ne.s32.totalorder %s136, %s150
    %p152 = scmp.eq.s32.totalorder %s17, 0
    %p153 = por %p151, %p152
    %s154 = smul.u32 %s19, %s18
    %s155 = smul.u32 %s26, %s30
    %s156 = ssub.s32 %s154, %s155
    %p157 = scmp.eq.s32.totalorder %s156, 0
    %s159 = sadd.s32 %s158, 1
    %s160 = scalar_select %p157, %s158, %s159
    %p163 = pneg %p157
    %p164 = scmp.eq.s32.totalorder %s11, 1
    %p165 = por %p163, %p164
    %p166 = scmp.ne.s32.totalorder %s158, %s161
    %p167 = scmp.eq.s32.totalorder %s11, 0
    %p168 = por %p166, %p167
    %p169 = scmp.ne.s32.totalorder %s158, %s161
    %p170 = scmp.eq.s32.totalorder %s16, 1
    %p171 = por %p169, %p170
    %p172 = scmp.ne.s32.totalorder %s161, %s162
    %p173 = scmp.eq.s32.totalorder %s16, 0
    %p174 = por %p172, %p173
    %p175 = scmp.ne.s32.totalorder %s161, %s162
    %p176 = scmp.eq.s32.totalorder %s17, 1
    %p177 = por %p175, %p176
    %p179 = scmp.ne.s32.totalorder %s162, %s178
    %p180 = scmp.eq.s32.totalorder %s17, 0
    %p181 = por %p179, %p180
    %p182 = scmp.le.s32.totalorder 1, %s11
    %p183 = scmp.lt.s32.totalorder %s11, 3
    %p184 = pnand %p182, %p183
    %p185 = pneg %p184
    // Predicated region
    $region9: #{decoder_forward.4} parent=5 // pred_check
      _
    $region10: #{decoder_forward.4} parent=5 // pred_check_branch
      %187 = sbr.rel (%p184) target = $region12
    $region11: #{decoder_forward.4} parent=5 // pred_region
      %s188 = ssub.s32 %s11, 1
      // Predicated region
      $region13: #{decoder_forward.4} parent=11 // pred_check
        %p189 = pneg %p104
      $region14: #{decoder_forward.4} parent=11 // pred_check_branch
        %191 = sbr.rel (%p189) target = $region16
      $region15: #{decoder_forward.4} parent=11 // pred_region
        _
      $region16: #{decoder_forward.4} parent=11 // pred_fallthru
        _
      // Predicated region
      $region17: #{decoder_forward.4} parent=11 // pred_check
        %p192 = pneg %p125
      $region18: #{decoder_forward.4} parent=11 // pred_check_branch
        %194 = sbr.rel (%p192) target = $region20
      $region19: #{decoder_forward.4} parent=11 // pred_region
        _
      $region20: #{decoder_forward.4} parent=11 // pred_fallthru
        _
      // Predicated region
      $region21: #{decoder_forward.4} parent=11 // pred_check
        %p195 = pneg %p146
      $region22: #{decoder_forward.4} parent=11 // pred_check_branch
        %197 = sbr.rel (%p195) target = $region24
      $region23: #{decoder_forward.4} parent=11 // pred_region
        _
      $region24: #{decoder_forward.4} parent=11 // pred_fallthru
        _
    $region12: #{decoder_forward.4} parent=5 // pred_fallthru
      _
    %p198 = scmp.lt.s32.totalorder %s11, 2
    // Predicated region
    $region25: #{decoder_forward.4} parent=5 // pred_check
      %p199 = pneg %p198
    $region26: #{decoder_forward.4} parent=5 // pred_check_branch
      %201 = sbr.rel (%p199) target = $region28
    $region27: #{decoder_forward.4} parent=5 // pred_region
      // Predicated region
      $region29: #{decoder_forward.4} parent=27 // pred_check
        %p202 = pneg %p47
      $region30: #{decoder_forward.4} parent=27 // pred_check_branch
        %204 = sbr.rel (%p202) target = $region32
      $region31: #{decoder_forward.4} parent=27 // pred_region
        %s205 = ssub.s32 1, %s18
        %s206 = smul.u32 %s19, %s205
        %s207 = smul.u32 8, %s206
        %p208 = scmp.lt.s32.totalorder %s207, 7
        %s209 = scalar_select %p208, %s207, 7
        %s210 = smul.addr %s209, 2
        %s211 = smul.addr %s210, 4
        %s212 = scalar_lea.vmem %s0, %s211
        %s213 = ssub.s32 1, %s18
        %s214 = smul.u32 %s19, %s213
        %s215 = smul.u32 8, %s214
      $region32: #{decoder_forward.4} parent=27 // pred_fallthru
        _
      // Predicated region
      $region33: #{decoder_forward.4} parent=27 // pred_check
        %p216 = pneg %p77
      $region34: #{decoder_forward.4} parent=27 // pred_check_branch
        %218 = sbr.rel (%p216) target = $region36
      $region35: #{decoder_forward.4} parent=27 // pred_region
        %s219 = ssub.s32 1, %s18
        %s220 = smul.u32 %s19, %s219
        %s221 = smul.u32 8, %s220
        %p222 = scmp.lt.s32.totalorder %s221, 7
        %s223 = scalar_select %p222, %s221, 7
        %s224 = smul.addr %s223, 4
        %s225 = smul.addr %s224, 4
        %s226 = scalar_lea.vmem %s1, %s225
        %s227 = ssub.s32 1, %s18
        %s228 = smul.u32 %s19, %s227
        %s229 = smul.u32 8, %s228
      $region36: #{decoder_forward.4} parent=27 // pred_fallthru
        _
    $region28: #{decoder_forward.4} parent=5 // pred_fallthru
      _
    %p230 = scmp.le.s32.totalorder 1, %s11
    %p231 = scmp.lt.s32.totalorder %s11, 3
    %p232 = pnand %p230, %p231
    %p233 = pneg %p232
    // Predicated region
    $region37: #{decoder_forward.4} parent=5 // pred_check
      _
    $region38: #{decoder_forward.4} parent=5 // pred_check_branch
      %235 = sbr.rel (%p232) target = $region40
    $region39: #{decoder_forward.4} parent=5 // pred_region
      %s236 = ssub.s32 %s11, 1
      %s237 = ssub.s32 1, %s20
      %s238 = smul.u32 %s21, %s237
      %s239 = smul.u32 8, %s238
      %p240 = scmp.lt.s32.totalorder %s239, 7
      %s241 = scalar_select %p240, %s239, 7
      %s242 = smul.addr %s241, 2
      %s243 = smul.addr %s242, 4
      %s244 = scalar_lea.vmem %s0, %s243
      %p245 = pneg %p53
      %p246 = pneg %p50
      %s247 = ssub.s32 1, %s20
      %s248 = smul.u32 %s21, %s247
      %s249 = smul.u32 8, %s248
      %p250 = scmp.lt.s32.totalorder %s249, 7
      %s251 = scalar_select %p250, %s249, 7
      %s252 = smul.addr %s251, 4
      %s253 = smul.addr %s252, 4
      %s254 = scalar_lea.vmem %s1, %s253
      %p255 = pneg %p83
      %p256 = pneg %p80
      %p257 = pneg %p104
      %p258 = pneg %p101
      %p259 = pneg %p125
      %p260 = pneg %p122
      %p261 = pneg %p146
      %p262 = pneg %p143
      %p263 = pneg %p174
      %p264 = pneg %p171
      %s265 = smul.u32 %s21, %s20
      %s266 = smul.u32 8, %s265
      %p267 = scmp.lt.s32.totalorder %s266, 7
      %s268 = scalar_select %p267, %s266, 7
      %s269 = smul.addr %s268, 2
      %s270 = smul.addr %s269, 8
      %s271 = scalar_lea.vmem %s5, %s270
      %s272 = ssub.s32 1, %s20
      %s273 = smul.u32 %s21, %s272
      %s274 = smul.u32 8, %s273
      %p275 = scmp.lt.s32.totalorder %s274, 7
      %s276 = scalar_select %p275, %s274, 7
      %s277 = smul.addr %s276, 2
      %s278 = smul.addr %s277, 4
      %s279 = scalar_lea.vmem %s0, %s278
      %s280 = ssub.s32 1, %s20
      %s281 = smul.u32 %s21, %s280
      %s282 = smul.u32 8, %s281
      %s283 = ssub.s32 1, %s20
      %s284 = smul.u32 %s21, %s283
      %s285 = smul.u32 8, %s284
      %p286 = scmp.lt.s32.totalorder %s285, 7
      %s287 = scalar_select %p286, %s285, 7
      %s288 = smul.addr %s287, 4
      %s289 = smul.addr %s288, 4
      %s290 = scalar_lea.vmem %s1, %s289
      %s291 = ssub.s32 1, %s20
      %s292 = smul.u32 %s21, %s291
      %s293 = smul.u32 8, %s292
      %s294 = smul.u32 %s21, %s20
      %s295 = smul.u32 8, %s294
      %p296 = scmp.lt.s32.totalorder %s295, 7
      %s297 = scalar_select %p296, %s295, 7
      %s298 = smul.addr %s297, 2
      %s299 = smul.addr %s298, 8
      %s300 = scalar_lea.vmem %s5, %s299
      %s301 = smul.u32 %s21, %s20
      %s302 = smul.u32 8, %s301
      %s303 = smul.u32 %s21, 64
      %p304 = scmp.eq.s32.totalorder %s20, 0
      // Predicated region
      $region41: #{decoder_forward.4} parent=39 // pred_check
        %p305 = pneg %p304
      $region42: #{decoder_forward.4} parent=39 // pred_check_branch
        %307 = sbr.rel (%p305) target = $region44
      $region43: #{decoder_forward.4} parent=39 // pred_region
        %p308 = scmp.eq.s32.totalorder %s21, 0
        // Predicated region
        $region45: #{decoder_forward.4} parent=43 // pred_check
          %p309 = pneg %p308
        $region46: #{decoder_forward.4} parent=43 // pred_check_branch
          %311 = sbr.rel (%p309) target = $region48
        $region47: #{decoder_forward.4} parent=43 // pred_region
          %v312 = vlaneseq
          %vm313 = vcmp.ge.s32.totalorder %v312, 0
          %vm314 = vcmp.lt.s32.totalorder %v312, 256
          %vm315 = vmand %vm313, %vm314
          %316 = vst.msk [vmem:[#allocation3] sm:$0x3] %vm315, 0.0
        $region48: #{decoder_forward.4} parent=43 // pred_fallthru
          _
        %v317 = vld [vmem:[%s279] sm:$0xff]
        %v318 = vld [vmem:[%s279 + $0x8] sm:$0xff]
        %v319 = vld [vmem:[%s279 + $0x10] sm:$0xff]
        %v320 = vld [vmem:[%s279 + $0x18] sm:$0xff]
        %v321 = vld [vmem:[%s279 + $0x20] sm:$0xff]
        %v322 = vld [vmem:[%s279 + $0x28] sm:$0xff]
        %v323 = vld [vmem:[%s279 + $0x30] sm:$0xff]
        %v324 = vld [vmem:[%s279 + $0x38] sm:$0xff]
        %v325 = vld [vmem:[%s2] sm:$0xff]
        %v326 = vld [vmem:[%s2 + $0x8] sm:$0xff]
        %v327 = vld [vmem:[%s2 + $0x10] sm:$0xff]
        %v328 = vld [vmem:[%s2 + $0x18] sm:$0xff]
        %v329 = vld [vmem:[%s2 + $0x20] sm:$0xff]
        %v330 = vld [vmem:[%s2 + $0x28] sm:$0xff]
        %v331 = vld [vmem:[%s2 + $0x30] sm:$0xff]
        %v332 = vld [vmem:[%s2 + $0x38] sm:$0xff]
        %v333 = vld [vmem:[%s2 + $0x40] sm:$0xff]
        %v334 = vld [vmem:[%s2 + $0x48] sm:$0xff]
        %v335 = vld [vmem:[%s2 + $0x50] sm:$0xff]
        %v336 = vld [vmem:[%s2 + $0x58] sm:$0xff]
        %v337 = vld [vmem:[%s2 + $0x60] sm:$0xff]
        %v338 = vld [vmem:[%s2 + $0x68] sm:$0xff]
        %v339 = vld [vmem:[%s2 + $0x70] sm:$0xff]
        %v340 = vld [vmem:[%s2 + $0x78] sm:$0xff]
        %v341 = vld [vmem:[%s2 + $0x80] sm:$0xff]
        %v342 = vld [vmem:[%s2 + $0x88] sm:$0xff]
        %v343 = vld [vmem:[%s2 + $0x90] sm:$0xff]
        %v344 = vld [vmem:[%s2 + $0x98] sm:$0xff]
        %v345 = vld [vmem:[%s2 + $0xa0] sm:$0xff]
        %v346 = vld [vmem:[%s2 + $0xa8] sm:$0xff]
        %v347 = vld [vmem:[%s2 + $0xb0] sm:$0xff]
        %v348 = vld [vmem:[%s2 + $0xb8] sm:$0xff]
        %v349 = vld [vmem:[%s2 + $0xc0] sm:$0xff]
        %v350 = vld [vmem:[%s2 + $0xc8] sm:$0xff]
        %v351 = vld [vmem:[%s2 + $0xd0] sm:$0xff]
        %v352 = vld [vmem:[%s2 + $0xd8] sm:$0xff]
        %v353 = vld [vmem:[%s2 + $0xe0] sm:$0xff]
        %v354 = vld [vmem:[%s2 + $0xe8] sm:$0xff]
        %v355 = vld [vmem:[%s2 + $0xf0] sm:$0xff]
        %v356 = vld [vmem:[%s2 + $0xf8] sm:$0xff]
        %v365 = vunpack.c.l.b16 %v317
        %v366 = vunpack.c.h.b16 %v317
        %v367 = vunpack.c.l.b16 %v318
        %v368 = vunpack.c.h.b16 %v318
        %v369 = vunpack.c.l.b16 %v319
        %v370 = vunpack.c.h.b16 %v319
        %v371 = vunpack.c.l.b16 %v320
        %v372 = vunpack.c.h.b16 %v320
        %v373 = vunpack.c.l.b16 %v321
        %v374 = vunpack.c.h.b16 %v321
        %v375 = vunpack.c.l.b16 %v322
        %v376 = vunpack.c.h.b16 %v322
        %v377 = vunpack.c.l.b16 %v323
        %v378 = vunpack.c.h.b16 %v323
        %v379 = vunpack.c.l.b16 %v324
        %v380 = vunpack.c.h.b16 %v324
        %v381 = vpack.c.b16 %v367, %v365
        %v382 = vpack.c.b16 %v368, %v366
        %v383 = vpack.c.b16 %v371, %v369
        %v384 = vpack.c.b16 %v372, %v370
        %v385 = vpack.c.b16 %v375, %v373
        %v386 = vpack.c.b16 %v376, %v374
        %v387 = vpack.c.b16 %v379, %v377
        %v388 = vpack.c.b16 %v380, %v378
        %v429 = vunpack.c.l.b16 %v325
        %v430 = vunpack.c.h.b16 %v325
        %v431 = vunpack.c.l.b16 %v326
        %v432 = vunpack.c.h.b16 %v326
        %v433 = vunpack.c.l.b16 %v327
        %v434 = vunpack.c.h.b16 %v327
        %v435 = vunpack.c.l.b16 %v328
        %v436 = vunpack.c.h.b16 %v328
        %v437 = vunpack.c.l.b16 %v329
        %v438 = vunpack.c.h.b16 %v329
        %v439 = vunpack.c.l.b16 %v330
        %v440 = vunpack.c.h.b16 %v330
        %v441 = vunpack.c.l.b16 %v331
        %v442 = vunpack.c.h.b16 %v331
        %v443 = vunpack.c.l.b16 %v332
        %v444 = vunpack.c.h.b16 %v332
        %v445 = vunpack.c.l.b16 %v333
        %v446 = vunpack.c.h.b16 %v333
        %v447 = vunpack.c.l.b16 %v334
        %v448 = vunpack.c.h.b16 %v334
        %v449 = vunpack.c.l.b16 %v335
        %v450 = vunpack.c.h.b16 %v335
        %v451 = vunpack.c.l.b16 %v336
        %v452 = vunpack.c.h.b16 %v336
        %v453 = vunpack.c.l.b16 %v337
        %v454 = vunpack.c.h.b16 %v337
        %v455 = vunpack.c.l.b16 %v338
        %v456 = vunpack.c.h.b16 %v338
        %v457 = vunpack.c.l.b16 %v339
        %v458 = vunpack.c.h.b16 %v339
        %v459 = vunpack.c.l.b16 %v340
        %v460 = vunpack.c.h.b16 %v340
        %v461 = vunpack.c.l.b16 %v341
        %v462 = vunpack.c.h.b16 %v341
        %v463 = vunpack.c.l.b16 %v342
        %v464 = vunpack.c.h.b16 %v342
        %v465 = vunpack.c.l.b16 %v343
        %v466 = vunpack.c.h.b16 %v343
        %v467 = vunpack.c.l.b16 %v344
        %v468 = vunpack.c.h.b16 %v344
        %v469 = vunpack.c.l.b16 %v345
        %v470 = vunpack.c.h.b16 %v345
        %v471 = vunpack.c.l.b16 %v346
        %v472 = vunpack.c.h.b16 %v346
        %v473 = vunpack.c.l.b16 %v347
        %v474 = vunpack.c.h.b16 %v347
        %v475 = vunpack.c.l.b16 %v348
        %v476 = vunpack.c.h.b16 %v348
        %v477 = vunpack.c.l.b16 %v349
        %v478 = vunpack.c.h.b16 %v349
        %v479 = vunpack.c.l.b16 %v350
        %v480 = vunpack.c.h.b16 %v350
        %v481 = vunpack.c.l.b16 %v351
        %v482 = vunpack.c.h.b16 %v351
        %v483 = vunpack.c.l.b16 %v352
        %v484 = vunpack.c.h.b16 %v352
        %v485 = vunpack.c.l.b16 %v353
        %v486 = vunpack.c.h.b16 %v353
        %v487 = vunpack.c.l.b16 %v354
        %v488 = vunpack.c.h.b16 %v354
        %v489 = vunpack.c.l.b16 %v355
        %v490 = vunpack.c.h.b16 %v355
        %v491 = vunpack.c.l.b16 %v356
        %v492 = vunpack.c.h.b16 %v356
        %v493 = vpack.c.b16 %v431, %v429
        %v494 = vpack.c.b16 %v432, %v430
        %v495 = vpack.c.b16 %v435, %v433
        %v496 = vpack.c.b16 %v436, %v434
        %v497 = vpack.c.b16 %v439, %v437
        %v498 = vpack.c.b16 %v440, %v438
        %v499 = vpack.c.b16 %v443, %v441
        %v500 = vpack.c.b16 %v444, %v442
        %v501 = vpack.c.b16 %v447, %v445
        %v502 = vpack.c.b16 %v448, %v446
        %v503 = vpack.c.b16 %v451, %v449
        %v504 = vpack.c.b16 %v452, %v450
        %v505 = vpack.c.b16 %v455, %v453
        %v506 = vpack.c.b16 %v456, %v454
        %v507 = vpack.c.b16 %v459, %v457
        %v508 = vpack.c.b16 %v460, %v458
        %v509 = vpack.c.b16 %v463, %v461
        %v510 = vpack.c.b16 %v464, %v462
        %v511 = vpack.c.b16 %v467, %v465
        %v512 = vpack.c.b16 %v468, %v466
        %v513 = vpack.c.b16 %v471, %v469
        %v514 = vpack.c.b16 %v472, %v470
        %v515 = vpack.c.b16 %v475, %v473
        %v516 = vpack.c.b16 %v476, %v474
        %v517 = vpack.c.b16 %v479, %v477
        %v518 = vpack.c.b16 %v480, %v478
        %v519 = vpack.c.b16 %v483, %v481
        %v520 = vpack.c.b16 %v484, %v482
        %v521 = vpack.c.b16 %v487, %v485
        %v522 = vpack.c.b16 %v488, %v486
        %v523 = vpack.c.b16 %v491, %v489
        %v524 = vpack.c.b16 %v492, %v490
        %557 = vmatpush.bf16.msra.mxu0 %v507
        %558 = vmatpush.bf16.msra.mxu0 %v505
        %559 = vmatpush.bf16.msra.mxu0 %v503
        %560 = vmatpush.bf16.msra.mxu0 %v501
        %561 = vmatpush.bf16.msra.mxu0 %v499
        %562 = vmatpush.bf16.msra.mxu0 %v497
        %563 = vmatpush.bf16.msra.mxu0 %v495
        %564 = vmatpush.bf16.msra.mxu0 %v493
        %565 = vmatmul.bf16.gmra.mxu0 %v381
        %v566 = vpop.f32.mrf.mxu0
        %v567 = vadd.f32 0.0, %v566
        %v568 = vpop.f32.mrf.mxu0
        %v569 = vadd.f32 0.0, %v568
        %570 = vmatmul.bf16.gmra.mxu0 %v383
        %v571 = vpop.f32.mrf.mxu0
        %v572 = vadd.f32 0.0, %v571
        %v573 = vpop.f32.mrf.mxu0
        %v574 = vadd.f32 0.0, %v573
        %575 = vmatmul.bf16.gmra.mxu0 %v385
        %v576 = vpop.f32.mrf.mxu0
        %v577 = vadd.f32 0.0, %v576
        %v578 = vpop.f32.mrf.mxu0
        %v579 = vadd.f32 0.0, %v578
        %580 = vmatmul.bf16.gmra.mxu0 %v387
        %v581 = vpop.f32.mrf.mxu0
        %v582 = vadd.f32 0.0, %v581
        %v583 = vpop.f32.mrf.mxu0
        %v584 = vadd.f32 0.0, %v583
        %585 = vdwg.mxu0
        %586 = vmatpush.bf16.msra.mxu0 %v523
        %587 = vmatpush.bf16.msra.mxu0 %v521
        %588 = vmatpush.bf16.msra.mxu0 %v519
        %589 = vmatpush.bf16.msra.mxu0 %v517
        %590 = vmatpush.bf16.msra.mxu0 %v515
        %591 = vmatpush.bf16.msra.mxu0 %v513
        %592 = vmatpush.bf16.msra.mxu0 %v511
        %593 = vmatpush.bf16.msra.mxu0 %v509
        %594 = vmatmul.bf16.gmra.mxu0 %v382
        %v595 = vpop.f32.mrf.mxu0
        %v596 = vadd.f32 %v567, %v595
        %v597 = vpop.f32.mrf.mxu0
        %v598 = vadd.f32 %v569, %v597
        %599 = vmatmul.bf16.gmra.mxu0 %v384
        %v600 = vpop.f32.mrf.mxu0
        %v601 = vadd.f32 %v572, %v600
        %v602 = vpop.f32.mrf.mxu0
        %v603 = vadd.f32 %v574, %v602
        %604 = vmatmul.bf16.gmra.mxu0 %v386
        %v605 = vpop.f32.mrf.mxu0
        %v606 = vadd.f32 %v577, %v605
        %v607 = vpop.f32.mrf.mxu0
        %v608 = vadd.f32 %v579, %v607
        %609 = vmatmul.bf16.gmra.mxu0 %v388
        %v610 = vpop.f32.mrf.mxu0
        %v611 = vadd.f32 %v582, %v610
        %v612 = vpop.f32.mrf.mxu0
        %v613 = vadd.f32 %v584, %v612
        %614 = vdwg.mxu0
        %615 = vmatpush.bf16.msra.mxu0 %v508
        %616 = vmatpush.bf16.msra.mxu0 %v506
        %617 = vmatpush.bf16.msra.mxu0 %v504
        %618 = vmatpush.bf16.msra.mxu0 %v502
        %619 = vmatpush.bf16.msra.mxu0 %v500
        %620 = vmatpush.bf16.msra.mxu0 %v498
        %621 = vmatpush.bf16.msra.mxu0 %v496
        %622 = vmatpush.bf16.msra.mxu0 %v494
        %623 = vmatmul.bf16.gmra.mxu0 %v381
        %v624 = vpop.f32.mrf.mxu0
        %v625 = vadd.f32 0.0, %v624
        %v626 = vpop.f32.mrf.mxu0
        %v627 = vadd.f32 0.0, %v626
        %628 = vmatmul.bf16.gmra.mxu0 %v383
        %v629 = vpop.f32.mrf.mxu0
        %v630 = vadd.f32 0.0, %v629
        %v631 = vpop.f32.mrf.mxu0
        %v632 = vadd.f32 0.0, %v631
        %633 = vmatmul.bf16.gmra.mxu0 %v385
        %v634 = vpop.f32.mrf.mxu0
        %v635 = vadd.f32 0.0, %v634
        %v636 = vpop.f32.mrf.mxu0
        %v637 = vadd.f32 0.0, %v636
        %638 = vmatmul.bf16.gmra.mxu0 %v387
        %v639 = vpop.f32.mrf.mxu0
        %v640 = vadd.f32 0.0, %v639
        %v641 = vpop.f32.mrf.mxu0
        %v642 = vadd.f32 0.0, %v641
        %643 = vdwg.mxu0
        %644 = vmatpush.bf16.msra.mxu0 %v524
        %645 = vmatpush.bf16.msra.mxu0 %v522
        %646 = vmatpush.bf16.msra.mxu0 %v520
        %647 = vmatpush.bf16.msra.mxu0 %v518
        %648 = vmatpush.bf16.msra.mxu0 %v516
        %649 = vmatpush.bf16.msra.mxu0 %v514
        %650 = vmatpush.bf16.msra.mxu0 %v512
        %651 = vmatpush.bf16.msra.mxu0 %v510
        %652 = vmatmul.bf16.gmra.mxu0 %v382
        %v653 = vpop.f32.mrf.mxu0
        %v654 = vadd.f32 %v625, %v653
        %v655 = vpop.f32.mrf.mxu0
        %v656 = vadd.f32 %v627, %v655
        %657 = vmatmul.bf16.gmra.mxu0 %v384
        %v658 = vpop.f32.mrf.mxu0
        %v659 = vadd.f32 %v630, %v658
        %v660 = vpop.f32.mrf.mxu0
        %v661 = vadd.f32 %v632, %v660
        %662 = vmatmul.bf16.gmra.mxu0 %v386
        %v663 = vpop.f32.mrf.mxu0
        %v664 = vadd.f32 %v635, %v663
        %v665 = vpop.f32.mrf.mxu0
        %v666 = vadd.f32 %v637, %v665
        %667 = vmatmul.bf16.gmra.mxu0 %v388
        %v668 = vpop.f32.mrf.mxu0
        %v669 = vadd.f32 %v640, %v668
        %v670 = vpop.f32.mrf.mxu0
        %v671 = vadd.f32 %v642, %v670
        %672 = vdwg.mxu0
        %v673 = vmax.f32 %v596, 0.0
        %v674 = vmax.f32 %v654, 0.0
        %v675 = vmax.f32 %v598, 0.0
        %v676 = vmax.f32 %v656, 0.0
        %v677 = vmax.f32 %v601, 0.0
        %v678 = vmax.f32 %v659, 0.0
        %v679 = vmax.f32 %v603, 0.0
        %v680 = vmax.f32 %v661, 0.0
        %v681 = vmax.f32 %v606, 0.0
        %v682 = vmax.f32 %v664, 0.0
        %v683 = vmax.f32 %v608, 0.0
        %v684 = vmax.f32 %v666, 0.0
        %v685 = vmax.f32 %v611, 0.0
        %v686 = vmax.f32 %v669, 0.0
        %v687 = vmax.f32 %v613, 0.0
        %v688 = vmax.f32 %v671, 0.0
        %v689 = vld [vmem:[%s290] sm:$0xff]
        %v690 = vld [vmem:[%s290 + $0x8] sm:$0xff]
        %v691 = vld [vmem:[%s290 + $0x10] sm:$0xff]
        %v692 = vld [vmem:[%s290 + $0x18] sm:$0xff]
        %v693 = vld [vmem:[%s290 + $0x20] sm:$0xff]
        %v694 = vld [vmem:[%s290 + $0x28] sm:$0xff]
        %v695 = vld [vmem:[%s290 + $0x30] sm:$0xff]
        %v696 = vld [vmem:[%s290 + $0x38] sm:$0xff]
        %v697 = vld [vmem:[%s290 + $0x40] sm:$0xff]
        %v698 = vld [vmem:[%s290 + $0x48] sm:$0xff]
        %v699 = vld [vmem:[%s290 + $0x50] sm:$0xff]
        %v700 = vld [vmem:[%s290 + $0x58] sm:$0xff]
        %v701 = vld [vmem:[%s290 + $0x60] sm:$0xff]
        %v702 = vld [vmem:[%s290 + $0x68] sm:$0xff]
        %v703 = vld [vmem:[%s290 + $0x70] sm:$0xff]
        %v704 = vld [vmem:[%s290 + $0x78] sm:$0xff]
        %v705 = vld [vmem:[%s3] sm:$0xff]
        %v706 = vld [vmem:[%s3 + $0x8] sm:$0xff]
        %v707 = vld [vmem:[%s3 + $0x10] sm:$0xff]
        %v708 = vld [vmem:[%s3 + $0x18] sm:$0xff]
        %v709 = vld [vmem:[%s3 + $0x20] sm:$0xff]
        %v710 = vld [vmem:[%s3 + $0x28] sm:$0xff]
        %v711 = vld [vmem:[%s3 + $0x30] sm:$0xff]
        %v712 = vld [vmem:[%s3 + $0x38] sm:$0xff]
        %v713 = vld [vmem:[%s3 + $0x40] sm:$0xff]
        %v714 = vld [vmem:[%s3 + $0x48] sm:$0xff]
        %v715 = vld [vmem:[%s3 + $0x50] sm:$0xff]
        %v716 = vld [vmem:[%s3 + $0x58] sm:$0xff]
        %v717 = vld [vmem:[%s3 + $0x60] sm:$0xff]
        %v718 = vld [vmem:[%s3 + $0x68] sm:$0xff]
        %v719 = vld [vmem:[%s3 + $0x70] sm:$0xff]
        %v720 = vld [vmem:[%s3 + $0x78] sm:$0xff]
        %v721 = vld [vmem:[%s3 + $0x80] sm:$0xff]
        %v722 = vld [vmem:[%s3 + $0x88] sm:$0xff]
        %v723 = vld [vmem:[%s3 + $0x90] sm:$0xff]
        %v724 = vld [vmem:[%s3 + $0x98] sm:$0xff]
        %v725 = vld [vmem:[%s3 + $0xa0] sm:$0xff]
        %v726 = vld [vmem:[%s3 + $0xa8] sm:$0xff]
        %v727 = vld [vmem:[%s3 + $0xb0] sm:$0xff]
        %v728 = vld [vmem:[%s3 + $0xb8] sm:$0xff]
        %v729 = vld [vmem:[%s3 + $0xc0] sm:$0xff]
        %v730 = vld [vmem:[%s3 + $0xc8] sm:$0xff]
        %v731 = vld [vmem:[%s3 + $0xd0] sm:$0xff]
        %v732 = vld [vmem:[%s3 + $0xd8] sm:$0xff]
        %v733 = vld [vmem:[%s3 + $0xe0] sm:$0xff]
        %v734 = vld [vmem:[%s3 + $0xe8] sm:$0xff]
        %v735 = vld [vmem:[%s3 + $0xf0] sm:$0xff]
        %v736 = vld [vmem:[%s3 + $0xf8] sm:$0xff]
        %v737 = vld [vmem:[%s3 + $0x100] sm:$0xff]
        %v738 = vld [vmem:[%s3 + $0x108] sm:$0xff]
        %v739 = vld [vmem:[%s3 + $0x110] sm:$0xff]
        %v740 = vld [vmem:[%s3 + $0x118] sm:$0xff]
        %v741 = vld [vmem:[%s3 + $0x120] sm:$0xff]
        %v742 = vld [vmem:[%s3 + $0x128] sm:$0xff]
        %v743 = vld [vmem:[%s3 + $0x130] sm:$0xff]
        %v744 = vld [vmem:[%s3 + $0x138] sm:$0xff]
        %v745 = vld [vmem:[%s3 + $0x140] sm:$0xff]
        %v746 = vld [vmem:[%s3 + $0x148] sm:$0xff]
        %v747 = vld [vmem:[%s3 + $0x150] sm:$0xff]
        %v748 = vld [vmem:[%s3 + $0x158] sm:$0xff]
        %v749 = vld [vmem:[%s3 + $0x160] sm:$0xff]
        %v750 = vld [vmem:[%s3 + $0x168] sm:$0xff]
        %v751 = vld [vmem:[%s3 + $0x170] sm:$0xff]
        %v752 = vld [vmem:[%s3 + $0x178] sm:$0xff]
        %v753 = vld [vmem:[%s3 + $0x180] sm:$0xff]
        %v754 = vld [vmem:[%s3 + $0x188] sm:$0xff]
        %v755 = vld [vmem:[%s3 + $0x190] sm:$0xff]
        %v756 = vld [vmem:[%s3 + $0x198] sm:$0xff]
        %v757 = vld [vmem:[%s3 + $0x1a0] sm:$0xff]
        %v758 = vld [vmem:[%s3 + $0x1a8] sm:$0xff]
        %v759 = vld [vmem:[%s3 + $0x1b0] sm:$0xff]
        %v760 = vld [vmem:[%s3 + $0x1b8] sm:$0xff]
        %v761 = vld [vmem:[%s3 + $0x1c0] sm:$0xff]
        %v762 = vld [vmem:[%s3 + $0x1c8] sm:$0xff]
        %v763 = vld [vmem:[%s3 + $0x1d0] sm:$0xff]
        %v764 = vld [vmem:[%s3 + $0x1d8] sm:$0xff]
        %v765 = vld [vmem:[%s3 + $0x1e0] sm:$0xff]
        %v766 = vld [vmem:[%s3 + $0x1e8] sm:$0xff]
        %v767 = vld [vmem:[%s3 + $0x1f0] sm:$0xff]
        %v768 = vld [vmem:[%s3 + $0x1f8] sm:$0xff]
        %v785 = vunpack.c.l.b16 %v689
        %v786 = vunpack.c.h.b16 %v689
        %v787 = vunpack.c.l.b16 %v690
        %v788 = vunpack.c.h.b16 %v690
        %v789 = vunpack.c.l.b16 %v691
        %v790 = vunpack.c.h.b16 %v691
        %v791 = vunpack.c.l.b16 %v692
        %v792 = vunpack.c.h.b16 %v692
        %v793 = vunpack.c.l.b16 %v693
        %v794 = vunpack.c.h.b16 %v693
        %v795 = vunpack.c.l.b16 %v694
        %v796 = vunpack.c.h.b16 %v694
        %v797 = vunpack.c.l.b16 %v695
        %v798 = vunpack.c.h.b16 %v695
        %v799 = vunpack.c.l.b16 %v696
        %v800 = vunpack.c.h.b16 %v696
        %v801 = vunpack.c.l.b16 %v697
        %v802 = vunpack.c.h.b16 %v697
        %v803 = vunpack.c.l.b16 %v698
        %v804 = vunpack.c.h.b16 %v698
        %v805 = vunpack.c.l.b16 %v699
        %v806 = vunpack.c.h.b16 %v699
        %v807 = vunpack.c.l.b16 %v700
        %v808 = vunpack.c.h.b16 %v700
        %v809 = vunpack.c.l.b16 %v701
        %v810 = vunpack.c.h.b16 %v701
        %v811 = vunpack.c.l.b16 %v702
        %v812 = vunpack.c.h.b16 %v702
        %v813 = vunpack.c.l.b16 %v703
        %v814 = vunpack.c.h.b16 %v703
        %v815 = vunpack.c.l.b16 %v704
        %v816 = vunpack.c.h.b16 %v704
        %v817 = vpack.c.b16 %v789, %v785
        %v818 = vpack.c.b16 %v790, %v786
        %v819 = vpack.c.b16 %v791, %v787
        %v820 = vpack.c.b16 %v792, %v788
        %v821 = vpack.c.b16 %v797, %v793
        %v822 = vpack.c.b16 %v798, %v794
        %v823 = vpack.c.b16 %v799, %v795
        %v824 = vpack.c.b16 %v800, %v796
        %v825 = vpack.c.b16 %v805, %v801
        %v826 = vpack.c.b16 %v806, %v802
        %v827 = vpack.c.b16 %v807, %v803
        %v828 = vpack.c.b16 %v808, %v804
        %v829 = vpack.c.b16 %v813, %v809
        %v830 = vpack.c.b16 %v814, %v810
        %v831 = vpack.c.b16 %v815, %v811
        %v832 = vpack.c.b16 %v816, %v812
        %v913 = vunpack.c.l.b16 %v705
        %v914 = vunpack.c.h.b16 %v705
        %v915 = vunpack.c.l.b16 %v706
        %v916 = vunpack.c.h.b16 %v706
        %v917 = vunpack.c.l.b16 %v707
        %v918 = vunpack.c.h.b16 %v707
        %v919 = vunpack.c.l.b16 %v708
        %v920 = vunpack.c.h.b16 %v708
        %v921 = vunpack.c.l.b16 %v709
        %v922 = vunpack.c.h.b16 %v709
        %v923 = vunpack.c.l.b16 %v710
        %v924 = vunpack.c.h.b16 %v710
        %v925 = vunpack.c.l.b16 %v711
        %v926 = vunpack.c.h.b16 %v711
        %v927 = vunpack.c.l.b16 %v712
        %v928 = vunpack.c.h.b16 %v712
        %v929 = vunpack.c.l.b16 %v713
        %v930 = vunpack.c.h.b16 %v713
        %v931 = vunpack.c.l.b16 %v714
        %v932 = vunpack.c.h.b16 %v714
        %v933 = vunpack.c.l.b16 %v715
        %v934 = vunpack.c.h.b16 %v715
        %v935 = vunpack.c.l.b16 %v716
        %v936 = vunpack.c.h.b16 %v716
        %v937 = vunpack.c.l.b16 %v717
        %v938 = vunpack.c.h.b16 %v717
        %v939 = vunpack.c.l.b16 %v718
        %v940 = vunpack.c.h.b16 %v718
        %v941 = vunpack.c.l.b16 %v719
        %v942 = vunpack.c.h.b16 %v719
        %v943 = vunpack.c.l.b16 %v720
        %v944 = vunpack.c.h.b16 %v720
        %v945 = vunpack.c.l.b16 %v721
        %v946 = vunpack.c.h.b16 %v721
        %v947 = vunpack.c.l.b16 %v722
        %v948 = vunpack.c.h.b16 %v722
        %v949 = vunpack.c.l.b16 %v723
        %v950 = vunpack.c.h.b16 %v723
        %v951 = vunpack.c.l.b16 %v724
        %v952 = vunpack.c.h.b16 %v724
        %v953 = vunpack.c.l.b16 %v725
        %v954 = vunpack.c.h.b16 %v725
        %v955 = vunpack.c.l.b16 %v726
        %v956 = vunpack.c.h.b16 %v726
        %v957 = vunpack.c.l.b16 %v727
        %v958 = vunpack.c.h.b16 %v727
        %v959 = vunpack.c.l.b16 %v728
        %v960 = vunpack.c.h.b16 %v728
        %v961 = vunpack.c.l.b16 %v729
        %v962 = vunpack.c.h.b16 %v729
        %v963 = vunpack.c.l.b16 %v730
        %v964 = vunpack.c.h.b16 %v730
        %v965 = vunpack.c.l.b16 %v731
        %v966 = vunpack.c.h.b16 %v731
        %v967 = vunpack.c.l.b16 %v732
        %v968 = vunpack.c.h.b16 %v732
        %v969 = vunpack.c.l.b16 %v733
        %v970 = vunpack.c.h.b16 %v733
        %v971 = vunpack.c.l.b16 %v734
        %v972 = vunpack.c.h.b16 %v734
        %v973 = vunpack.c.l.b16 %v735
        %v974 = vunpack.c.h.b16 %v735
        %v975 = vunpack.c.l.b16 %v736
        %v976 = vunpack.c.h.b16 %v736
        %v977 = vunpack.c.l.b16 %v737
        %v978 = vunpack.c.h.b16 %v737
        %v979 = vunpack.c.l.b16 %v738
        %v980 = vunpack.c.h.b16 %v738
        %v981 = vunpack.c.l.b16 %v739
        %v982 = vunpack.c.h.b16 %v739
        %v983 = vunpack.c.l.b16 %v740
        %v984 = vunpack.c.h.b16 %v740
        %v985 = vunpack.c.l.b16 %v741
        %v986 = vunpack.c.h.b16 %v741
        %v987 = vunpack.c.l.b16 %v742
        %v988 = vunpack.c.h.b16 %v742
        %v989 = vunpack.c.l.b16 %v743
        %v990 = vunpack.c.h.b16 %v743
        %v991 = vunpack.c.l.b16 %v744
        %v992 = vunpack.c.h.b16 %v744
        %v993 = vunpack.c.l.b16 %v745
        %v994 = vunpack.c.h.b16 %v745
        %v995 = vunpack.c.l.b16 %v746
        %v996 = vunpack.c.h.b16 %v746
        %v997 = vunpack.c.l.b16 %v747
        %v998 = vunpack.c.h.b16 %v747
        %v999 = vunpack.c.l.b16 %v748
        %v1000 = vunpack.c.h.b16 %v748
        %v1001 = vunpack.c.l.b16 %v749
        %v1002 = vunpack.c.h.b16 %v749
        %v1003 = vunpack.c.l.b16 %v750
        %v1004 = vunpack.c.h.b16 %v750
        %v1005 = vunpack.c.l.b16 %v751
        %v1006 = vunpack.c.h.b16 %v751
        %v1007 = vunpack.c.l.b16 %v752
        %v1008 = vunpack.c.h.b16 %v752
        %v1009 = vunpack.c.l.b16 %v753
        %v1010 = vunpack.c.h.b16 %v753
        %v1011 = vunpack.c.l.b16 %v754
        %v1012 = vunpack.c.h.b16 %v754
        %v1013 = vunpack.c.l.b16 %v755
        %v1014 = vunpack.c.h.b16 %v755
        %v1015 = vunpack.c.l.b16 %v756
        %v1016 = vunpack.c.h.b16 %v756
        %v1017 = vunpack.c.l.b16 %v757
        %v1018 = vunpack.c.h.b16 %v757
        %v1019 = vunpack.c.l.b16 %v758
        %v1020 = vunpack.c.h.b16 %v758
        %v1021 = vunpack.c.l.b16 %v759
        %v1022 = vunpack.c.h.b16 %v759
        %v1023 = vunpack.c.l.b16 %v760
        %v1024 = vunpack.c.h.b16 %v760
        %v1025 = vunpack.c.l.b16 %v761
        %v1026 = vunpack.c.h.b16 %v761
        %v1027 = vunpack.c.l.b16 %v762
        %v1028 = vunpack.c.h.b16 %v762
        %v1029 = vunpack.c.l.b16 %v763
        %v1030 = vunpack.c.h.b16 %v763
        %v1031 = vunpack.c.l.b16 %v764
        %v1032 = vunpack.c.h.b16 %v764
        %v1033 = vunpack.c.l.b16 %v765
        %v1034 = vunpack.c.h.b16 %v765
        %v1035 = vunpack.c.l.b16 %v766
        %v1036 = vunpack.c.h.b16 %v766
        %v1037 = vunpack.c.l.b16 %v767
        %v1038 = vunpack.c.h.b16 %v767
        %v1039 = vunpack.c.l.b16 %v768
        %v1040 = vunpack.c.h.b16 %v768
        %v1041 = vpack.c.b16 %v915, %v913
        %v1042 = vpack.c.b16 %v916, %v914
        %v1043 = vpack.c.b16 %v919, %v917
        %v1044 = vpack.c.b16 %v920, %v918
        %v1045 = vpack.c.b16 %v923, %v921
        %v1046 = vpack.c.b16 %v924, %v922
        %v1047 = vpack.c.b16 %v927, %v925
        %v1048 = vpack.c.b16 %v928, %v926
        %v1049 = vpack.c.b16 %v931, %v929
        %v1050 = vpack.c.b16 %v932, %v930
        %v1051 = vpack.c.b16 %v935, %v933
        %v1052 = vpack.c.b16 %v936, %v934
        %v1053 = vpack.c.b16 %v939, %v937
        %v1054 = vpack.c.b16 %v940, %v938
        %v1055 = vpack.c.b16 %v943, %v941
        %v1056 = vpack.c.b16 %v944, %v942
        %v1057 = vpack.c.b16 %v947, %v945
        %v1058 = vpack.c.b16 %v948, %v946
        %v1059 = vpack.c.b16 %v951, %v949
        %v1060 = vpack.c.b16 %v952, %v950
        %v1061 = vpack.c.b16 %v955, %v953
        %v1062 = vpack.c.b16 %v956, %v954
        %v1063 = vpack.c.b16 %v959, %v957
        %v1064 = vpack.c.b16 %v960, %v958
        %v1065 = vpack.c.b16 %v963, %v961
        %v1066 = vpack.c.b16 %v964, %v962
        %v1067 = vpack.c.b16 %v967, %v965
        %v1068 = vpack.c.b16 %v968, %v966
        %v1069 = vpack.c.b16 %v971, %v969
        %v1070 = vpack.c.b16 %v972, %v970
        %v1071 = vpack.c.b16 %v975, %v973
        %v1072 = vpack.c.b16 %v976, %v974
        %v1073 = vpack.c.b16 %v979, %v977
        %v1074 = vpack.c.b16 %v980, %v978
        %v1075 = vpack.c.b16 %v983, %v981
        %v1076 = vpack.c.b16 %v984, %v982
        %v1077 = vpack.c.b16 %v987, %v985
        %v1078 = vpack.c.b16 %v988, %v986
        %v1079 = vpack.c.b16 %v991, %v989
        %v1080 = vpack.c.b16 %v992, %v990
        %v1081 = vpack.c.b16 %v995, %v993
        %v1082 = vpack.c.b16 %v996, %v994
        %v1083 = vpack.c.b16 %v999, %v997
        %v1084 = vpack.c.b16 %v1000, %v998
        %v1085 = vpack.c.b16 %v1003, %v1001
        %v1086 = vpack.c.b16 %v1004, %v1002
        %v1087 = vpack.c.b16 %v1007, %v1005
        %v1088 = vpack.c.b16 %v1008, %v1006
        %v1089 = vpack.c.b16 %v1011, %v1009
        %v1090 = vpack.c.b16 %v1012, %v1010
        %v1091 = vpack.c.b16 %v1015, %v1013
        %v1092 = vpack.c.b16 %v1016, %v1014
        %v1093 = vpack.c.b16 %v1019, %v1017
        %v1094 = vpack.c.b16 %v1020, %v1018
        %v1095 = vpack.c.b16 %v1023, %v1021
        %v1096 = vpack.c.b16 %v1024, %v1022
        %v1097 = vpack.c.b16 %v1027, %v1025
        %v1098 = vpack.c.b16 %v1028, %v1026
        %v1099 = vpack.c.b16 %v1031, %v1029
        %v1100 = vpack.c.b16 %v1032, %v1030
        %v1101 = vpack.c.b16 %v1035, %v1033
        %v1102 = vpack.c.b16 %v1036, %v1034
        %v1103 = vpack.c.b16 %v1039, %v1037
        %v1104 = vpack.c.b16 %v1040, %v1038
        %1169 = vmatpush.bf16.msra.mxu0 %v1055
        %1170 = vmatpush.bf16.msra.mxu0 %v1053
        %1171 = vmatpush.bf16.msra.mxu0 %v1051
        %1172 = vmatpush.bf16.msra.mxu0 %v1049
        %1173 = vmatpush.bf16.msra.mxu0 %v1047
        %1174 = vmatpush.bf16.msra.mxu0 %v1045
        %1175 = vmatpush.bf16.msra.mxu0 %v1043
        %1176 = vmatpush.bf16.msra.mxu0 %v1041
        %1177 = vmatmul.bf16.gmra.mxu0 %v817
        %v1178 = vpop.f32.mrf.mxu0
        %v1179 = vadd.f32 0.0, %v1178
        %v1180 = vpop.f32.mrf.mxu0
        %v1181 = vadd.f32 0.0, %v1180
        %1182 = vmatmul.bf16.gmra.mxu0 %v821
        %v1183 = vpop.f32.mrf.mxu0
        %v1184 = vadd.f32 0.0, %v1183
        %v1185 = vpop.f32.mrf.mxu0
        %v1186 = vadd.f32 0.0, %v1185
        %1187 = vmatmul.bf16.gmra.mxu0 %v825
        %v1188 = vpop.f32.mrf.mxu0
        %v1189 = vadd.f32 0.0, %v1188
        %v1190 = vpop.f32.mrf.mxu0
        %v1191 = vadd.f32 0.0, %v1190
        %1192 = vmatmul.bf16.gmra.mxu0 %v829
        %v1193 = vpop.f32.mrf.mxu0
        %v1194 = vadd.f32 0.0, %v1193
        %v1195 = vpop.f32.mrf.mxu0
        %v1196 = vadd.f32 0.0, %v1195
        %1197 = vdwg.mxu0
        %1198 = vmatpush.bf16.msra.mxu0 %v1071
        %1199 = vmatpush.bf16.msra.mxu0 %v1069
        %1200 = vmatpush.bf16.msra.mxu0 %v1067
        %1201 = vmatpush.bf16.msra.mxu0 %v1065
        %1202 = vmatpush.bf16.msra.mxu0 %v1063
        %1203 = vmatpush.bf16.msra.mxu0 %v1061
        %1204 = vmatpush.bf16.msra.mxu0 %v1059
        %1205 = vmatpush.bf16.msra.mxu0 %v1057
        %1206 = vmatmul.bf16.gmra.mxu0 %v818
        %v1207 = vpop.f32.mrf.mxu0
        %v1208 = vadd.f32 %v1179, %v1207
        %v1209 = vpop.f32.mrf.mxu0
        %v1210 = vadd.f32 %v1181, %v1209
        %1211 = vmatmul.bf16.gmra.mxu0 %v822
        %v1212 = vpop.f32.mrf.mxu0
        %v1213 = vadd.f32 %v1184, %v1212
        %v1214 = vpop.f32.mrf.mxu0
        %v1215 = vadd.f32 %v1186, %v1214
        %1216 = vmatmul.bf16.gmra.mxu0 %v826
        %v1217 = vpop.f32.mrf.mxu0
        %v1218 = vadd.f32 %v1189, %v1217
        %v1219 = vpop.f32.mrf.mxu0
        %v1220 = vadd.f32 %v1191, %v1219
        %1221 = vmatmul.bf16.gmra.mxu0 %v830
        %v1222 = vpop.f32.mrf.mxu0
        %v1223 = vadd.f32 %v1194, %v1222
        %v1224 = vpop.f32.mrf.mxu0
        %v1225 = vadd.f32 %v1196, %v1224
        %1226 = vdwg.mxu0
        %1227 = vmatpush.bf16.msra.mxu0 %v1087
        %1228 = vmatpush.bf16.msra.mxu0 %v1085
        %1229 = vmatpush.bf16.msra.mxu0 %v1083
        %1230 = vmatpush.bf16.msra.mxu0 %v1081
        %1231 = vmatpush.bf16.msra.mxu0 %v1079
        %1232 = vmatpush.bf16.msra.mxu0 %v1077
        %1233 = vmatpush.bf16.msra.mxu0 %v1075
        %1234 = vmatpush.bf16.msra.mxu0 %v1073
        %1235 = vmatmul.bf16.gmra.mxu0 %v819
        %v1236 = vpop.f32.mrf.mxu0
        %v1237 = vadd.f32 %v1208, %v1236
        %v1238 = vpop.f32.mrf.mxu0
        %v1239 = vadd.f32 %v1210, %v1238
        %1240 = vmatmul.bf16.gmra.mxu0 %v823
        %v1241 = vpop.f32.mrf.mxu0
        %v1242 = vadd.f32 %v1213, %v1241
        %v1243 = vpop.f32.mrf.mxu0
        %v1244 = vadd.f32 %v1215, %v1243
        %1245 = vmatmul.bf16.gmra.mxu0 %v827
        %v1246 = vpop.f32.mrf.mxu0
        %v1247 = vadd.f32 %v1218, %v1246
        %v1248 = vpop.f32.mrf.mxu0
        %v1249 = vadd.f32 %v1220, %v1248
        %1250 = vmatmul.bf16.gmra.mxu0 %v831
        %v1251 = vpop.f32.mrf.mxu0
        %v1252 = vadd.f32 %v1223, %v1251
        %v1253 = vpop.f32.mrf.mxu0
        %v1254 = vadd.f32 %v1225, %v1253
        %1255 = vdwg.mxu0
        %1256 = vmatpush.bf16.msra.mxu0 %v1103
        %1257 = vmatpush.bf16.msra.mxu0 %v1101
        %1258 = vmatpush.bf16.msra.mxu0 %v1099
        %1259 = vmatpush.bf16.msra.mxu0 %v1097
        %1260 = vmatpush.bf16.msra.mxu0 %v1095
        %1261 = vmatpush.bf16.msra.mxu0 %v1093
        %1262 = vmatpush.bf16.msra.mxu0 %v1091
        %1263 = vmatpush.bf16.msra.mxu0 %v1089
        %1264 = vmatmul.bf16.gmra.mxu0 %v820
        %v1265 = vpop.f32.mrf.mxu0
        %v1266 = vadd.f32 %v1237, %v1265
        %v1267 = vpop.f32.mrf.mxu0
        %v1268 = vadd.f32 %v1239, %v1267
        %1269 = vmatmul.bf16.gmra.mxu0 %v824
        %v1270 = vpop.f32.mrf.mxu0
        %v1271 = vadd.f32 %v1242, %v1270
        %v1272 = vpop.f32.mrf.mxu0
        %v1273 = vadd.f32 %v1244, %v1272
        %1274 = vmatmul.bf16.gmra.mxu0 %v828
        %v1275 = vpop.f32.mrf.mxu0
        %v1276 = vadd.f32 %v1247, %v1275
        %v1277 = vpop.f32.mrf.mxu0
        %v1278 = vadd.f32 %v1249, %v1277
        %1279 = vmatmul.bf16.gmra.mxu0 %v832
        %v1280 = vpop.f32.mrf.mxu0
        %v1281 = vadd.f32 %v1252, %v1280
        %v1282 = vpop.f32.mrf.mxu0
        %v1283 = vadd.f32 %v1254, %v1282
        %1284 = vdwg.mxu0
        %1285 = vmatpush.bf16.msra.mxu0 %v1056
        %1286 = vmatpush.bf16.msra.mxu0 %v1054
        %1287 = vmatpush.bf16.msra.mxu0 %v1052
        %1288 = vmatpush.bf16.msra.mxu0 %v1050
        %1289 = vmatpush.bf16.msra.mxu0 %v1048
        %1290 = vmatpush.bf16.msra.mxu0 %v1046
        %1291 = vmatpush.bf16.msra.mxu0 %v1044
        %1292 = vmatpush.bf16.msra.mxu0 %v1042
        %1293 = vmatmul.bf16.gmra.mxu0 %v817
        %v1294 = vpop.f32.mrf.mxu0
        %v1295 = vadd.f32 0.0, %v1294
        %v1296 = vpop.f32.mrf.mxu0
        %v1297 = vadd.f32 0.0, %v1296
        %1298 = vmatmul.bf16.gmra.mxu0 %v821
        %v1299 = vpop.f32.mrf.mxu0
        %v1300 = vadd.f32 0.0, %v1299
        %v1301 = vpop.f32.mrf.mxu0
        %v1302 = vadd.f32 0.0, %v1301
        %1303 = vmatmul.bf16.gmra.mxu0 %v825
        %v1304 = vpop.f32.mrf.mxu0
        %v1305 = vadd.f32 0.0, %v1304
        %v1306 = vpop.f32.mrf.mxu0
        %v1307 = vadd.f32 0.0, %v1306
        %1308 = vmatmul.bf16.gmra.mxu0 %v829
        %v1309 = vpop.f32.mrf.mxu0
        %v1310 = vadd.f32 0.0, %v1309
        %v1311 = vpop.f32.mrf.mxu0
        %v1312 = vadd.f32 0.0, %v1311
        %1313 = vdwg.mxu0
        %1314 = vmatpush.bf16.msra.mxu0 %v1072
        %1315 = vmatpush.bf16.msra.mxu0 %v1070
        %1316 = vmatpush.bf16.msra.mxu0 %v1068
        %1317 = vmatpush.bf16.msra.mxu0 %v1066
        %1318 = vmatpush.bf16.msra.mxu0 %v1064
        %1319 = vmatpush.bf16.msra.mxu0 %v1062
        %1320 = vmatpush.bf16.msra.mxu0 %v1060
        %1321 = vmatpush.bf16.msra.mxu0 %v1058
        %1322 = vmatmul.bf16.gmra.mxu0 %v818
        %v1323 = vpop.f32.mrf.mxu0
        %v1324 = vadd.f32 %v1295, %v1323
        %v1325 = vpop.f32.mrf.mxu0
        %v1326 = vadd.f32 %v1297, %v1325
        %1327 = vmatmul.bf16.gmra.mxu0 %v822
        %v1328 = vpop.f32.mrf.mxu0
        %v1329 = vadd.f32 %v1300, %v1328
        %v1330 = vpop.f32.mrf.mxu0
        %v1331 = vadd.f32 %v1302, %v1330
        %1332 = vmatmul.bf16.gmra.mxu0 %v826
        %v1333 = vpop.f32.mrf.mxu0
        %v1334 = vadd.f32 %v1305, %v1333
        %v1335 = vpop.f32.mrf.mxu0
        %v1336 = vadd.f32 %v1307, %v1335
        %1337 = vmatmul.bf16.gmra.mxu0 %v830
        %v1338 = vpop.f32.mrf.mxu0
        %v1339 = vadd.f32 %v1310, %v1338
        %v1340 = vpop.f32.mrf.mxu0
        %v1341 = vadd.f32 %v1312, %v1340
        %1342 = vdwg.mxu0
        %1343 = vmatpush.bf16.msra.mxu0 %v1088
        %1344 = vmatpush.bf16.msra.mxu0 %v1086
        %1345 = vmatpush.bf16.msra.mxu0 %v1084
        %1346 = vmatpush.bf16.msra.mxu0 %v1082
        %1347 = vmatpush.bf16.msra.mxu0 %v1080
        %1348 = vmatpush.bf16.msra.mxu0 %v1078
        %1349 = vmatpush.bf16.msra.mxu0 %v1076
        %1350 = vmatpush.bf16.msra.mxu0 %v1074
        %1351 = vmatmul.bf16.gmra.mxu0 %v819
        %v1352 = vpop.f32.mrf.mxu0
        %v1353 = vadd.f32 %v1324, %v1352
        %v1354 = vpop.f32.mrf.mxu0
        %v1355 = vadd.f32 %v1326, %v1354
        %1356 = vmatmul.bf16.gmra.mxu0 %v823
        %v1357 = vpop.f32.mrf.mxu0
        %v1358 = vadd.f32 %v1329, %v1357
        %v1359 = vpop.f32.mrf.mxu0
        %v1360 = vadd.f32 %v1331, %v1359
        %1361 = vmatmul.bf16.gmra.mxu0 %v827
        %v1362 = vpop.f32.mrf.mxu0
        %v1363 = vadd.f32 %v1334, %v1362
        %v1364 = vpop.f32.mrf.mxu0
        %v1365 = vadd.f32 %v1336, %v1364
        %1366 = vmatmul.bf16.gmra.mxu0 %v831
        %v1367 = vpop.f32.mrf.mxu0
        %v1368 = vadd.f32 %v1339, %v1367
        %v1369 = vpop.f32.mrf.mxu0
        %v1370 = vadd.f32 %v1341, %v1369
        %1371 = vdwg.mxu0
        %1372 = vmatpush.bf16.msra.mxu0 %v1104
        %1373 = vmatpush.bf16.msra.mxu0 %v1102
        %1374 = vmatpush.bf16.msra.mxu0 %v1100
        %1375 = vmatpush.bf16.msra.mxu0 %v1098
        %1376 = vmatpush.bf16.msra.mxu0 %v1096
        %1377 = vmatpush.bf16.msra.mxu0 %v1094
        %1378 = vmatpush.bf16.msra.mxu0 %v1092
        %1379 = vmatpush.bf16.msra.mxu0 %v1090
        %1380 = vmatmul.bf16.gmra.mxu0 %v820
        %v1381 = vpop.f32.mrf.mxu0
        %v1382 = vadd.f32 %v1353, %v1381
        %v1383 = vpop.f32.mrf.mxu0
        %v1384 = vadd.f32 %v1355, %v1383
        %1385 = vmatmul.bf16.gmra.mxu0 %v824
        %v1386 = vpop.f32.mrf.mxu0
        %v1387 = vadd.f32 %v1358, %v1386
        %v1388 = vpop.f32.mrf.mxu0
        %v1389 = vadd.f32 %v1360, %v1388
        %1390 = vmatmul.bf16.gmra.mxu0 %v828
        %v1391 = vpop.f32.mrf.mxu0
        %v1392 = vadd.f32 %v1363, %v1391
        %v1393 = vpop.f32.mrf.mxu0
        %v1394 = vadd.f32 %v1365, %v1393
        %1395 = vmatmul.bf16.gmra.mxu0 %v832
        %v1396 = vpop.f32.mrf.mxu0
        %v1397 = vadd.f32 %v1368, %v1396
        %v1398 = vpop.f32.mrf.mxu0
        %v1399 = vadd.f32 %v1370, %v1398
        %1400 = vdwg.mxu0
        %v1401 = vmax.f32 %v1266, 0.0
        %v1402 = vmax.f32 %v1382, 0.0
        %v1403 = vmax.f32 %v1268, 0.0
        %v1404 = vmax.f32 %v1384, 0.0
        %v1405 = vmax.f32 %v1271, 0.0
        %v1406 = vmax.f32 %v1387, 0.0
        %v1407 = vmax.f32 %v1273, 0.0
        %v1408 = vmax.f32 %v1389, 0.0
        %v1409 = vmax.f32 %v1276, 0.0
        %v1410 = vmax.f32 %v1392, 0.0
        %v1411 = vmax.f32 %v1278, 0.0
        %v1412 = vmax.f32 %v1394, 0.0
        %v1413 = vmax.f32 %v1281, 0.0
        %v1414 = vmax.f32 %v1397, 0.0
        %v1415 = vmax.f32 %v1283, 0.0
        %v1416 = vmax.f32 %v1399, 0.0
        %v1417 = vadd.f32 %v673, %v1401
        %v1418 = vadd.f32 %v674, %v1402
        %v1419 = vadd.f32 %v675, %v1403
        %v1420 = vadd.f32 %v676, %v1404
        %v1421 = vadd.f32 %v677, %v1405
        %v1422 = vadd.f32 %v678, %v1406
        %v1423 = vadd.f32 %v679, %v1407
        %v1424 = vadd.f32 %v680, %v1408
        %v1425 = vadd.f32 %v681, %v1409
        %v1426 = vadd.f32 %v682, %v1410
        %v1427 = vadd.f32 %v683, %v1411
        %v1428 = vadd.f32 %v684, %v1412
        %v1429 = vadd.f32 %v685, %v1413
        %v1430 = vadd.f32 %v686, %v1414
        %v1431 = vadd.f32 %v687, %v1415
        %v1432 = vadd.f32 %v688, %v1416
        %s1433 = sshra.s32 %s303, 3
        %s1434 = sand.u32 %s303, 7
        %s1435 = smul.u32 %s1433, 2
        %s1436 = smul.addr %s1435, 8
        %s1437 = scalar_lea.vmem [#allocation2], %s1436
        %1438 = vst [vmem:[%s1437] sm:$0xff] %v1417
        %1439 = vst [vmem:[%s1437 + $0x8] sm:$0xff] %v1418
        %1440 = vst [vmem:[%s1437 + $0x10] sm:$0xff] %v1419
        %1441 = vst [vmem:[%s1437 + $0x18] sm:$0xff] %v1420
        %1442 = vst [vmem:[%s1437 + $0x20] sm:$0xff] %v1421
        %1443 = vst [vmem:[%s1437 + $0x28] sm:$0xff] %v1422
        %1444 = vst [vmem:[%s1437 + $0x30] sm:$0xff] %v1423
        %1445 = vst [vmem:[%s1437 + $0x38] sm:$0xff] %v1424
        %1446 = vst [vmem:[%s1437 + $0x40] sm:$0xff] %v1425
        %1447 = vst [vmem:[%s1437 + $0x48] sm:$0xff] %v1426
        %1448 = vst [vmem:[%s1437 + $0x50] sm:$0xff] %v1427
        %1449 = vst [vmem:[%s1437 + $0x58] sm:$0xff] %v1428
        %1450 = vst [vmem:[%s1437 + $0x60] sm:$0xff] %v1429
        %1451 = vst [vmem:[%s1437 + $0x68] sm:$0xff] %v1430
        %1452 = vst [vmem:[%s1437 + $0x70] sm:$0xff] %v1431
        %1453 = vst [vmem:[%s1437 + $0x78] sm:$0xff] %v1432
        %v1454 = vld [vmem:[#allocation3] sm:$0x3]
        %v1455 = vadd.f32 %v1417, %v1419
        %v1456 = vadd.f32 %v1455, %v1421
        %v1457 = vadd.f32 %v1456, %v1423
        %v1458 = vadd.f32 %v1457, %v1425
        %v1459 = vadd.f32 %v1458, %v1427
        %v1460 = vadd.f32 %v1459, %v1429
        %v1461 = vadd.f32 %v1460, %v1431
        %v1462 = vrot.slane %v1461, 4
        %v1463 = vadd.f32 %v1461, %v1462
        %v1464 = vrot.slane %v1463, 2
        %v1465 = vadd.f32 %v1463, %v1464
        %v1466 = vrot.slane %v1465, 1
        %v1467 = vadd.f32 %v1465, %v1466
        %v1468 = vadd.f32 %v1418, %v1420
        %v1469 = vadd.f32 %v1468, %v1422
        %v1470 = vadd.f32 %v1469, %v1424
        %v1471 = vadd.f32 %v1470, %v1426
        %v1472 = vadd.f32 %v1471, %v1428
        %v1473 = vadd.f32 %v1472, %v1430
        %v1474 = vadd.f32 %v1473, %v1432
        %v1475 = vrot.slane %v1474, 4
        %v1476 = vadd.f32 %v1474, %v1475
        %v1477 = vrot.slane %v1476, 2
        %v1478 = vadd.f32 %v1476, %v1477
        %v1479 = vrot.slane %v1478, 1
        %v1480 = vadd.f32 %v1478, %v1479
        %v1483 = vrot.slane %v1480, 7
        %vm1484 = vcmask 1040384
        %v1485 = vsel %vm1484, %v1467, %v1483
        %v1487 = vadd.f32 %v1454, %v1485
        %v1488 = vlaneseq
        %vm1489 = vcmp.ge.s32.totalorder %v1488, 0
        %vm1490 = vcmp.lt.s32.totalorder %v1488, 256
        %vm1491 = vmand %vm1489, %vm1490
        %1492 = vst.msk [vmem:[#allocation3] sm:$0x3] %vm1491, %v1487
        // Predicated region
        $region49: #{decoder_forward.4} parent=43 // pred_check
          %p1493 = pneg %p308
        $region50: #{decoder_forward.4} parent=43 // pred_check_branch
          %1495 = sbr.rel (%p1493) target = $region52
        $region51: #{decoder_forward.4} parent=43 // pred_region
          %v1496 = vld [vmem:[#allocation3] sm:$0x3]
          %v1497 = vmul.f32 %v1496, 0.015625
          %v1498 = vld [vmem:[%s4] sm:$0xff]
          %v1499 = vld [vmem:[%s4 + $0x8] sm:$0xff]
          %v1500 = vld [vmem:[%s4 + $0x10] sm:$0xff]
          %v1501 = vld [vmem:[%s4 + $0x18] sm:$0xff]
          %v1502 = vld [vmem:[%s4 + $0x20] sm:$0xff]
          %v1503 = vld [vmem:[%s4 + $0x28] sm:$0xff]
          %v1504 = vld [vmem:[%s4 + $0x30] sm:$0xff]
          %v1505 = vld [vmem:[%s4 + $0x38] sm:$0xff]
          %v1506 = vld [vmem:[%s4 + $0x40] sm:$0xff]
          %v1507 = vld [vmem:[%s4 + $0x48] sm:$0xff]
          %v1508 = vld [vmem:[%s4 + $0x50] sm:$0xff]
          %v1509 = vld [vmem:[%s4 + $0x58] sm:$0xff]
          %v1510 = vld [vmem:[%s4 + $0x60] sm:$0xff]
          %v1511 = vld [vmem:[%s4 + $0x68] sm:$0xff]
          %v1512 = vld [vmem:[%s4 + $0x70] sm:$0xff]
          %v1513 = vld [vmem:[%s4 + $0x78] sm:$0xff]
          %v1514 = vld [vmem:[%s4 + $0x80] sm:$0xff]
          %v1515 = vld [vmem:[%s4 + $0x88] sm:$0xff]
          %v1516 = vld [vmem:[%s4 + $0x90] sm:$0xff]
          %v1517 = vld [vmem:[%s4 + $0x98] sm:$0xff]
          %v1518 = vld [vmem:[%s4 + $0xa0] sm:$0xff]
          %v1519 = vld [vmem:[%s4 + $0xa8] sm:$0xff]
          %v1520 = vld [vmem:[%s4 + $0xb0] sm:$0xff]
          %v1521 = vld [vmem:[%s4 + $0xb8] sm:$0xff]
          %v1522 = vld [vmem:[%s4 + $0xc0] sm:$0xff]
          %v1523 = vld [vmem:[%s4 + $0xc8] sm:$0xff]
          %v1524 = vld [vmem:[%s4 + $0xd0] sm:$0xff]
          %v1525 = vld [vmem:[%s4 + $0xd8] sm:$0xff]
          %v1526 = vld [vmem:[%s4 + $0xe0] sm:$0xff]
          %v1527 = vld [vmem:[%s4 + $0xe8] sm:$0xff]
          %v1528 = vld [vmem:[%s4 + $0xf0] sm:$0xff]
          %v1529 = vld [vmem:[%s4 + $0xf8] sm:$0xff]
          %v1530 = vld [vmem:[%s4 + $0x100] sm:$0xff]
          %v1531 = vld [vmem:[%s4 + $0x108] sm:$0xff]
          %v1532 = vld [vmem:[%s4 + $0x110] sm:$0xff]
          %v1533 = vld [vmem:[%s4 + $0x118] sm:$0xff]
          %v1534 = vld [vmem:[%s4 + $0x120] sm:$0xff]
          %v1535 = vld [vmem:[%s4 + $0x128] sm:$0xff]
          %v1536 = vld [vmem:[%s4 + $0x130] sm:$0xff]
          %v1537 = vld [vmem:[%s4 + $0x138] sm:$0xff]
          %v1538 = vld [vmem:[%s4 + $0x140] sm:$0xff]
          %v1539 = vld [vmem:[%s4 + $0x148] sm:$0xff]
          %v1540 = vld [vmem:[%s4 + $0x150] sm:$0xff]
          %v1541 = vld [vmem:[%s4 + $0x158] sm:$0xff]
          %v1542 = vld [vmem:[%s4 + $0x160] sm:$0xff]
          %v1543 = vld [vmem:[%s4 + $0x168] sm:$0xff]
          %v1544 = vld [vmem:[%s4 + $0x170] sm:$0xff]
          %v1545 = vld [vmem:[%s4 + $0x178] sm:$0xff]
          %v1546 = vld [vmem:[%s4 + $0x180] sm:$0xff]
          %v1547 = vld [vmem:[%s4 + $0x188] sm:$0xff]
          %v1548 = vld [vmem:[%s4 + $0x190] sm:$0xff]
          %v1549 = vld [vmem:[%s4 + $0x198] sm:$0xff]
          %v1550 = vld [vmem:[%s4 + $0x1a0] sm:$0xff]
          %v1551 = vld [vmem:[%s4 + $0x1a8] sm:$0xff]
          %v1552 = vld [vmem:[%s4 + $0x1b0] sm:$0xff]
          %v1553 = vld [vmem:[%s4 + $0x1b8] sm:$0xff]
          %v1554 = vld [vmem:[%s4 + $0x1c0] sm:$0xff]
          %v1555 = vld [vmem:[%s4 + $0x1c8] sm:$0xff]
          %v1556 = vld [vmem:[%s4 + $0x1d0] sm:$0xff]
          %v1557 = vld [vmem:[%s4 + $0x1d8] sm:$0xff]
          %v1558 = vld [vmem:[%s4 + $0x1e0] sm:$0xff]
          %v1559 = vld [vmem:[%s4 + $0x1e8] sm:$0xff]
          %v1560 = vld [vmem:[%s4 + $0x1f0] sm:$0xff]
          %v1561 = vld [vmem:[%s4 + $0x1f8] sm:$0xff]
          %v1563 = vperm.slane %v1497, 0
          %v1564 = vperm.slane %v1497, 1
          %1567 = vmatpush.msra.mxu0 %v1528
          %1568 = vmatpush.msra.mxu0 %v1526
          %1569 = vmatpush.msra.mxu0 %v1524
          %1570 = vmatpush.msra.mxu0 %v1522
          %1571 = vmatpush.msra.mxu0 %v1520
          %1572 = vmatpush.msra.mxu0 %v1518
          %1573 = vmatpush.msra.mxu0 %v1516
          %1574 = vmatpush.msra.mxu0 %v1514
          %1575 = vmatpush.msra.mxu0 %v1512
          %1576 = vmatpush.msra.mxu0 %v1510
          %1577 = vmatpush.msra.mxu0 %v1508
          %1578 = vmatpush.msra.mxu0 %v1506
          %1579 = vmatpush.msra.mxu0 %v1504
          %1580 = vmatpush.msra.mxu0 %v1502
          %1581 = vmatpush.msra.mxu0 %v1500
          %1582 = vmatpush.msra.mxu0 %v1498
          %1583 = vmatmul.f32.gmra.mxu0 %v1563
          %v1584 = vpop.f32.mrf.mxu0
          %v1585 = vadd.f32 0.0, %v1584
          %1586 = vdwg.mxu0
          %1587 = vmatpush.msra.mxu0 %v1560
          %1588 = vmatpush.msra.mxu0 %v1558
          %1589 = vmatpush.msra.mxu0 %v1556
          %1590 = vmatpush.msra.mxu0 %v1554
          %1591 = vmatpush.msra.mxu0 %v1552
          %1592 = vmatpush.msra.mxu0 %v1550
          %1593 = vmatpush.msra.mxu0 %v1548
          %1594 = vmatpush.msra.mxu0 %v1546
          %1595 = vmatpush.msra.mxu0 %v1544
          %1596 = vmatpush.msra.mxu0 %v1542
          %1597 = vmatpush.msra.mxu0 %v1540
          %1598 = vmatpush.msra.mxu0 %v1538
          %1599 = vmatpush.msra.mxu0 %v1536
          %1600 = vmatpush.msra.mxu0 %v1534
          %1601 = vmatpush.msra.mxu0 %v1532
          %1602 = vmatpush.msra.mxu0 %v1530
          %1603 = vmatmul.f32.gmra.mxu0 %v1564
          %v1604 = vpop.f32.mrf.mxu0
          %v1605 = vadd.f32 %v1585, %v1604
          %1606 = vdwg.mxu0
          %1607 = vmatpush.msra.mxu0 %v1529
          %1608 = vmatpush.msra.mxu0 %v1527
          %1609 = vmatpush.msra.mxu0 %v1525
          %1610 = vmatpush.msra.mxu0 %v1523
          %1611 = vmatpush.msra.mxu0 %v1521
          %1612 = vmatpush.msra.mxu0 %v1519
          %1613 = vmatpush.msra.mxu0 %v1517
          %1614 = vmatpush.msra.mxu0 %v1515
          %1615 = vmatpush.msra.mxu0 %v1513
          %1616 = vmatpush.msra.mxu0 %v1511
          %1617 = vmatpush.msra.mxu0 %v1509
          %1618 = vmatpush.msra.mxu0 %v1507
          %1619 = vmatpush.msra.mxu0 %v1505
          %1620 = vmatpush.msra.mxu0 %v1503
          %1621 = vmatpush.msra.mxu0 %v1501
          %1622 = vmatpush.msra.mxu0 %v1499
          %1623 = vmatmul.f32.gmra.mxu0 %v1563
          %v1624 = vpop.f32.mrf.mxu0
          %v1625 = vadd.f32 0.0, %v1624
          %1626 = vdwg.mxu0
          %1627 = vmatpush.msra.mxu0 %v1561
          %1628 = vmatpush.msra.mxu0 %v1559
          %1629 = vmatpush.msra.mxu0 %v1557
          %1630 = vmatpush.msra.mxu0 %v1555
          %1631 = vmatpush.msra.mxu0 %v1553
          %1632 = vmatpush.msra.mxu0 %v1551
          %1633 = vmatpush.msra.mxu0 %v1549
          %1634 = vmatpush.msra.mxu0 %v1547
          %1635 = vmatpush.msra.mxu0 %v1545
          %1636 = vmatpush.msra.mxu0 %v1543
          %1637 = vmatpush.msra.mxu0 %v1541
          %1638 = vmatpush.msra.mxu0 %v1539
          %1639 = vmatpush.msra.mxu0 %v1537
          %1640 = vmatpush.msra.mxu0 %v1535
          %1641 = vmatpush.msra.mxu0 %v1533
          %1642 = vmatpush.msra.mxu0 %v1531
          %1643 = vmatmul.f32.gmra.mxu0 %v1564
          %v1644 = vpop.f32.mrf.mxu0
          %v1645 = vadd.f32 %v1625, %v1644
          %1646 = vdwg.mxu0
          %v1647 = vsub.f32 0.0, %v1605
          %v1648 = vsub.f32 0.0, %v1645
          %v1649 = vmul.f32 %v1647, 1.442695
          %v1650 = vpow.pop %v1649
          %v1651 = vmul.f32 %v1648, 1.442695
          %v1652 = vpow.pop %v1651
          %v1653 = vadd.f32 %v1650, 1.0
          %v1654 = vadd.f32 %v1652, 1.0
          %v1655 = vrcp.pop %v1653
          %v1656 = vmul.f32 %v1653, %v1655
          %v1657 = vsub.f32 1.0, %v1656
          %v1658 = vmul.f32 %v1655, %v1657
          %v1659 = vadd.f32 %v1655, %v1658
          %vm1660 = vweird.f32 %v1653
          %vm1661 = vweird.f32 %v1655
          %vm1662 = vmor %vm1660, %vm1661
          %v1663 = vsel %vm1662, %v1655, %v1659
          %v1664 = vand.u32 2147483647, %v1653
          %vm1665 = vcmp.eq.f32.partialorder %v1664, 8.507059e+37
          %v1666 = vand.u32 %v1653, 2147483648
          %v1667 = vor.u32 1.1754944e-38, %v1666
          %v1668 = vsel %vm1665, %v1667, %v1663
          %v1669 = vmul.f32 1.0, %v1668
          %v1670 = vrcp.pop %v1654
          %v1671 = vmul.f32 %v1654, %v1670
          %v1672 = vsub.f32 1.0, %v1671
          %v1673 = vmul.f32 %v1670, %v1672
          %v1674 = vadd.f32 %v1670, %v1673
          %vm1675 = vweird.f32 %v1654
          %vm1676 = vweird.f32 %v1670
          %vm1677 = vmor %vm1675, %vm1676
          %v1678 = vsel %vm1677, %v1670, %v1674
          %v1679 = vand.u32 2147483647, %v1654
          %vm1680 = vcmp.eq.f32.partialorder %v1679, 8.507059e+37
          %v1681 = vand.u32 %v1654, 2147483648
          %v1682 = vor.u32 1.1754944e-38, %v1681
          %v1683 = vsel %vm1680, %v1682, %v1678
          %v1684 = vmul.f32 1.0, %v1683
          %v1687 = vrot.slane %v1684, 7
          %v1688 = vsel %vm1484, %v1669, %v1687
          %1690 = vst.msk [vmem:[#allocation4] sm:$0x3] %vm1491, %v1688
        $region52: #{decoder_forward.4} parent=43 // pred_fallthru
          _
      $region44: #{decoder_forward.4} parent=39 // pred_fallthru
        _
      %p1691 = scmp.eq.s32.totalorder %s20, 1
      // Predicated region
      $region53: #{decoder_forward.4} parent=39 // pred_check
        %p1692 = pneg %p1691
      $region54: #{decoder_forward.4} parent=39 // pred_check_branch
        %1694 = sbr.rel (%p1692) target = $region56
      $region55: #{decoder_forward.4} parent=39 // pred_region
        %s1695 = sshra.s32 %s303, 3
        %s1696 = sand.u32 %s303, 7
        %s1697 = smul.u32 %s1695, 2
        %s1698 = smul.addr %s1697, 8
        %s1699 = scalar_lea.vmem [#allocation2], %s1698
        %v1700 = vld [vmem:[%s1699] sm:$0xff]
        %v1701 = vld [vmem:[%s1699 + $0x8] sm:$0xff]
        %v1702 = vld [vmem:[%s1699 + $0x10] sm:$0xff]
        %v1703 = vld [vmem:[%s1699 + $0x18] sm:$0xff]
        %v1704 = vld [vmem:[%s1699 + $0x20] sm:$0xff]
        %v1705 = vld [vmem:[%s1699 + $0x28] sm:$0xff]
        %v1706 = vld [vmem:[%s1699 + $0x30] sm:$0xff]
        %v1707 = vld [vmem:[%s1699 + $0x38] sm:$0xff]
        %v1708 = vld [vmem:[%s1699 + $0x40] sm:$0xff]
        %v1709 = vld [vmem:[%s1699 + $0x48] sm:$0xff]
        %v1710 = vld [vmem:[%s1699 + $0x50] sm:$0xff]
        %v1711 = vld [vmem:[%s1699 + $0x58] sm:$0xff]
        %v1712 = vld [vmem:[%s1699 + $0x60] sm:$0xff]
        %v1713 = vld [vmem:[%s1699 + $0x68] sm:$0xff]
        %v1714 = vld [vmem:[%s1699 + $0x70] sm:$0xff]
        %v1715 = vld [vmem:[%s1699 + $0x78] sm:$0xff]
        %v1716 = vld [vmem:[#allocation4] sm:$0x3]
        %v1718 = vperm.slane %v1716, 0
        %v1719 = vperm.slane %v1716, 1
        %v1722 = vmul.f32 %v1700, %v1718
        %v1723 = vmul.f32 %v1701, %v1719
        %v1724 = vmul.f32 %v1702, %v1718
        %v1725 = vmul.f32 %v1703, %v1719
        %v1726 = vmul.f32 %v1704, %v1718
        %v1727 = vmul.f32 %v1705, %v1719
        %v1728 = vmul.f32 %v1706, %v1718
        %v1729 = vmul.f32 %v1707, %v1719
        %v1730 = vmul.f32 %v1708, %v1718
        %v1731 = vmul.f32 %v1709, %v1719
        %v1732 = vmul.f32 %v1710, %v1718
        %v1733 = vmul.f32 %v1711, %v1719
        %v1734 = vmul.f32 %v1712, %v1718
        %v1735 = vmul.f32 %v1713, %v1719
        %v1736 = vmul.f32 %v1714, %v1718
        %v1737 = vmul.f32 %v1715, %v1719
        %v1738 = vadd.f32 %v1722, %v1700
        %v1739 = vadd.f32 %v1723, %v1701
        %v1740 = vadd.f32 %v1724, %v1702
        %v1741 = vadd.f32 %v1725, %v1703
        %v1742 = vadd.f32 %v1726, %v1704
        %v1743 = vadd.f32 %v1727, %v1705
        %v1744 = vadd.f32 %v1728, %v1706
        %v1745 = vadd.f32 %v1729, %v1707
        %v1746 = vadd.f32 %v1730, %v1708
        %v1747 = vadd.f32 %v1731, %v1709
        %v1748 = vadd.f32 %v1732, %v1710
        %v1749 = vadd.f32 %v1733, %v1711
        %v1750 = vadd.f32 %v1734, %v1712
        %v1751 = vadd.f32 %v1735, %v1713
        %v1752 = vadd.f32 %v1736, %v1714
        %v1753 = vadd.f32 %v1737, %v1715
        %1754 = vst [vmem:[%s300] sm:$0xff] %v1738
        %1755 = vst [vmem:[%s300 + $0x8] sm:$0xff] %v1739
        %1756 = vst [vmem:[%s300 + $0x10] sm:$0xff] %v1740
        %1757 = vst [vmem:[%s300 + $0x18] sm:$0xff] %v1741
        %1758 = vst [vmem:[%s300 + $0x20] sm:$0xff] %v1742
        %1759 = vst [vmem:[%s300 + $0x28] sm:$0xff] %v1743
        %1760 = vst [vmem:[%s300 + $0x30] sm:$0xff] %v1744
        %1761 = vst [vmem:[%s300 + $0x38] sm:$0xff] %v1745
        %1762 = vst [vmem:[%s300 + $0x40] sm:$0xff] %v1746
        %1763 = vst [vmem:[%s300 + $0x48] sm:$0xff] %v1747
        %1764 = vst [vmem:[%s300 + $0x50] sm:$0xff] %v1748
        %1765 = vst [vmem:[%s300 + $0x58] sm:$0xff] %v1749
        %1766 = vst [vmem:[%s300 + $0x60] sm:$0xff] %v1750
        %1767 = vst [vmem:[%s300 + $0x68] sm:$0xff] %v1751
        %1768 = vst [vmem:[%s300 + $0x70] sm:$0xff] %v1752
        %1769 = vst [vmem:[%s300 + $0x78] sm:$0xff] %v1753
      $region56: #{decoder_forward.4} parent=39 // pred_fallthru
        _
      %s1770 = smul.u32 %s21, %s20
      %s1771 = smul.u32 8, %s1770
      %p1772 = scmp.lt.s32.totalorder %s1771, 7
      %s1773 = scalar_select %p1772, %s1771, 7
      %s1774 = smul.addr %s1773, 2
      %s1775 = smul.addr %s1774, 8
      %s1776 = scalar_lea.vmem %s5, %s1775
      // Predicated region
      $region57: #{decoder_forward.4} parent=39 // pred_check
        %p1777 = pneg %p171
      $region58: #{decoder_forward.4} parent=39 // pred_check_branch
        %1779 = sbr.rel (%p1777) target = $region60
      $region59: #{decoder_forward.4} parent=39 // pred_region
        %s1780 = smul.u32 %s21, %s20
        %s1781 = smul.u32 8, %s1780
      $region60: #{decoder_forward.4} parent=39 // pred_fallthru
        _
    $region40: #{decoder_forward.4} parent=5 // pred_fallthru
      _
    %p1782 = scmp.le.s32.totalorder 2, %s11
    // Predicated region
    $region61: #{decoder_forward.4} parent=5 // pred_check
      %p1783 = pneg %p1782
    $region62: #{decoder_forward.4} parent=5 // pred_check_branch
      %1785 = sbr.rel (%p1783) target = $region64
    $region63: #{decoder_forward.4} parent=5 // pred_region
      %s1786 = ssub.s32 %s11, 2
      // Predicated region
      $region65: #{decoder_forward.4} parent=63 // pred_check
        %p1787 = pneg %p177
      $region66: #{decoder_forward.4} parent=63 // pred_check_branch
        %1789 = sbr.rel (%p1787) target = $region68
      $region67: #{decoder_forward.4} parent=63 // pred_region
        %s1790 = smul.u32 %s23, %s22
        %s1791 = smul.u32 8, %s1790
        %p1792 = scmp.lt.s32.totalorder %s1791, 7
        %s1793 = scalar_select %p1792, %s1791, 7
        %s1794 = smul.addr %s1793, 2
        %s1795 = smul.addr %s1794, 8
        %s1796 = scalar_lea.vmem %s5, %s1795
      $region68: #{decoder_forward.4} parent=63 // pred_fallthru
        _
    $region64: #{decoder_forward.4} parent=5 // pred_fallthru
      _
  $region6: #{decoder_forward.4} parent=0 // loop_footer
    %s15 = sadd.s32 1, %s11
  $region7: #{decoder_forward.4} parent=0 // loop_footer_branch
    %10 = sbr.rel target = $region3
  $region8: #{decoder_forward.4} parent=0 // loop_exit
    _

// kernel: decoder_forward.3
$region0: #{decoder_forward.3}
  #allocation0 [shape = 'u32[]', space=smem, size = 0x4, offset = 0x4, fixed_abs, tag = 'smem constant byte address 0x4 - core index']
  #allocation1 [shape = 'u32[72,128]{1,0:T(1,128)}', space=vmem, size = 0x9000, scoped, tag = 'internal scratch']
  #allocation2 [shape = 'f32[16,256]{1,0:T(8,128)}', space=vmem, size = 0x4000, scoped, tag = 'scratch operand']
  #allocation3 [shape = 'f32[1,256]{1,0:T(1,128)}', space=vmem, size = 0x400, scoped, tag = 'scratch operand']
  #allocation4 [shape = 'f32[1,256]{1,0:T(1,128)}', space=vmem, size = 0x400, scoped, tag = 'scratch operand']
  %s0 = inlined_call_operand.vmem [shape: bf16[16,256], index: 0, kind: input, shape index: {}]
  %s1 = inlined_call_operand.vmem [shape: bf16[16,1024], index: 1, kind: input, shape index: {}]
  %s2 = inlined_call_operand.vmem [shape: bf16[256,256], index: 2, kind: input, shape index: {}]
  %s3 = inlined_call_operand.hbm [shape: bf16[1024,256], index: 3, kind: input, shape index: {}]
  %s4 = inlined_call_operand.hbm [shape: f32[256,256], index: 4, kind: input, shape index: {}]
  %s5 = inlined_call_operand.vmem [shape: f32[16,256], index: 5, kind: output, shape index: {}]
  %s6 = sld [smem:[#allocation0]]
  $region77: #{decoder_forward.3} parent=0
    _
  %s8 = ssub.s32 1, %s6
  %s9 = scalar_select 0, %s8, %s6
  $region1: #{decoder_forward.3} parent=0
    #allocation5 [shape = 'u8[524288]{0}', space=vmem, size = 0x80000, scoped, tag = 'input window, operand 3, single buffered']
    #allocation6 [shape = 's32[2]{0}', space=sflag, size = 0x8, scoped, tag = 'scoped memory for decoder_forward.3']
    #allocation7 [shape = 'u8[262144]{0}', space=vmem, size = 0x40000, scoped, tag = 'input window, operand 4, single buffered']
    #allocation8 [shape = 's32[1]{0}', space=sflag, size = 0x4, scoped, tag = 'scoped memory for decoder_forward.3']
    %10 = vsyncpa [#allocation6], 0
    %11 = vsyncpa [#allocation8], 0
    loop: start=0, step=1, limit=4
    $region2: #{decoder_forward.3} parent=1 // loop_pre_header
      _
    $region3: #{decoder_forward.3} parent=1 // loop_header
      %s13 = sphi 0, %s17
      %p14 = scmp.ge.s32.totalorder %s13, 4
      %s20 = sphi 0, %s32
      %s21 = sphi 0, %s28
      %s22 = sphi 0, %s20
      %s23 = sphi 0, %s21
      %s24 = sphi 0, %s22
      %s25 = sphi 0, %s23
      %s39 = sphi 0, %s41
      %s42 = sphi 0, %s39
      %s43 = sphi 0, %s42
      %s59 = sphi 0, %s43
      %s69 = sphi 0, %s71
      %s72 = sphi 0, %s69
      %s73 = sphi 0, %s72
      %s89 = sphi 0, %s73
      %s93 = sphi 0, %s93
      %s95 = sphi 0, %s93
      %s96 = sphi 0, %s95
      %s110 = sphi 0, %s96
      %s114 = sphi 0, %s114
      %s116 = sphi 0, %s114
      %s117 = sphi 0, %s116
      %s131 = sphi 0, %s117
      %s135 = sphi 0, %s135
      %s137 = sphi 0, %s135
      %s138 = sphi 0, %s137
      %s152 = sphi 0, %s138
      %s160 = sphi 0, %s162
      %s163 = sphi 0, %s160
      %s164 = sphi 0, %s163
      %s180 = sphi 0, %s164
    $region4: #{decoder_forward.3} parent=1 // loop_header_branch
      %16 = sbr.rel (%p14) target = $region8
    $region5: #{decoder_forward.3} parent=1 // loop_body
      %s18 = ssub.s32 %s13, 1
      %s19 = ssub.s32 %s13, 2
      %s26 = sadd.s32 1, %s21
      %p27 = scmp.ge.s32.totalorder %s26, 1
      %s28 = scalar_select %p27, 0, %s26
      %s29 = sadd.s32 1, %s20
      %s30 = scalar_select %p27, %s29, %s20
      %p31 = scmp.ge.s32.totalorder %s30, 2
      %s32 = scalar_select %p31, 0, %s30
      %s33 = ssub.s32 1, %s20
      %s34 = smul.u32 %s21, %s33
      %s35 = ssub.s32 1, %s32
      %s36 = smul.u32 %s28, %s35
      %s37 = ssub.s32 %s34, %s36
      %p38 = scmp.eq.s32.totalorder %s37, 0
      %s40 = sadd.s32 %s39, 1
      %s41 = scalar_select %p38, %s39, %s40
      %p44 = pneg %p38
      %p45 = scmp.eq.s32.totalorder %s13, 1
      %p46 = por %p44, %p45
      %p47 = scmp.ne.s32.totalorder %s39, %s42
      %p48 = scmp.eq.s32.totalorder %s13, 0
      %p49 = por %p47, %p48
      %p50 = scmp.ne.s32.totalorder %s39, %s42
      %p51 = scmp.eq.s32.totalorder %s18, 1
      %p52 = por %p50, %p51
      %p53 = scmp.ne.s32.totalorder %s42, %s43
      %p54 = scmp.eq.s32.totalorder %s18, 0
      %p55 = por %p53, %p54
      %p56 = scmp.ne.s32.totalorder %s42, %s43
      %p57 = scmp.eq.s32.totalorder %s19, 1
      %p58 = por %p56, %p57
      %p60 = scmp.ne.s32.totalorder %s43, %s59
      %p61 = scmp.eq.s32.totalorder %s19, 0
      %p62 = por %p60, %p61
      %s63 = ssub.s32 1, %s20
      %s64 = smul.u32 %s21, %s63
      %s65 = ssub.s32 1, %s32
      %s66 = smul.u32 %s28, %s65
      %s67 = ssub.s32 %s64, %s66
      %p68 = scmp.eq.s32.totalorder %s67, 0
      %s70 = sadd.s32 %s69, 1
      %s71 = scalar_select %p68, %s69, %s70
      %p74 = pneg %p68
      %p75 = scmp.eq.s32.totalorder %s13, 1
      %p76 = por %p74, %p75
      %p77 = scmp.ne.s32.totalorder %s69, %s72
      %p78 = scmp.eq.s32.totalorder %s13, 0
      %p79 = por %p77, %p78
      %p80 = scmp.ne.s32.totalorder %s69, %s72
      %p81 = scmp.eq.s32.totalorder %s18, 1
      %p82 = por %p80, %p81
      %p83 = scmp.ne.s32.totalorder %s72, %s73
      %p84 = scmp.eq.s32.totalorder %s18, 0
      %p85 = por %p83, %p84
      %p86 = scmp.ne.s32.totalorder %s72, %s73
      %p87 = scmp.eq.s32.totalorder %s19, 1
      %p88 = por %p86, %p87
      %p90 = scmp.ne.s32.totalorder %s73, %s89
      %p91 = scmp.eq.s32.totalorder %s19, 0
      %p92 = por %p90, %p91
      %s94 = sadd.s32 %s93, 1
      %p97 = scmp.eq.s32.totalorder %s13, 1
      %p98 = scmp.ne.s32.totalorder %s93, %s95
      %p99 = scmp.eq.s32.totalorder %s13, 0
      %p100 = por %p98, %p99
      %p101 = scmp.ne.s32.totalorder %s93, %s95
      %p102 = scmp.eq.s32.totalorder %s18, 1
      %p103 = por %p101, %p102
      %p104 = scmp.ne.s32.totalorder %s95, %s96
      %p105 = scmp.eq.s32.totalorder %s18, 0
      %p106 = por %p104, %p105
      %p107 = scmp.ne.s32.totalorder %s95, %s96
      %p108 = scmp.eq.s32.totalorder %s19, 1
      %p109 = por %p107, %p108
      %p111 = scmp.ne.s32.totalorder %s96, %s110
      %p112 = scmp.eq.s32.totalorder %s19, 0
      %p113 = por %p111, %p112
      %s115 = sadd.s32 %s114, 1
      %p118 = scmp.eq.s32.totalorder %s13, 1
      %p119 = scmp.ne.s32.totalorder %s114, %s116
      %p120 = scmp.eq.s32.totalorder %s13, 0
      %p121 = por %p119, %p120
      %p122 = scmp.ne.s32.totalorder %s114, %s116
      %p123 = scmp.eq.s32.totalorder %s18, 1
      %p124 = por %p122, %p123
      %p125 = scmp.ne.s32.totalorder %s116, %s117
      %p126 = scmp.eq.s32.totalorder %s18, 0
      %p127 = por %p125, %p126
      %p128 = scmp.ne.s32.totalorder %s116, %s117
      %p129 = scmp.eq.s32.totalorder %s19, 1
      %p130 = por %p128, %p129
      %p132 = scmp.ne.s32.totalorder %s117, %s131
      %p133 = scmp.eq.s32.totalorder %s19, 0
      %p134 = por %p132, %p133
      %s136 = sadd.s32 %s135, 1
      %p139 = scmp.eq.s32.totalorder %s13, 1
      %p140 = scmp.ne.s32.totalorder %s135, %s137
      %p141 = scmp.eq.s32.totalorder %s13, 0
      %p142 = por %p140, %p141
      %p143 = scmp.ne.s32.totalorder %s135, %s137
      %p144 = scmp.eq.s32.totalorder %s18, 1
      %p145 = por %p143, %p144
      %p146 = scmp.ne.s32.totalorder %s137, %s138
      %p147 = scmp.eq.s32.totalorder %s18, 0
      %p148 = por %p146, %p147
      %p149 = scmp.ne.s32.totalorder %s137, %s138
      %p150 = scmp.eq.s32.totalorder %s19, 1
      %p151 = por %p149, %p150
      %p153 = scmp.ne.s32.totalorder %s138, %s152
      %p154 = scmp.eq.s32.totalorder %s19, 0
      %p155 = por %p153, %p154
      %s156 = smul.u32 %s21, %s20
      %s157 = smul.u32 %s28, %s32
      %s158 = ssub.s32 %s156, %s157
      %p159 = scmp.eq.s32.totalorder %s158, 0
      %s161 = sadd.s32 %s160, 1
      %s162 = scalar_select %p159, %s160, %s161
      %p165 = pneg %p159
      %p166 = scmp.eq.s32.totalorder %s13, 1
      %p167 = por %p165, %p166
      %p168 = scmp.ne.s32.totalorder %s160, %s163
      %p169 = scmp.eq.s32.totalorder %s13, 0
      %p170 = por %p168, %p169
      %p171 = scmp.ne.s32.totalorder %s160, %s163
      %p172 = scmp.eq.s32.totalorder %s18, 1
      %p173 = por %p171, %p172
      %p174 = scmp.ne.s32.totalorder %s163, %s164
      %p175 = scmp.eq.s32.totalorder %s18, 0
      %p176 = por %p174, %p175
      %p177 = scmp.ne.s32.totalorder %s163, %s164
      %p178 = scmp.eq.s32.totalorder %s19, 1
      %p179 = por %p177, %p178
      %p181 = scmp.ne.s32.totalorder %s164, %s180
      %p182 = scmp.eq.s32.totalorder %s19, 0
      %p183 = por %p181, %p182
      %p184 = scmp.le.s32.totalorder 1, %s13
      %p185 = scmp.lt.s32.totalorder %s13, 3
      %p186 = pnand %p184, %p185
      %p187 = pneg %p186
      // Predicated region
      $region9: #{decoder_forward.3} parent=5 // pred_check
        _
      $region10: #{decoder_forward.3} parent=5 // pred_check_branch
        %189 = sbr.rel (%p186) target = $region12
      $region11: #{decoder_forward.3} parent=5 // pred_region
        %s190 = ssub.s32 %s13, 1
        // Predicated region
        $region13: #{decoder_forward.3} parent=11 // pred_check
          %p191 = pneg %p106
        $region14: #{decoder_forward.3} parent=11 // pred_check_branch
          %193 = sbr.rel (%p191) target = $region16
        $region15: #{decoder_forward.3} parent=11 // pred_region
          _
        $region16: #{decoder_forward.3} parent=11 // pred_fallthru
          _
        // Predicated region
        $region17: #{decoder_forward.3} parent=11 // pred_check
          %p194 = pneg %p127
        $region18: #{decoder_forward.3} parent=11 // pred_check_branch
          %196 = sbr.rel (%p194) target = $region20
        $region19: #{decoder_forward.3} parent=11 // pred_region
          %198 = vsyncadd [#allocation6], 0
          %s199 = sshll.u32 %s3, 4
          %s200 = int_to_ptr.hbm [resolvable:$true] %s199
          %s201 = sshll.u32 [#allocation5], 4
          %s202 = int_to_ptr.vmem [resolvable:$true] %s201
          %207 = dma.hbm_to_vmem [thread:$0]  %s200, 16384, %s202, [#allocation6], 128, 128, 8
        $region20: #{decoder_forward.3} parent=11 // pred_fallthru
          _
        // Predicated region
        $region21: #{decoder_forward.3} parent=11 // pred_check
          %p208 = pneg %p148
        $region22: #{decoder_forward.3} parent=11 // pred_check_branch
          %210 = sbr.rel (%p208) target = $region24
        $region23: #{decoder_forward.3} parent=11 // pred_region
          %212 = vsyncadd [#allocation8], 0
          %s213 = sshll.u32 %s4, 4
          %s214 = int_to_ptr.hbm [resolvable:$true] %s213
          %s215 = sshll.u32 [#allocation7], 4
          %s216 = int_to_ptr.vmem [resolvable:$true] %s215
          %221 = dma.hbm_to_vmem [thread:$0]  %s214, 8192, %s216, [#allocation8], 256, 256, 16
        $region24: #{decoder_forward.3} parent=11 // pred_fallthru
          _
      $region12: #{decoder_forward.3} parent=5 // pred_fallthru
        _
      %p222 = scmp.lt.s32.totalorder %s13, 2
      // Predicated region
      $region25: #{decoder_forward.3} parent=5 // pred_check
        %p223 = pneg %p222
      $region26: #{decoder_forward.3} parent=5 // pred_check_branch
        %225 = sbr.rel (%p223) target = $region28
      $region27: #{decoder_forward.3} parent=5 // pred_region
        // Predicated region
        $region29: #{decoder_forward.3} parent=27 // pred_check
          %p226 = pneg %p49
        $region30: #{decoder_forward.3} parent=27 // pred_check_branch
          %228 = sbr.rel (%p226) target = $region32
        $region31: #{decoder_forward.3} parent=27 // pred_region
          %s229 = ssub.s32 1, %s20
          %s230 = smul.u32 %s21, %s229
          %s231 = smul.u32 2, %s230
          %p232 = scmp.lt.s32.totalorder %s231, 1
          %s233 = scalar_select %p232, %s231, 1
          %s234 = smul.addr %s233, 2
          %s235 = smul.addr %s234, 4
          %s236 = scalar_lea.vmem %s0, %s235
          %s237 = ssub.s32 1, %s20
          %s238 = smul.u32 %s21, %s237
          %s239 = smul.u32 2, %s238
        $region32: #{decoder_forward.3} parent=27 // pred_fallthru
          _
        // Predicated region
        $region33: #{decoder_forward.3} parent=27 // pred_check
          %p240 = pneg %p79
        $region34: #{decoder_forward.3} parent=27 // pred_check_branch
          %242 = sbr.rel (%p240) target = $region36
        $region35: #{decoder_forward.3} parent=27 // pred_region
          %s243 = ssub.s32 1, %s20
          %s244 = smul.u32 %s21, %s243
          %s245 = smul.u32 2, %s244
          %p246 = scmp.lt.s32.totalorder %s245, 1
          %s247 = scalar_select %p246, %s245, 1
          %s248 = smul.addr %s247, 8
          %s249 = smul.addr %s248, 4
          %s250 = scalar_lea.vmem %s1, %s249
          %s251 = ssub.s32 1, %s20
          %s252 = smul.u32 %s21, %s251
          %s253 = smul.u32 2, %s252
        $region36: #{decoder_forward.3} parent=27 // pred_fallthru
          _
      $region28: #{decoder_forward.3} parent=5 // pred_fallthru
        _
      %p254 = scmp.le.s32.totalorder 1, %s13
      %p255 = scmp.lt.s32.totalorder %s13, 3
      %p256 = pnand %p254, %p255
      %p257 = pneg %p256
      // Predicated region
      $region37: #{decoder_forward.3} parent=5 // pred_check
        _
      $region38: #{decoder_forward.3} parent=5 // pred_check_branch
        %259 = sbr.rel (%p256) target = $region40
      $region39: #{decoder_forward.3} parent=5 // pred_region
        %s260 = ssub.s32 %s13, 1
        // Predicated region
        $region41: #{decoder_forward.3} parent=39 // pred_check
          %p261 = pneg %p127
        $region42: #{decoder_forward.3} parent=39 // pred_check_branch
          %263 = sbr.rel (%p261) target = $region44
        $region43: #{decoder_forward.3} parent=39 // pred_region
          %265 = dma.done [#allocation6], 16384
        $region44: #{decoder_forward.3} parent=39 // pred_fallthru
          _
        // Predicated region
        $region45: #{decoder_forward.3} parent=39 // pred_check
          %p266 = pneg %p148
        $region46: #{decoder_forward.3} parent=39 // pred_check_branch
          %268 = sbr.rel (%p266) target = $region48
        $region47: #{decoder_forward.3} parent=39 // pred_region
          %270 = dma.done [#allocation8], 8192
        $region48: #{decoder_forward.3} parent=39 // pred_fallthru
          _
        %s271 = ssub.s32 1, %s22
        %s272 = smul.u32 %s23, %s271
        %s273 = smul.u32 2, %s272
        %p274 = scmp.lt.s32.totalorder %s273, 1
        %s275 = scalar_select %p274, %s273, 1
        %s276 = smul.addr %s275, 2
        %s277 = smul.addr %s276, 4
        %s278 = scalar_lea.vmem %s0, %s277
        %p279 = pneg %p55
        %p280 = pneg %p52
        %s281 = ssub.s32 1, %s22
        %s282 = smul.u32 %s23, %s281
        %s283 = smul.u32 2, %s282
        %p284 = scmp.lt.s32.totalorder %s283, 1
        %s285 = scalar_select %p284, %s283, 1
        %s286 = smul.addr %s285, 8
        %s287 = smul.addr %s286, 4
        %s288 = scalar_lea.vmem %s1, %s287
        %p289 = pneg %p85
        %p290 = pneg %p82
        %p291 = pneg %p106
        %p292 = pneg %p103
        %p293 = pneg %p127
        %p294 = pneg %p124
        %p295 = pneg %p148
        %p296 = pneg %p145
        %p297 = pneg %p176
        %p298 = pneg %p173
        %s299 = smul.u32 %s23, %s22
        %s300 = smul.u32 2, %s299
        %p301 = scmp.lt.s32.totalorder %s300, 1
        %s302 = scalar_select %p301, %s300, 1
        %s303 = smul.addr %s302, 2
        %s304 = smul.addr %s303, 8
        %s305 = scalar_lea.vmem %s5, %s304
        %s306 = ssub.s32 1, %s22
        %s307 = smul.u32 %s23, %s306
        %s308 = smul.u32 2, %s307
        %p309 = scmp.lt.s32.totalorder %s308, 1
        %s310 = scalar_select %p309, %s308, 1
        %s311 = smul.addr %s310, 2
        %s312 = smul.addr %s311, 4
        %s313 = scalar_lea.vmem %s0, %s312
        %s314 = ssub.s32 1, %s22
        %s315 = smul.u32 %s23, %s314
        %s316 = smul.u32 2, %s315
        %s317 = ssub.s32 1, %s22
        %s318 = smul.u32 %s23, %s317
        %s319 = smul.u32 2, %s318
        %p320 = scmp.lt.s32.totalorder %s319, 1
        %s321 = scalar_select %p320, %s319, 1
        %s322 = smul.addr %s321, 8
        %s323 = smul.addr %s322, 4
        %s324 = scalar_lea.vmem %s1, %s323
        %s325 = ssub.s32 1, %s22
        %s326 = smul.u32 %s23, %s325
        %s327 = smul.u32 2, %s326
        %s328 = smul.u32 %s23, %s22
        %s329 = smul.u32 2, %s328
        %p330 = scmp.lt.s32.totalorder %s329, 1
        %s331 = scalar_select %p330, %s329, 1
        %s332 = smul.addr %s331, 2
        %s333 = smul.addr %s332, 8
        %s334 = scalar_lea.vmem %s5, %s333
        %s335 = smul.u32 %s23, %s22
        %s336 = smul.u32 2, %s335
        %s337 = smul.u32 %s23, 16
        %p338 = scmp.eq.s32.totalorder %s22, 0
        // Predicated region
        $region49: #{decoder_forward.3} parent=39 // pred_check
          %p339 = pneg %p338
        $region50: #{decoder_forward.3} parent=39 // pred_check_branch
          %341 = sbr.rel (%p339) target = $region52
        $region51: #{decoder_forward.3} parent=39 // pred_region
          %p342 = scmp.eq.s32.totalorder %s23, 0
          // Predicated region
          $region53: #{decoder_forward.3} parent=51 // pred_check
            %p343 = pneg %p342
          $region54: #{decoder_forward.3} parent=51 // pred_check_branch
            %345 = sbr.rel (%p343) target = $region56
          $region55: #{decoder_forward.3} parent=51 // pred_region
            %v346 = vlaneseq
            %vm347 = vcmp.ge.s32.totalorder %v346, 0
            %vm348 = vcmp.lt.s32.totalorder %v346, 256
            %vm349 = vmand %vm347, %vm348
            %350 = vst.msk [vmem:[#allocation3] sm:$0x3] %vm349, 0.0
          $region56: #{decoder_forward.3} parent=51 // pred_fallthru
            _
          %v351 = vld [vmem:[%s313] sm:$0xff]
          %v352 = vld [vmem:[%s313 + $0x8] sm:$0xff]
          %v353 = vld [vmem:[%s2] sm:$0xff]
          %v354 = vld [vmem:[%s2 + $0x8] sm:$0xff]
          %v355 = vld [vmem:[%s2 + $0x10] sm:$0xff]
          %v356 = vld [vmem:[%s2 + $0x18] sm:$0xff]
          %v357 = vld [vmem:[%s2 + $0x20] sm:$0xff]
          %v358 = vld [vmem:[%s2 + $0x28] sm:$0xff]
          %v359 = vld [vmem:[%s2 + $0x30] sm:$0xff]
          %v360 = vld [vmem:[%s2 + $0x38] sm:$0xff]
          %v361 = vld [vmem:[%s2 + $0x40] sm:$0xff]
          %v362 = vld [vmem:[%s2 + $0x48] sm:$0xff]
          %v363 = vld [vmem:[%s2 + $0x50] sm:$0xff]
          %v364 = vld [vmem:[%s2 + $0x58] sm:$0xff]
          %v365 = vld [vmem:[%s2 + $0x60] sm:$0xff]
          %v366 = vld [vmem:[%s2 + $0x68] sm:$0xff]
          %v367 = vld [vmem:[%s2 + $0x70] sm:$0xff]
          %v368 = vld [vmem:[%s2 + $0x78] sm:$0xff]
          %v369 = vld [vmem:[%s2 + $0x80] sm:$0xff]
          %v370 = vld [vmem:[%s2 + $0x88] sm:$0xff]
          %v371 = vld [vmem:[%s2 + $0x90] sm:$0xff]
          %v372 = vld [vmem:[%s2 + $0x98] sm:$0xff]
          %v373 = vld [vmem:[%s2 + $0xa0] sm:$0xff]
          %v374 = vld [vmem:[%s2 + $0xa8] sm:$0xff]
          %v375 = vld [vmem:[%s2 + $0xb0] sm:$0xff]
          %v376 = vld [vmem:[%s2 + $0xb8] sm:$0xff]
          %v377 = vld [vmem:[%s2 + $0xc0] sm:$0xff]
          %v378 = vld [vmem:[%s2 + $0xc8] sm:$0xff]
          %v379 = vld [vmem:[%s2 + $0xd0] sm:$0xff]
          %v380 = vld [vmem:[%s2 + $0xd8] sm:$0xff]
          %v381 = vld [vmem:[%s2 + $0xe0] sm:$0xff]
          %v382 = vld [vmem:[%s2 + $0xe8] sm:$0xff]
          %v383 = vld [vmem:[%s2 + $0xf0] sm:$0xff]
          %v384 = vld [vmem:[%s2 + $0xf8] sm:$0xff]
          %v387 = vunpack.c.l.b16 %v351
          %v388 = vunpack.c.h.b16 %v351
          %v389 = vunpack.c.l.b16 %v352
          %v390 = vunpack.c.h.b16 %v352
          %v391 = vpack.c.b16 %v389, %v387
          %v392 = vpack.c.b16 %v390, %v388
          %v427 = vunpack.c.l.b16 %v353
          %v428 = vunpack.c.h.b16 %v353
          %v429 = vunpack.c.l.b16 %v354
          %v430 = vunpack.c.h.b16 %v354
          %v431 = vunpack.c.l.b16 %v355
          %v432 = vunpack.c.h.b16 %v355
          %v433 = vunpack.c.l.b16 %v356
          %v434 = vunpack.c.h.b16 %v356
          %v435 = vunpack.c.l.b16 %v357
          %v436 = vunpack.c.h.b16 %v357
          %v437 = vunpack.c.l.b16 %v358
          %v438 = vunpack.c.h.b16 %v358
          %v439 = vunpack.c.l.b16 %v359
          %v440 = vunpack.c.h.b16 %v359
          %v441 = vunpack.c.l.b16 %v360
          %v442 = vunpack.c.h.b16 %v360
          %v443 = vunpack.c.l.b16 %v361
          %v444 = vunpack.c.h.b16 %v361
          %v445 = vunpack.c.l.b16 %v362
          %v446 = vunpack.c.h.b16 %v362
          %v447 = vunpack.c.l.b16 %v363
          %v448 = vunpack.c.h.b16 %v363
          %v449 = vunpack.c.l.b16 %v364
          %v450 = vunpack.c.h.b16 %v364
          %v451 = vunpack.c.l.b16 %v365
          %v452 = vunpack.c.h.b16 %v365
          %v453 = vunpack.c.l.b16 %v366
          %v454 = vunpack.c.h.b16 %v366
          %v455 = vunpack.c.l.b16 %v367
          %v456 = vunpack.c.h.b16 %v367
          %v457 = vunpack.c.l.b16 %v368
          %v458 = vunpack.c.h.b16 %v368
          %v459 = vunpack.c.l.b16 %v369
          %v460 = vunpack.c.h.b16 %v369
          %v461 = vunpack.c.l.b16 %v370
          %v462 = vunpack.c.h.b16 %v370
          %v463 = vunpack.c.l.b16 %v371
          %v464 = vunpack.c.h.b16 %v371
          %v465 = vunpack.c.l.b16 %v372
          %v466 = vunpack.c.h.b16 %v372
          %v467 = vunpack.c.l.b16 %v373
          %v468 = vunpack.c.h.b16 %v373
          %v469 = vunpack.c.l.b16 %v374
          %v470 = vunpack.c.h.b16 %v374
          %v471 = vunpack.c.l.b16 %v375
          %v472 = vunpack.c.h.b16 %v375
          %v473 = vunpack.c.l.b16 %v376
          %v474 = vunpack.c.h.b16 %v376
          %v475 = vunpack.c.l.b16 %v377
          %v476 = vunpack.c.h.b16 %v377
          %v477 = vunpack.c.l.b16 %v378
          %v478 = vunpack.c.h.b16 %v378
          %v479 = vunpack.c.l.b16 %v379
          %v480 = vunpack.c.h.b16 %v379
          %v481 = vunpack.c.l.b16 %v380
          %v482 = vunpack.c.h.b16 %v380
          %v483 = vunpack.c.l.b16 %v381
          %v484 = vunpack.c.h.b16 %v381
          %v485 = vunpack.c.l.b16 %v382
          %v486 = vunpack.c.h.b16 %v382
          %v487 = vunpack.c.l.b16 %v383
          %v488 = vunpack.c.h.b16 %v383
          %v489 = vunpack.c.l.b16 %v384
          %v490 = vunpack.c.h.b16 %v384
          %v491 = vpack.c.b16 %v429, %v427
          %v492 = vpack.c.b16 %v430, %v428
          %v493 = vpack.c.b16 %v433, %v431
          %v494 = vpack.c.b16 %v434, %v432
          %v495 = vpack.c.b16 %v437, %v435
          %v496 = vpack.c.b16 %v438, %v436
          %v497 = vpack.c.b16 %v441, %v439
          %v498 = vpack.c.b16 %v442, %v440
          %v499 = vpack.c.b16 %v445, %v443
          %v500 = vpack.c.b16 %v446, %v444
          %v501 = vpack.c.b16 %v449, %v447
          %v502 = vpack.c.b16 %v450, %v448
          %v503 = vpack.c.b16 %v453, %v451
          %v504 = vpack.c.b16 %v454, %v452
          %v505 = vpack.c.b16 %v457, %v455
          %v506 = vpack.c.b16 %v458, %v456
          %v507 = vpack.c.b16 %v461, %v459
          %v508 = vpack.c.b16 %v462, %v460
          %v509 = vpack.c.b16 %v465, %v463
          %v510 = vpack.c.b16 %v466, %v464
          %v511 = vpack.c.b16 %v469, %v467
          %v512 = vpack.c.b16 %v470, %v468
          %v513 = vpack.c.b16 %v473, %v471
          %v514 = vpack.c.b16 %v474, %v472
          %v515 = vpack.c.b16 %v477, %v475
          %v516 = vpack.c.b16 %v478, %v476
          %v517 = vpack.c.b16 %v481, %v479
          %v518 = vpack.c.b16 %v482, %v480
          %v519 = vpack.c.b16 %v485, %v483
          %v520 = vpack.c.b16 %v486, %v484
          %v521 = vpack.c.b16 %v489, %v487
          %v522 = vpack.c.b16 %v490, %v488
          %555 = vmatpush.bf16.msra.mxu0 %v505
          %556 = vmatpush.bf16.msra.mxu0 %v503
          %557 = vmatpush.bf16.msra.mxu0 %v501
          %558 = vmatpush.bf16.msra.mxu0 %v499
          %559 = vmatpush.bf16.msra.mxu0 %v497
          %560 = vmatpush.bf16.msra.mxu0 %v495
          %561 = vmatpush.bf16.msra.mxu0 %v493
          %562 = vmatpush.bf16.msra.mxu0 %v491
          %563 = vmatmul.bf16.gmra.mxu0 %v391
          %v564 = vpop.f32.mrf.mxu0
          %v565 = vadd.f32 0.0, %v564
          %v566 = vpop.f32.mrf.mxu0
          %v567 = vadd.f32 0.0, %v566
          %568 = vdwg.mxu0
          %569 = vmatpush.bf16.msra.mxu0 %v521
          %570 = vmatpush.bf16.msra.mxu0 %v519
          %571 = vmatpush.bf16.msra.mxu0 %v517
          %572 = vmatpush.bf16.msra.mxu0 %v515
          %573 = vmatpush.bf16.msra.mxu0 %v513
          %574 = vmatpush.bf16.msra.mxu0 %v511
          %575 = vmatpush.bf16.msra.mxu0 %v509
          %576 = vmatpush.bf16.msra.mxu0 %v507
          %577 = vmatmul.bf16.gmra.mxu0 %v392
          %v578 = vpop.f32.mrf.mxu0
          %v579 = vadd.f32 %v565, %v578
          %v580 = vpop.f32.mrf.mxu0
          %v581 = vadd.f32 %v567, %v580
          %582 = vdwg.mxu0
          %583 = vmatpush.bf16.msra.mxu0 %v506
          %584 = vmatpush.bf16.msra.mxu0 %v504
          %585 = vmatpush.bf16.msra.mxu0 %v502
          %586 = vmatpush.bf16.msra.mxu0 %v500
          %587 = vmatpush.bf16.msra.mxu0 %v498
          %588 = vmatpush.bf16.msra.mxu0 %v496
          %589 = vmatpush.bf16.msra.mxu0 %v494
          %590 = vmatpush.bf16.msra.mxu0 %v492
          %591 = vmatmul.bf16.gmra.mxu0 %v391
          %v592 = vpop.f32.mrf.mxu0
          %v593 = vadd.f32 0.0, %v592
          %v594 = vpop.f32.mrf.mxu0
          %v595 = vadd.f32 0.0, %v594
          %596 = vdwg.mxu0
          %597 = vmatpush.bf16.msra.mxu0 %v522
          %598 = vmatpush.bf16.msra.mxu0 %v520
          %599 = vmatpush.bf16.msra.mxu0 %v518
          %600 = vmatpush.bf16.msra.mxu0 %v516
          %601 = vmatpush.bf16.msra.mxu0 %v514
          %602 = vmatpush.bf16.msra.mxu0 %v512
          %603 = vmatpush.bf16.msra.mxu0 %v510
          %604 = vmatpush.bf16.msra.mxu0 %v508
          %605 = vmatmul.bf16.gmra.mxu0 %v392
          %v606 = vpop.f32.mrf.mxu0
          %v607 = vadd.f32 %v593, %v606
          %v608 = vpop.f32.mrf.mxu0
          %v609 = vadd.f32 %v595, %v608
          %610 = vdwg.mxu0
          %v611 = vmax.f32 %v579, 0.0
          %v612 = vmax.f32 %v607, 0.0
          %v613 = vmax.f32 %v581, 0.0
          %v614 = vmax.f32 %v609, 0.0
          %v615 = vld [vmem:[%s324] sm:$0xff]
          %v616 = vld [vmem:[%s324 + $0x8] sm:$0xff]
          %v617 = vld [vmem:[%s324 + $0x10] sm:$0xff]
          %v618 = vld [vmem:[%s324 + $0x18] sm:$0xff]
          %v619 = vld [vmem:[%s324 + $0x20] sm:$0xff]
          %v620 = vld [vmem:[%s324 + $0x28] sm:$0xff]
          %v621 = vld [vmem:[%s324 + $0x30] sm:$0xff]
          %v622 = vld [vmem:[%s324 + $0x38] sm:$0xff]
          %v623 = vld [vmem:[#allocation5] sm:$0xff]
          %v624 = vld [vmem:[#allocation5 + $0x8] sm:$0xff]
          %v625 = vld [vmem:[#allocation5 + $0x10] sm:$0xff]
          %v626 = vld [vmem:[#allocation5 + $0x18] sm:$0xff]
          %v627 = vld [vmem:[#allocation5 + $0x20] sm:$0xff]
          %v628 = vld [vmem:[#allocation5 + $0x28] sm:$0xff]
          %v629 = vld [vmem:[#allocation5 + $0x30] sm:$0xff]
          %v630 = vld [vmem:[#allocation5 + $0x38] sm:$0xff]
          %v631 = vld [vmem:[#allocation5 + $0x40] sm:$0xff]
          %v632 = vld [vmem:[#allocation5 + $0x48] sm:$0xff]
          %v633 = vld [vmem:[#allocation5 + $0x50] sm:$0xff]
          %v634 = vld [vmem:[#allocation5 + $0x58] sm:$0xff]
          %v635 = vld [vmem:[#allocation5 + $0x60] sm:$0xff]
          %v636 = vld [vmem:[#allocation5 + $0x68] sm:$0xff]
          %v637 = vld [vmem:[#allocation5 + $0x70] sm:$0xff]
          %v638 = vld [vmem:[#allocation5 + $0x78] sm:$0xff]
          %v639 = vld [vmem:[#allocation5 + $0x80] sm:$0xff]
          %v640 = vld [vmem:[#allocation5 + $0x88] sm:$0xff]
          %v641 = vld [vmem:[#allocation5 + $0x90] sm:$0xff]
          %v642 = vld [vmem:[#allocation5 + $0x98] sm:$0xff]
          %v643 = vld [vmem:[#allocation5 + $0xa0] sm:$0xff]
          %v644 = vld [vmem:[#allocation5 + $0xa8] sm:$0xff]
          %v645 = vld [vmem:[#allocation5 + $0xb0] sm:$0xff]
          %v646 = vld [vmem:[#allocation5 + $0xb8] sm:$0xff]
          %v647 = vld [vmem:[#allocation5 + $0xc0] sm:$0xff]
          %v648 = vld [vmem:[#allocation5 + $0xc8] sm:$0xff]
          %v649 = vld [vmem:[#allocation5 + $0xd0] sm:$0xff]
          %v650 = vld [vmem:[#allocation5 + $0xd8] sm:$0xff]
          %v651 = vld [vmem:[#allocation5 + $0xe0] sm:$0xff]
          %v652 = vld [vmem:[#allocation5 + $0xe8] sm:$0xff]
          %v653 = vld [vmem:[#allocation5 + $0xf0] sm:$0xff]
          %v654 = vld [vmem:[#allocation5 + $0xf8] sm:$0xff]
          %v655 = vld [vmem:[#allocation5 + $0x100] sm:$0xff]
          %v656 = vld [vmem:[#allocation5 + $0x108] sm:$0xff]
          %v657 = vld [vmem:[#allocation5 + $0x110] sm:$0xff]
          %v658 = vld [vmem:[#allocation5 + $0x118] sm:$0xff]
          %v659 = vld [vmem:[#allocation5 + $0x120] sm:$0xff]
          %v660 = vld [vmem:[#allocation5 + $0x128] sm:$0xff]
          %v661 = vld [vmem:[#allocation5 + $0x130] sm:$0xff]
          %v662 = vld [vmem:[#allocation5 + $0x138] sm:$0xff]
          %v663 = vld [vmem:[#allocation5 + $0x140] sm:$0xff]
          %v664 = vld [vmem:[#allocation5 + $0x148] sm:$0xff]
          %v665 = vld [vmem:[#allocation5 + $0x150] sm:$0xff]
          %v666 = vld [vmem:[#allocation5 + $0x158] sm:$0xff]
          %v667 = vld [vmem:[#allocation5 + $0x160] sm:$0xff]
          %v668 = vld [vmem:[#allocation5 + $0x168] sm:$0xff]
          %v669 = vld [vmem:[#allocation5 + $0x170] sm:$0xff]
          %v670 = vld [vmem:[#allocation5 + $0x178] sm:$0xff]
          %v671 = vld [vmem:[#allocation5 + $0x180] sm:$0xff]
          %v672 = vld [vmem:[#allocation5 + $0x188] sm:$0xff]
          %v673 = vld [vmem:[#allocation5 + $0x190] sm:$0xff]
          %v674 = vld [vmem:[#allocation5 + $0x198] sm:$0xff]
          %v675 = vld [vmem:[#allocation5 + $0x1a0] sm:$0xff]
          %v676 = vld [vmem:[#allocation5 + $0x1a8] sm:$0xff]
          %v677 = vld [vmem:[#allocation5 + $0x1b0] sm:$0xff]
          %v678 = vld [vmem:[#allocation5 + $0x1b8] sm:$0xff]
          %v679 = vld [vmem:[#allocation5 + $0x1c0] sm:$0xff]
          %v680 = vld [vmem:[#allocation5 + $0x1c8] sm:$0xff]
          %v681 = vld [vmem:[#allocation5 + $0x1d0] sm:$0xff]
          %v682 = vld [vmem:[#allocation5 + $0x1d8] sm:$0xff]
          %v683 = vld [vmem:[#allocation5 + $0x1e0] sm:$0xff]
          %v684 = vld [vmem:[#allocation5 + $0x1e8] sm:$0xff]
          %v685 = vld [vmem:[#allocation5 + $0x1f0] sm:$0xff]
          %v686 = vld [vmem:[#allocation5 + $0x1f8] sm:$0xff]
          %v687 = vld [vmem:[#allocation5 + $0x200] sm:$0xff]
          %v688 = vld [vmem:[#allocation5 + $0x208] sm:$0xff]
          %v689 = vld [vmem:[#allocation5 + $0x210] sm:$0xff]
          %v690 = vld [vmem:[#allocation5 + $0x218] sm:$0xff]
          %v691 = vld [vmem:[#allocation5 + $0x220] sm:$0xff]
          %v692 = vld [vmem:[#allocation5 + $0x228] sm:$0xff]
          %v693 = vld [vmem:[#allocation5 + $0x230] sm:$0xff]
          %v694 = vld [vmem:[#allocation5 + $0x238] sm:$0xff]
          %v695 = vld [vmem:[#allocation5 + $0x240] sm:$0xff]
          %v696 = vld [vmem:[#allocation5 + $0x248] sm:$0xff]
          %v697 = vld [vmem:[#allocation5 + $0x250] sm:$0xff]
          %v698 = vld [vmem:[#allocation5 + $0x258] sm:$0xff]
          %v699 = vld [vmem:[#allocation5 + $0x260] sm:$0xff]
          %v700 = vld [vmem:[#allocation5 + $0x268] sm:$0xff]
          %v701 = vld [vmem:[#allocation5 + $0x270] sm:$0xff]
          %v702 = vld [vmem:[#allocation5 + $0x278] sm:$0xff]
          %v703 = vld [vmem:[#allocation5 + $0x280] sm:$0xff]
          %v704 = vld [vmem:[#allocation5 + $0x288] sm:$0xff]
          %v705 = vld [vmem:[#allocation5 + $0x290] sm:$0xff]
          %v706 = vld [vmem:[#allocation5 + $0x298] sm:$0xff]
          %v707 = vld [vmem:[#allocation5 + $0x2a0] sm:$0xff]
          %v708 = vld [vmem:[#allocation5 + $0x2a8] sm:$0xff]
          %v709 = vld [vmem:[#allocation5 + $0x2b0] sm:$0xff]
          %v710 = vld [vmem:[#allocation5 + $0x2b8] sm:$0xff]
          %v711 = vld [vmem:[#allocation5 + $0x2c0] sm:$0xff]
          %v712 = vld [vmem:[#allocation5 + $0x2c8] sm:$0xff]
          %v713 = vld [vmem:[#allocation5 + $0x2d0] sm:$0xff]
          %v714 = vld [vmem:[#allocation5 + $0x2d8] sm:$0xff]
          %v715 = vld [vmem:[#allocation5 + $0x2e0] sm:$0xff]
          %v716 = vld [vmem:[#allocation5 + $0x2e8] sm:$0xff]
          %v717 = vld [vmem:[#allocation5 + $0x2f0] sm:$0xff]
          %v718 = vld [vmem:[#allocation5 + $0x2f8] sm:$0xff]
          %v719 = vld [vmem:[#allocation5 + $0x300] sm:$0xff]
          %v720 = vld [vmem:[#allocation5 + $0x308] sm:$0xff]
          %v721 = vld [vmem:[#allocation5 + $0x310] sm:$0xff]
          %v722 = vld [vmem:[#allocation5 + $0x318] sm:$0xff]
          %v723 = vld [vmem:[#allocation5 + $0x320] sm:$0xff]
          %v724 = vld [vmem:[#allocation5 + $0x328] sm:$0xff]
          %v725 = vld [vmem:[#allocation5 + $0x330] sm:$0xff]
          %v726 = vld [vmem:[#allocation5 + $0x338] sm:$0xff]
          %v727 = vld [vmem:[#allocation5 + $0x340] sm:$0xff]
          %v728 = vld [vmem:[#allocation5 + $0x348] sm:$0xff]
          %v729 = vld [vmem:[#allocation5 + $0x350] sm:$0xff]
          %v730 = vld [vmem:[#allocation5 + $0x358] sm:$0xff]
          %v731 = vld [vmem:[#allocation5 + $0x360] sm:$0xff]
          %v732 = vld [vmem:[#allocation5 + $0x368] sm:$0xff]
          %v733 = vld [vmem:[#allocation5 + $0x370] sm:$0xff]
          %v734 = vld [vmem:[#allocation5 + $0x378] sm:$0xff]
          %v735 = vld [vmem:[#allocation5 + $0x380] sm:$0xff]
          %v736 = vld [vmem:[#allocation5 + $0x388] sm:$0xff]
          %v737 = vld [vmem:[#allocation5 + $0x390] sm:$0xff]
          %v738 = vld [vmem:[#allocation5 + $0x398] sm:$0xff]
          %v739 = vld [vmem:[#allocation5 + $0x3a0] sm:$0xff]
          %v740 = vld [vmem:[#allocation5 + $0x3a8] sm:$0xff]
          %v741 = vld [vmem:[#allocation5 + $0x3b0] sm:$0xff]
          %v742 = vld [vmem:[#allocation5 + $0x3b8] sm:$0xff]
          %v743 = vld [vmem:[#allocation5 + $0x3c0] sm:$0xff]
          %v744 = vld [vmem:[#allocation5 + $0x3c8] sm:$0xff]
          %v745 = vld [vmem:[#allocation5 + $0x3d0] sm:$0xff]
          %v746 = vld [vmem:[#allocation5 + $0x3d8] sm:$0xff]
          %v747 = vld [vmem:[#allocation5 + $0x3e0] sm:$0xff]
          %v748 = vld [vmem:[#allocation5 + $0x3e8] sm:$0xff]
          %v749 = vld [vmem:[#allocation5 + $0x3f0] sm:$0xff]
          %v750 = vld [vmem:[#allocation5 + $0x3f8] sm:$0xff]
          %v759 = vunpack.c.l.b16 %v615
          %v760 = vunpack.c.h.b16 %v615
          %v761 = vunpack.c.l.b16 %v616
          %v762 = vunpack.c.h.b16 %v616
          %v763 = vunpack.c.l.b16 %v617
          %v764 = vunpack.c.h.b16 %v617
          %v765 = vunpack.c.l.b16 %v618
          %v766 = vunpack.c.h.b16 %v618
          %v767 = vunpack.c.l.b16 %v619
          %v768 = vunpack.c.h.b16 %v619
          %v769 = vunpack.c.l.b16 %v620
          %v770 = vunpack.c.h.b16 %v620
          %v771 = vunpack.c.l.b16 %v621
          %v772 = vunpack.c.h.b16 %v621
          %v773 = vunpack.c.l.b16 %v622
          %v774 = vunpack.c.h.b16 %v622
          %v775 = vpack.c.b16 %v767, %v759
          %v776 = vpack.c.b16 %v768, %v760
          %v777 = vpack.c.b16 %v769, %v761
          %v778 = vpack.c.b16 %v770, %v762
          %v779 = vpack.c.b16 %v771, %v763
          %v780 = vpack.c.b16 %v772, %v764
          %v781 = vpack.c.b16 %v773, %v765
          %v782 = vpack.c.b16 %v774, %v766
          %v919 = vunpack.c.l.b16 %v623
          %v920 = vunpack.c.h.b16 %v623
          %v921 = vunpack.c.l.b16 %v624
          %v922 = vunpack.c.h.b16 %v624
          %v923 = vunpack.c.l.b16 %v625
          %v924 = vunpack.c.h.b16 %v625
          %v925 = vunpack.c.l.b16 %v626
          %v926 = vunpack.c.h.b16 %v626
          %v927 = vunpack.c.l.b16 %v627
          %v928 = vunpack.c.h.b16 %v627
          %v929 = vunpack.c.l.b16 %v628
          %v930 = vunpack.c.h.b16 %v628
          %v931 = vunpack.c.l.b16 %v629
          %v932 = vunpack.c.h.b16 %v629
          %v933 = vunpack.c.l.b16 %v630
          %v934 = vunpack.c.h.b16 %v630
          %v935 = vunpack.c.l.b16 %v631
          %v936 = vunpack.c.h.b16 %v631
          %v937 = vunpack.c.l.b16 %v632
          %v938 = vunpack.c.h.b16 %v632
          %v939 = vunpack.c.l.b16 %v633
          %v940 = vunpack.c.h.b16 %v633
          %v941 = vunpack.c.l.b16 %v634
          %v942 = vunpack.c.h.b16 %v634
          %v943 = vunpack.c.l.b16 %v635
          %v944 = vunpack.c.h.b16 %v635
          %v945 = vunpack.c.l.b16 %v636
          %v946 = vunpack.c.h.b16 %v636
          %v947 = vunpack.c.l.b16 %v637
          %v948 = vunpack.c.h.b16 %v637
          %v949 = vunpack.c.l.b16 %v638
          %v950 = vunpack.c.h.b16 %v638
          %v951 = vunpack.c.l.b16 %v639
          %v952 = vunpack.c.h.b16 %v639
          %v953 = vunpack.c.l.b16 %v640
          %v954 = vunpack.c.h.b16 %v640
          %v955 = vunpack.c.l.b16 %v641
          %v956 = vunpack.c.h.b16 %v641
          %v957 = vunpack.c.l.b16 %v642
          %v958 = vunpack.c.h.b16 %v642
          %v959 = vunpack.c.l.b16 %v643
          %v960 = vunpack.c.h.b16 %v643
          %v961 = vunpack.c.l.b16 %v644
          %v962 = vunpack.c.h.b16 %v644
          %v963 = vunpack.c.l.b16 %v645
          %v964 = vunpack.c.h.b16 %v645
          %v965 = vunpack.c.l.b16 %v646
          %v966 = vunpack.c.h.b16 %v646
          %v967 = vunpack.c.l.b16 %v647
          %v968 = vunpack.c.h.b16 %v647
          %v969 = vunpack.c.l.b16 %v648
          %v970 = vunpack.c.h.b16 %v648
          %v971 = vunpack.c.l.b16 %v649
          %v972 = vunpack.c.h.b16 %v649
          %v973 = vunpack.c.l.b16 %v650
          %v974 = vunpack.c.h.b16 %v650
          %v975 = vunpack.c.l.b16 %v651
          %v976 = vunpack.c.h.b16 %v651
          %v977 = vunpack.c.l.b16 %v652
          %v978 = vunpack.c.h.b16 %v652
          %v979 = vunpack.c.l.b16 %v653
          %v980 = vunpack.c.h.b16 %v653
          %v981 = vunpack.c.l.b16 %v654
          %v982 = vunpack.c.h.b16 %v654
          %v983 = vunpack.c.l.b16 %v655
          %v984 = vunpack.c.h.b16 %v655
          %v985 = vunpack.c.l.b16 %v656
          %v986 = vunpack.c.h.b16 %v656
          %v987 = vunpack.c.l.b16 %v657
          %v988 = vunpack.c.h.b16 %v657
          %v989 = vunpack.c.l.b16 %v658
          %v990 = vunpack.c.h.b16 %v658
          %v991 = vunpack.c.l.b16 %v659
          %v992 = vunpack.c.h.b16 %v659
          %v993 = vunpack.c.l.b16 %v660
          %v994 = vunpack.c.h.b16 %v660
          %v995 = vunpack.c.l.b16 %v661
          %v996 = vunpack.c.h.b16 %v661
          %v997 = vunpack.c.l.b16 %v662
          %v998 = vunpack.c.h.b16 %v662
          %v999 = vunpack.c.l.b16 %v663
          %v1000 = vunpack.c.h.b16 %v663
          %v1001 = vunpack.c.l.b16 %v664
          %v1002 = vunpack.c.h.b16 %v664
          %v1003 = vunpack.c.l.b16 %v665
          %v1004 = vunpack.c.h.b16 %v665
          %v1005 = vunpack.c.l.b16 %v666
          %v1006 = vunpack.c.h.b16 %v666
          %v1007 = vunpack.c.l.b16 %v667
          %v1008 = vunpack.c.h.b16 %v667
          %v1009 = vunpack.c.l.b16 %v668
          %v1010 = vunpack.c.h.b16 %v668
          %v1011 = vunpack.c.l.b16 %v669
          %v1012 = vunpack.c.h.b16 %v669
          %v1013 = vunpack.c.l.b16 %v670
          %v1014 = vunpack.c.h.b16 %v670
          %v1015 = vunpack.c.l.b16 %v671
          %v1016 = vunpack.c.h.b16 %v671
          %v1017 = vunpack.c.l.b16 %v672
          %v1018 = vunpack.c.h.b16 %v672
          %v1019 = vunpack.c.l.b16 %v673
          %v1020 = vunpack.c.h.b16 %v673
          %v1021 = vunpack.c.l.b16 %v674
          %v1022 = vunpack.c.h.b16 %v674
          %v1023 = vunpack.c.l.b16 %v675
          %v1024 = vunpack.c.h.b16 %v675
          %v1025 = vunpack.c.l.b16 %v676
          %v1026 = vunpack.c.h.b16 %v676
          %v1027 = vunpack.c.l.b16 %v677
          %v1028 = vunpack.c.h.b16 %v677
          %v1029 = vunpack.c.l.b16 %v678
          %v1030 = vunpack.c.h.b16 %v678
          %v1031 = vunpack.c.l.b16 %v679
          %v1032 = vunpack.c.h.b16 %v679
          %v1033 = vunpack.c.l.b16 %v680
          %v1034 = vunpack.c.h.b16 %v680
          %v1035 = vunpack.c.l.b16 %v681
          %v1036 = vunpack.c.h.b16 %v681
          %v1037 = vunpack.c.l.b16 %v682
          %v1038 = vunpack.c.h.b16 %v682
          %v1039 = vunpack.c.l.b16 %v683
          %v1040 = vunpack.c.h.b16 %v683
          %v1041 = vunpack.c.l.b16 %v684
          %v1042 = vunpack.c.h.b16 %v684
          %v1043 = vunpack.c.l.b16 %v685
          %v1044 = vunpack.c.h.b16 %v685
          %v1045 = vunpack.c.l.b16 %v686
          %v1046 = vunpack.c.h.b16 %v686
          %v1047 = vunpack.c.l.b16 %v687
          %v1048 = vunpack.c.h.b16 %v687
          %v1049 = vunpack.c.l.b16 %v688
          %v1050 = vunpack.c.h.b16 %v688
          %v1051 = vunpack.c.l.b16 %v689
          %v1052 = vunpack.c.h.b16 %v689
          %v1053 = vunpack.c.l.b16 %v690
          %v1054 = vunpack.c.h.b16 %v690
          %v1055 = vunpack.c.l.b16 %v691
          %v1056 = vunpack.c.h.b16 %v691
          %v1057 = vunpack.c.l.b16 %v692
          %v1058 = vunpack.c.h.b16 %v692
          %v1059 = vunpack.c.l.b16 %v693
          %v1060 = vunpack.c.h.b16 %v693
          %v1061 = vunpack.c.l.b16 %v694
          %v1062 = vunpack.c.h.b16 %v694
          %v1063 = vunpack.c.l.b16 %v695
          %v1064 = vunpack.c.h.b16 %v695
          %v1065 = vunpack.c.l.b16 %v696
          %v1066 = vunpack.c.h.b16 %v696
          %v1067 = vunpack.c.l.b16 %v697
          %v1068 = vunpack.c.h.b16 %v697
          %v1069 = vunpack.c.l.b16 %v698
          %v1070 = vunpack.c.h.b16 %v698
          %v1071 = vunpack.c.l.b16 %v699
          %v1072 = vunpack.c.h.b16 %v699
          %v1073 = vunpack.c.l.b16 %v700
          %v1074 = vunpack.c.h.b16 %v700
          %v1075 = vunpack.c.l.b16 %v701
          %v1076 = vunpack.c.h.b16 %v701
          %v1077 = vunpack.c.l.b16 %v702
          %v1078 = vunpack.c.h.b16 %v702
          %v1079 = vunpack.c.l.b16 %v703
          %v1080 = vunpack.c.h.b16 %v703
          %v1081 = vunpack.c.l.b16 %v704
          %v1082 = vunpack.c.h.b16 %v704
          %v1083 = vunpack.c.l.b16 %v705
          %v1084 = vunpack.c.h.b16 %v705
          %v1085 = vunpack.c.l.b16 %v706
          %v1086 = vunpack.c.h.b16 %v706
          %v1087 = vunpack.c.l.b16 %v707
          %v1088 = vunpack.c.h.b16 %v707
          %v1089 = vunpack.c.l.b16 %v708
          %v1090 = vunpack.c.h.b16 %v708
          %v1091 = vunpack.c.l.b16 %v709
          %v1092 = vunpack.c.h.b16 %v709
          %v1093 = vunpack.c.l.b16 %v710
          %v1094 = vunpack.c.h.b16 %v710
          %v1095 = vunpack.c.l.b16 %v711
          %v1096 = vunpack.c.h.b16 %v711
          %v1097 = vunpack.c.l.b16 %v712
          %v1098 = vunpack.c.h.b16 %v712
          %v1099 = vunpack.c.l.b16 %v713
          %v1100 = vunpack.c.h.b16 %v713
          %v1101 = vunpack.c.l.b16 %v714
          %v1102 = vunpack.c.h.b16 %v714
          %v1103 = vunpack.c.l.b16 %v715
          %v1104 = vunpack.c.h.b16 %v715
          %v1105 = vunpack.c.l.b16 %v716
          %v1106 = vunpack.c.h.b16 %v716
          %v1107 = vunpack.c.l.b16 %v717
          %v1108 = vunpack.c.h.b16 %v717
          %v1109 = vunpack.c.l.b16 %v718
          %v1110 = vunpack.c.h.b16 %v718
          %v1111 = vunpack.c.l.b16 %v719
          %v1112 = vunpack.c.h.b16 %v719
          %v1113 = vunpack.c.l.b16 %v720
          %v1114 = vunpack.c.h.b16 %v720
          %v1115 = vunpack.c.l.b16 %v721
          %v1116 = vunpack.c.h.b16 %v721
          %v1117 = vunpack.c.l.b16 %v722
          %v1118 = vunpack.c.h.b16 %v722
          %v1119 = vunpack.c.l.b16 %v723
          %v1120 = vunpack.c.h.b16 %v723
          %v1121 = vunpack.c.l.b16 %v724
          %v1122 = vunpack.c.h.b16 %v724
          %v1123 = vunpack.c.l.b16 %v725
          %v1124 = vunpack.c.h.b16 %v725
          %v1125 = vunpack.c.l.b16 %v726
          %v1126 = vunpack.c.h.b16 %v726
          %v1127 = vunpack.c.l.b16 %v727
          %v1128 = vunpack.c.h.b16 %v727
          %v1129 = vunpack.c.l.b16 %v728
          %v1130 = vunpack.c.h.b16 %v728
          %v1131 = vunpack.c.l.b16 %v729
          %v1132 = vunpack.c.h.b16 %v729
          %v1133 = vunpack.c.l.b16 %v730
          %v1134 = vunpack.c.h.b16 %v730
          %v1135 = vunpack.c.l.b16 %v731
          %v1136 = vunpack.c.h.b16 %v731
          %v1137 = vunpack.c.l.b16 %v732
          %v1138 = vunpack.c.h.b16 %v732
          %v1139 = vunpack.c.l.b16 %v733
          %v1140 = vunpack.c.h.b16 %v733
          %v1141 = vunpack.c.l.b16 %v734
          %v1142 = vunpack.c.h.b16 %v734
          %v1143 = vunpack.c.l.b16 %v735
          %v1144 = vunpack.c.h.b16 %v735
          %v1145 = vunpack.c.l.b16 %v736
          %v1146 = vunpack.c.h.b16 %v736
          %v1147 = vunpack.c.l.b16 %v737
          %v1148 = vunpack.c.h.b16 %v737
          %v1149 = vunpack.c.l.b16 %v738
          %v1150 = vunpack.c.h.b16 %v738
          %v1151 = vunpack.c.l.b16 %v739
          %v1152 = vunpack.c.h.b16 %v739
          %v1153 = vunpack.c.l.b16 %v740
          %v1154 = vunpack.c.h.b16 %v740
          %v1155 = vunpack.c.l.b16 %v741
          %v1156 = vunpack.c.h.b16 %v741
          %v1157 = vunpack.c.l.b16 %v742
          %v1158 = vunpack.c.h.b16 %v742
          %v1159 = vunpack.c.l.b16 %v743
          %v1160 = vunpack.c.h.b16 %v743
          %v1161 = vunpack.c.l.b16 %v744
          %v1162 = vunpack.c.h.b16 %v744
          %v1163 = vunpack.c.l.b16 %v745
          %v1164 = vunpack.c.h.b16 %v745
          %v1165 = vunpack.c.l.b16 %v746
          %v1166 = vunpack.c.h.b16 %v746
          %v1167 = vunpack.c.l.b16 %v747
          %v1168 = vunpack.c.h.b16 %v747
          %v1169 = vunpack.c.l.b16 %v748
          %v1170 = vunpack.c.h.b16 %v748
          %v1171 = vunpack.c.l.b16 %v749
          %v1172 = vunpack.c.h.b16 %v749
          %v1173 = vunpack.c.l.b16 %v750
          %v1174 = vunpack.c.h.b16 %v750
          %v1175 = vpack.c.b16 %v921, %v919
          %v1176 = vpack.c.b16 %v922, %v920
          %v1177 = vpack.c.b16 %v925, %v923
          %v1178 = vpack.c.b16 %v926, %v924
          %v1179 = vpack.c.b16 %v929, %v927
          %v1180 = vpack.c.b16 %v930, %v928
          %v1181 = vpack.c.b16 %v933, %v931
          %v1182 = vpack.c.b16 %v934, %v932
          %v1183 = vpack.c.b16 %v937, %v935
          %v1184 = vpack.c.b16 %v938, %v936
          %v1185 = vpack.c.b16 %v941, %v939
          %v1186 = vpack.c.b16 %v942, %v940
          %v1187 = vpack.c.b16 %v945, %v943
          %v1188 = vpack.c.b16 %v946, %v944
          %v1189 = vpack.c.b16 %v949, %v947
          %v1190 = vpack.c.b16 %v950, %v948
          %v1191 = vpack.c.b16 %v953, %v951
          %v1192 = vpack.c.b16 %v954, %v952
          %v1193 = vpack.c.b16 %v957, %v955
          %v1194 = vpack.c.b16 %v958, %v956
          %v1195 = vpack.c.b16 %v961, %v959
          %v1196 = vpack.c.b16 %v962, %v960
          %v1197 = vpack.c.b16 %v965, %v963
          %v1198 = vpack.c.b16 %v966, %v964
          %v1199 = vpack.c.b16 %v969, %v967
          %v1200 = vpack.c.b16 %v970, %v968
          %v1201 = vpack.c.b16 %v973, %v971
          %v1202 = vpack.c.b16 %v974, %v972
          %v1203 = vpack.c.b16 %v977, %v975
          %v1204 = vpack.c.b16 %v978, %v976
          %v1205 = vpack.c.b16 %v981, %v979
          %v1206 = vpack.c.b16 %v982, %v980
          %v1207 = vpack.c.b16 %v985, %v983
          %v1208 = vpack.c.b16 %v986, %v984
          %v1209 = vpack.c.b16 %v989, %v987
          %v1210 = vpack.c.b16 %v990, %v988
          %v1211 = vpack.c.b16 %v993, %v991
          %v1212 = vpack.c.b16 %v994, %v992
          %v1213 = vpack.c.b16 %v997, %v995
          %v1214 = vpack.c.b16 %v998, %v996
          %v1215 = vpack.c.b16 %v1001, %v999
          %v1216 = vpack.c.b16 %v1002, %v1000
          %v1217 = vpack.c.b16 %v1005, %v1003
          %v1218 = vpack.c.b16 %v1006, %v1004
          %v1219 = vpack.c.b16 %v1009, %v1007
          %v1220 = vpack.c.b16 %v1010, %v1008
          %v1221 = vpack.c.b16 %v1013, %v1011
          %v1222 = vpack.c.b16 %v1014, %v1012
          %v1223 = vpack.c.b16 %v1017, %v1015
          %v1224 = vpack.c.b16 %v1018, %v1016
          %v1225 = vpack.c.b16 %v1021, %v1019
          %v1226 = vpack.c.b16 %v1022, %v1020
          %v1227 = vpack.c.b16 %v1025, %v1023
          %v1228 = vpack.c.b16 %v1026, %v1024
          %v1229 = vpack.c.b16 %v1029, %v1027
          %v1230 = vpack.c.b16 %v1030, %v1028
          %v1231 = vpack.c.b16 %v1033, %v1031
          %v1232 = vpack.c.b16 %v1034, %v1032
          %v1233 = vpack.c.b16 %v1037, %v1035
          %v1234 = vpack.c.b16 %v1038, %v1036
          %v1235 = vpack.c.b16 %v1041, %v1039
          %v1236 = vpack.c.b16 %v1042, %v1040
          %v1237 = vpack.c.b16 %v1045, %v1043
          %v1238 = vpack.c.b16 %v1046, %v1044
          %v1239 = vpack.c.b16 %v1049, %v1047
          %v1240 = vpack.c.b16 %v1050, %v1048
          %v1241 = vpack.c.b16 %v1053, %v1051
          %v1242 = vpack.c.b16 %v1054, %v1052
          %v1243 = vpack.c.b16 %v1057, %v1055
          %v1244 = vpack.c.b16 %v1058, %v1056
          %v1245 = vpack.c.b16 %v1061, %v1059
          %v1246 = vpack.c.b16 %v1062, %v1060
          %v1247 = vpack.c.b16 %v1065, %v1063
          %v1248 = vpack.c.b16 %v1066, %v1064
          %v1249 = vpack.c.b16 %v1069, %v1067
          %v1250 = vpack.c.b16 %v1070, %v1068
          %v1251 = vpack.c.b16 %v1073, %v1071
          %v1252 = vpack.c.b16 %v1074, %v1072
          %v1253 = vpack.c.b16 %v1077, %v1075
          %v1254 = vpack.c.b16 %v1078, %v1076
          %v1255 = vpack.c.b16 %v1081, %v1079
          %v1256 = vpack.c.b16 %v1082, %v1080
          %v1257 = vpack.c.b16 %v1085, %v1083
          %v1258 = vpack.c.b16 %v1086, %v1084
          %v1259 = vpack.c.b16 %v1089, %v1087
          %v1260 = vpack.c.b16 %v1090, %v1088
          %v1261 = vpack.c.b16 %v1093, %v1091
          %v1262 = vpack.c.b16 %v1094, %v1092
          %v1263 = vpack.c.b16 %v1097, %v1095
          %v1264 = vpack.c.b16 %v1098, %v1096
          %v1265 = vpack.c.b16 %v1101, %v1099
          %v1266 = vpack.c.b16 %v1102, %v1100
          %v1267 = vpack.c.b16 %v1105, %v1103
          %v1268 = vpack.c.b16 %v1106, %v1104
          %v1269 = vpack.c.b16 %v1109, %v1107
          %v1270 = vpack.c.b16 %v1110, %v1108
          %v1271 = vpack.c.b16 %v1113, %v1111
          %v1272 = vpack.c.b16 %v1114, %v1112
          %v1273 = vpack.c.b16 %v1117, %v1115
          %v1274 = vpack.c.b16 %v1118, %v1116
          %v1275 = vpack.c.b16 %v1121, %v1119
          %v1276 = vpack.c.b16 %v1122, %v1120
          %v1277 = vpack.c.b16 %v1125, %v1123
          %v1278 = vpack.c.b16 %v1126, %v1124
          %v1279 = vpack.c.b16 %v1129, %v1127
          %v1280 = vpack.c.b16 %v1130, %v1128
          %v1281 = vpack.c.b16 %v1133, %v1131
          %v1282 = vpack.c.b16 %v1134, %v1132
          %v1283 = vpack.c.b16 %v1137, %v1135
          %v1284 = vpack.c.b16 %v1138, %v1136
          %v1285 = vpack.c.b16 %v1141, %v1139
          %v1286 = vpack.c.b16 %v1142, %v1140
          %v1287 = vpack.c.b16 %v1145, %v1143
          %v1288 = vpack.c.b16 %v1146, %v1144
          %v1289 = vpack.c.b16 %v1149, %v1147
          %v1290 = vpack.c.b16 %v1150, %v1148
          %v1291 = vpack.c.b16 %v1153, %v1151
          %v1292 = vpack.c.b16 %v1154, %v1152
          %v1293 = vpack.c.b16 %v1157, %v1155
          %v1294 = vpack.c.b16 %v1158, %v1156
          %v1295 = vpack.c.b16 %v1161, %v1159
          %v1296 = vpack.c.b16 %v1162, %v1160
          %v1297 = vpack.c.b16 %v1165, %v1163
          %v1298 = vpack.c.b16 %v1166, %v1164
          %v1299 = vpack.c.b16 %v1169, %v1167
          %v1300 = vpack.c.b16 %v1170, %v1168
          %v1301 = vpack.c.b16 %v1173, %v1171
          %v1302 = vpack.c.b16 %v1174, %v1172
          %1431 = vmatpush.bf16.msra.mxu0 %v1189
          %1432 = vmatpush.bf16.msra.mxu0 %v1187
          %1433 = vmatpush.bf16.msra.mxu0 %v1185
          %1434 = vmatpush.bf16.msra.mxu0 %v1183
          %1435 = vmatpush.bf16.msra.mxu0 %v1181
          %1436 = vmatpush.bf16.msra.mxu0 %v1179
          %1437 = vmatpush.bf16.msra.mxu0 %v1177
          %1438 = vmatpush.bf16.msra.mxu0 %v1175
          %1439 = vmatmul.bf16.gmra.mxu0 %v775
          %v1440 = vpop.f32.mrf.mxu0
          %v1441 = vadd.f32 0.0, %v1440
          %v1442 = vpop.f32.mrf.mxu0
          %v1443 = vadd.f32 0.0, %v1442
          %1444 = vdwg.mxu0
          %1445 = vmatpush.bf16.msra.mxu0 %v1205
          %1446 = vmatpush.bf16.msra.mxu0 %v1203
          %1447 = vmatpush.bf16.msra.mxu0 %v1201
          %1448 = vmatpush.bf16.msra.mxu0 %v1199
          %1449 = vmatpush.bf16.msra.mxu0 %v1197
          %1450 = vmatpush.bf16.msra.mxu0 %v1195
          %1451 = vmatpush.bf16.msra.mxu0 %v1193
          %1452 = vmatpush.bf16.msra.mxu0 %v1191
          %1453 = vmatmul.bf16.gmra.mxu0 %v776
          %v1454 = vpop.f32.mrf.mxu0
          %v1455 = vadd.f32 %v1441, %v1454
          %v1456 = vpop.f32.mrf.mxu0
          %v1457 = vadd.f32 %v1443, %v1456
          %1458 = vdwg.mxu0
          %1459 = vmatpush.bf16.msra.mxu0 %v1221
          %1460 = vmatpush.bf16.msra.mxu0 %v1219
          %1461 = vmatpush.bf16.msra.mxu0 %v1217
          %1462 = vmatpush.bf16.msra.mxu0 %v1215
          %1463 = vmatpush.bf16.msra.mxu0 %v1213
          %1464 = vmatpush.bf16.msra.mxu0 %v1211
          %1465 = vmatpush.bf16.msra.mxu0 %v1209
          %1466 = vmatpush.bf16.msra.mxu0 %v1207
          %1467 = vmatmul.bf16.gmra.mxu0 %v777
          %v1468 = vpop.f32.mrf.mxu0
          %v1469 = vadd.f32 %v1455, %v1468
          %v1470 = vpop.f32.mrf.mxu0
          %v1471 = vadd.f32 %v1457, %v1470
          %1472 = vdwg.mxu0
          %1473 = vmatpush.bf16.msra.mxu0 %v1237
          %1474 = vmatpush.bf16.msra.mxu0 %v1235
          %1475 = vmatpush.bf16.msra.mxu0 %v1233
          %1476 = vmatpush.bf16.msra.mxu0 %v1231
          %1477 = vmatpush.bf16.msra.mxu0 %v1229
          %1478 = vmatpush.bf16.msra.mxu0 %v1227
          %1479 = vmatpush.bf16.msra.mxu0 %v1225
          %1480 = vmatpush.bf16.msra.mxu0 %v1223
          %1481 = vmatmul.bf16.gmra.mxu0 %v778
          %v1482 = vpop.f32.mrf.mxu0
          %v1483 = vadd.f32 %v1469, %v1482
          %v1484 = vpop.f32.mrf.mxu0
          %v1485 = vadd.f32 %v1471, %v1484
          %1486 = vdwg.mxu0
          %1487 = vmatpush.bf16.msra.mxu0 %v1253
          %1488 = vmatpush.bf16.msra.mxu0 %v1251
          %1489 = vmatpush.bf16.msra.mxu0 %v1249
          %1490 = vmatpush.bf16.msra.mxu0 %v1247
          %1491 = vmatpush.bf16.msra.mxu0 %v1245
          %1492 = vmatpush.bf16.msra.mxu0 %v1243
          %1493 = vmatpush.bf16.msra.mxu0 %v1241
          %1494 = vmatpush.bf16.msra.mxu0 %v1239
          %1495 = vmatmul.bf16.gmra.mxu0 %v779
          %v1496 = vpop.f32.mrf.mxu0
          %v1497 = vadd.f32 %v1483, %v1496
          %v1498 = vpop.f32.mrf.mxu0
          %v1499 = vadd.f32 %v1485, %v1498
          %1500 = vdwg.mxu0
          %1501 = vmatpush.bf16.msra.mxu0 %v1269
          %1502 = vmatpush.bf16.msra.mxu0 %v1267
          %1503 = vmatpush.bf16.msra.mxu0 %v1265
          %1504 = vmatpush.bf16.msra.mxu0 %v1263
          %1505 = vmatpush.bf16.msra.mxu0 %v1261
          %1506 = vmatpush.bf16.msra.mxu0 %v1259
          %1507 = vmatpush.bf16.msra.mxu0 %v1257
          %1508 = vmatpush.bf16.msra.mxu0 %v1255
          %1509 = vmatmul.bf16.gmra.mxu0 %v780
          %v1510 = vpop.f32.mrf.mxu0
          %v1511 = vadd.f32 %v1497, %v1510
          %v1512 = vpop.f32.mrf.mxu0
          %v1513 = vadd.f32 %v1499, %v1512
          %1514 = vdwg.mxu0
          %1515 = vmatpush.bf16.msra.mxu0 %v1285
          %1516 = vmatpush.bf16.msra.mxu0 %v1283
          %1517 = vmatpush.bf16.msra.mxu0 %v1281
          %1518 = vmatpush.bf16.msra.mxu0 %v1279
          %1519 = vmatpush.bf16.msra.mxu0 %v1277
          %1520 = vmatpush.bf16.msra.mxu0 %v1275
          %1521 = vmatpush.bf16.msra.mxu0 %v1273
          %1522 = vmatpush.bf16.msra.mxu0 %v1271
          %1523 = vmatmul.bf16.gmra.mxu0 %v781
          %v1524 = vpop.f32.mrf.mxu0
          %v1525 = vadd.f32 %v1511, %v1524
          %v1526 = vpop.f32.mrf.mxu0
          %v1527 = vadd.f32 %v1513, %v1526
          %1528 = vdwg.mxu0
          %1529 = vmatpush.bf16.msra.mxu0 %v1301
          %1530 = vmatpush.bf16.msra.mxu0 %v1299
          %1531 = vmatpush.bf16.msra.mxu0 %v1297
          %1532 = vmatpush.bf16.msra.mxu0 %v1295
          %1533 = vmatpush.bf16.msra.mxu0 %v1293
          %1534 = vmatpush.bf16.msra.mxu0 %v1291
          %1535 = vmatpush.bf16.msra.mxu0 %v1289
          %1536 = vmatpush.bf16.msra.mxu0 %v1287
          %1537 = vmatmul.bf16.gmra.mxu0 %v782
          %v1538 = vpop.f32.mrf.mxu0
          %v1539 = vadd.f32 %v1525, %v1538
          %v1540 = vpop.f32.mrf.mxu0
          %v1541 = vadd.f32 %v1527, %v1540
          %1542 = vdwg.mxu0
          %1543 = vmatpush.bf16.msra.mxu0 %v1190
          %1544 = vmatpush.bf16.msra.mxu0 %v1188
          %1545 = vmatpush.bf16.msra.mxu0 %v1186
          %1546 = vmatpush.bf16.msra.mxu0 %v1184
          %1547 = vmatpush.bf16.msra.mxu0 %v1182
          %1548 = vmatpush.bf16.msra.mxu0 %v1180
          %1549 = vmatpush.bf16.msra.mxu0 %v1178
          %1550 = vmatpush.bf16.msra.mxu0 %v1176
          %1551 = vmatmul.bf16.gmra.mxu0 %v775
          %v1552 = vpop.f32.mrf.mxu0
          %v1553 = vadd.f32 0.0, %v1552
          %v1554 = vpop.f32.mrf.mxu0
          %v1555 = vadd.f32 0.0, %v1554
          %1556 = vdwg.mxu0
          %1557 = vmatpush.bf16.msra.mxu0 %v1206
          %1558 = vmatpush.bf16.msra.mxu0 %v1204
          %1559 = vmatpush.bf16.msra.mxu0 %v1202
          %1560 = vmatpush.bf16.msra.mxu0 %v1200
          %1561 = vmatpush.bf16.msra.mxu0 %v1198
          %1562 = vmatpush.bf16.msra.mxu0 %v1196
          %1563 = vmatpush.bf16.msra.mxu0 %v1194
          %1564 = vmatpush.bf16.msra.mxu0 %v1192
          %1565 = vmatmul.bf16.gmra.mxu0 %v776
          %v1566 = vpop.f32.mrf.mxu0
          %v1567 = vadd.f32 %v1553, %v1566
          %v1568 = vpop.f32.mrf.mxu0
          %v1569 = vadd.f32 %v1555, %v1568
          %1570 = vdwg.mxu0
          %1571 = vmatpush.bf16.msra.mxu0 %v1222
          %1572 = vmatpush.bf16.msra.mxu0 %v1220
          %1573 = vmatpush.bf16.msra.mxu0 %v1218
          %1574 = vmatpush.bf16.msra.mxu0 %v1216
          %1575 = vmatpush.bf16.msra.mxu0 %v1214
          %1576 = vmatpush.bf16.msra.mxu0 %v1212
          %1577 = vmatpush.bf16.msra.mxu0 %v1210
          %1578 = vmatpush.bf16.msra.mxu0 %v1208
          %1579 = vmatmul.bf16.gmra.mxu0 %v777
          %v1580 = vpop.f32.mrf.mxu0
          %v1581 = vadd.f32 %v1567, %v1580
          %v1582 = vpop.f32.mrf.mxu0
          %v1583 = vadd.f32 %v1569, %v1582
          %1584 = vdwg.mxu0
          %1585 = vmatpush.bf16.msra.mxu0 %v1238
          %1586 = vmatpush.bf16.msra.mxu0 %v1236
          %1587 = vmatpush.bf16.msra.mxu0 %v1234
          %1588 = vmatpush.bf16.msra.mxu0 %v1232
          %1589 = vmatpush.bf16.msra.mxu0 %v1230
          %1590 = vmatpush.bf16.msra.mxu0 %v1228
          %1591 = vmatpush.bf16.msra.mxu0 %v1226
          %1592 = vmatpush.bf16.msra.mxu0 %v1224
          %1593 = vmatmul.bf16.gmra.mxu0 %v778
          %v1594 = vpop.f32.mrf.mxu0
          %v1595 = vadd.f32 %v1581, %v1594
          %v1596 = vpop.f32.mrf.mxu0
          %v1597 = vadd.f32 %v1583, %v1596
          %1598 = vdwg.mxu0
          %1599 = vmatpush.bf16.msra.mxu0 %v1254
          %1600 = vmatpush.bf16.msra.mxu0 %v1252
          %1601 = vmatpush.bf16.msra.mxu0 %v1250
          %1602 = vmatpush.bf16.msra.mxu0 %v1248
          %1603 = vmatpush.bf16.msra.mxu0 %v1246
          %1604 = vmatpush.bf16.msra.mxu0 %v1244
          %1605 = vmatpush.bf16.msra.mxu0 %v1242
          %1606 = vmatpush.bf16.msra.mxu0 %v1240
          %1607 = vmatmul.bf16.gmra.mxu0 %v779
          %v1608 = vpop.f32.mrf.mxu0
          %v1609 = vadd.f32 %v1595, %v1608
          %v1610 = vpop.f32.mrf.mxu0
          %v1611 = vadd.f32 %v1597, %v1610
          %1612 = vdwg.mxu0
          %1613 = vmatpush.bf16.msra.mxu0 %v1270
          %1614 = vmatpush.bf16.msra.mxu0 %v1268
          %1615 = vmatpush.bf16.msra.mxu0 %v1266
          %1616 = vmatpush.bf16.msra.mxu0 %v1264
          %1617 = vmatpush.bf16.msra.mxu0 %v1262
          %1618 = vmatpush.bf16.msra.mxu0 %v1260
          %1619 = vmatpush.bf16.msra.mxu0 %v1258
          %1620 = vmatpush.bf16.msra.mxu0 %v1256
          %1621 = vmatmul.bf16.gmra.mxu0 %v780
          %v1622 = vpop.f32.mrf.mxu0
          %v1623 = vadd.f32 %v1609, %v1622
          %v1624 = vpop.f32.mrf.mxu0
          %v1625 = vadd.f32 %v1611, %v1624
          %1626 = vdwg.mxu0
          %1627 = vmatpush.bf16.msra.mxu0 %v1286
          %1628 = vmatpush.bf16.msra.mxu0 %v1284
          %1629 = vmatpush.bf16.msra.mxu0 %v1282
          %1630 = vmatpush.bf16.msra.mxu0 %v1280
          %1631 = vmatpush.bf16.msra.mxu0 %v1278
          %1632 = vmatpush.bf16.msra.mxu0 %v1276
          %1633 = vmatpush.bf16.msra.mxu0 %v1274
          %1634 = vmatpush.bf16.msra.mxu0 %v1272
          %1635 = vmatmul.bf16.gmra.mxu0 %v781
          %v1636 = vpop.f32.mrf.mxu0
          %v1637 = vadd.f32 %v1623, %v1636
          %v1638 = vpop.f32.mrf.mxu0
          %v1639 = vadd.f32 %v1625, %v1638
          %1640 = vdwg.mxu0
          %1641 = vmatpush.bf16.msra.mxu0 %v1302
          %1642 = vmatpush.bf16.msra.mxu0 %v1300
          %1643 = vmatpush.bf16.msra.mxu0 %v1298
          %1644 = vmatpush.bf16.msra.mxu0 %v1296
          %1645 = vmatpush.bf16.msra.mxu0 %v1294
          %1646 = vmatpush.bf16.msra.mxu0 %v1292
          %1647 = vmatpush.bf16.msra.mxu0 %v1290
          %1648 = vmatpush.bf16.msra.mxu0 %v1288
          %1649 = vmatmul.bf16.gmra.mxu0 %v782
          %v1650 = vpop.f32.mrf.mxu0
          %v1651 = vadd.f32 %v1637, %v1650
          %v1652 = vpop.f32.mrf.mxu0
          %v1653 = vadd.f32 %v1639, %v1652
          %1654 = vdwg.mxu0
          %v1655 = vmax.f32 %v1539, 0.0
          %v1656 = vmax.f32 %v1651, 0.0
          %v1657 = vmax.f32 %v1541, 0.0
          %v1658 = vmax.f32 %v1653, 0.0
          %v1659 = vadd.f32 %v611, %v1655
          %v1660 = vadd.f32 %v612, %v1656
          %v1661 = vadd.f32 %v613, %v1657
          %v1662 = vadd.f32 %v614, %v1658
          %s1663 = sshra.s32 %s337, 3
          %s1664 = sand.u32 %s337, 7
          %s1665 = smul.u32 %s1663, 2
          %s1666 = smul.addr %s1665, 8
          %s1667 = scalar_lea.vmem [#allocation2], %s1666
          %1668 = vst [vmem:[%s1667] sm:$0xff] %v1659
          %1669 = vst [vmem:[%s1667 + $0x8] sm:$0xff] %v1660
          %1670 = vst [vmem:[%s1667 + $0x10] sm:$0xff] %v1661
          %1671 = vst [vmem:[%s1667 + $0x18] sm:$0xff] %v1662
          %v1672 = vld [vmem:[#allocation3] sm:$0x3]
          %v1673 = vadd.f32 %v1659, %v1661
          %v1674 = vrot.slane %v1673, 4
          %v1675 = vadd.f32 %v1673, %v1674
          %v1676 = vrot.slane %v1675, 2
          %v1677 = vadd.f32 %v1675, %v1676
          %v1678 = vrot.slane %v1677, 1
          %v1679 = vadd.f32 %v1677, %v1678
          %v1680 = vadd.f32 %v1660, %v1662
          %v1681 = vrot.slane %v1680, 4
          %v1682 = vadd.f32 %v1680, %v1681
          %v1683 = vrot.slane %v1682, 2
          %v1684 = vadd.f32 %v1682, %v1683
          %v1685 = vrot.slane %v1684, 1
          %v1686 = vadd.f32 %v1684, %v1685
          %v1689 = vrot.slane %v1686, 7
          %vm1690 = vcmask 1040384
          %v1691 = vsel %vm1690, %v1679, %v1689
          %v1693 = vadd.f32 %v1672, %v1691
          %v1694 = vlaneseq
          %vm1695 = vcmp.ge.s32.totalorder %v1694, 0
          %vm1696 = vcmp.lt.s32.totalorder %v1694, 256
          %vm1697 = vmand %vm1695, %vm1696
          %1698 = vst.msk [vmem:[#allocation3] sm:$0x3] %vm1697, %v1693
          // Predicated region
          $region57: #{decoder_forward.3} parent=51 // pred_check
            %p1699 = pneg %p342
          $region58: #{decoder_forward.3} parent=51 // pred_check_branch
            %1701 = sbr.rel (%p1699) target = $region60
          $region59: #{decoder_forward.3} parent=51 // pred_region
            %v1702 = vld [vmem:[#allocation3] sm:$0x3]
            %v1703 = vmul.f32 %v1702, 0.0625
            %v1704 = vld [vmem:[#allocation7] sm:$0xff]
            %v1705 = vld [vmem:[#allocation7 + $0x8] sm:$0xff]
            %v1706 = vld [vmem:[#allocation7 + $0x10] sm:$0xff]
            %v1707 = vld [vmem:[#allocation7 + $0x18] sm:$0xff]
            %v1708 = vld [vmem:[#allocation7 + $0x20] sm:$0xff]
            %v1709 = vld [vmem:[#allocation7 + $0x28] sm:$0xff]
            %v1710 = vld [vmem:[#allocation7 + $0x30] sm:$0xff]
            %v1711 = vld [vmem:[#allocation7 + $0x38] sm:$0xff]
            %v1712 = vld [vmem:[#allocation7 + $0x40] sm:$0xff]
            %v1713 = vld [vmem:[#allocation7 + $0x48] sm:$0xff]
            %v1714 = vld [vmem:[#allocation7 + $0x50] sm:$0xff]
            %v1715 = vld [vmem:[#allocation7 + $0x58] sm:$0xff]
            %v1716 = vld [vmem:[#allocation7 + $0x60] sm:$0xff]
            %v1717 = vld [vmem:[#allocation7 + $0x68] sm:$0xff]
            %v1718 = vld [vmem:[#allocation7 + $0x70] sm:$0xff]
            %v1719 = vld [vmem:[#allocation7 + $0x78] sm:$0xff]
            %v1720 = vld [vmem:[#allocation7 + $0x80] sm:$0xff]
            %v1721 = vld [vmem:[#allocation7 + $0x88] sm:$0xff]
            %v1722 = vld [vmem:[#allocation7 + $0x90] sm:$0xff]
            %v1723 = vld [vmem:[#allocation7 + $0x98] sm:$0xff]
            %v1724 = vld [vmem:[#allocation7 + $0xa0] sm:$0xff]
            %v1725 = vld [vmem:[#allocation7 + $0xa8] sm:$0xff]
            %v1726 = vld [vmem:[#allocation7 + $0xb0] sm:$0xff]
            %v1727 = vld [vmem:[#allocation7 + $0xb8] sm:$0xff]
            %v1728 = vld [vmem:[#allocation7 + $0xc0] sm:$0xff]
            %v1729 = vld [vmem:[#allocation7 + $0xc8] sm:$0xff]
            %v1730 = vld [vmem:[#allocation7 + $0xd0] sm:$0xff]
            %v1731 = vld [vmem:[#allocation7 + $0xd8] sm:$0xff]
            %v1732 = vld [vmem:[#allocation7 + $0xe0] sm:$0xff]
            %v1733 = vld [vmem:[#allocation7 + $0xe8] sm:$0xff]
            %v1734 = vld [vmem:[#allocation7 + $0xf0] sm:$0xff]
            %v1735 = vld [vmem:[#allocation7 + $0xf8] sm:$0xff]
            %v1736 = vld [vmem:[#allocation7 + $0x100] sm:$0xff]
            %v1737 = vld [vmem:[#allocation7 + $0x108] sm:$0xff]
            %v1738 = vld [vmem:[#allocation7 + $0x110] sm:$0xff]
            %v1739 = vld [vmem:[#allocation7 + $0x118] sm:$0xff]
            %v1740 = vld [vmem:[#allocation7 + $0x120] sm:$0xff]
            %v1741 = vld [vmem:[#allocation7 + $0x128] sm:$0xff]
            %v1742 = vld [vmem:[#allocation7 + $0x130] sm:$0xff]
            %v1743 = vld [vmem:[#allocation7 + $0x138] sm:$0xff]
            %v1744 = vld [vmem:[#allocation7 + $0x140] sm:$0xff]
            %v1745 = vld [vmem:[#allocation7 + $0x148] sm:$0xff]
            %v1746 = vld [vmem:[#allocation7 + $0x150] sm:$0xff]
            %v1747 = vld [vmem:[#allocation7 + $0x158] sm:$0xff]
            %v1748 = vld [vmem:[#allocation7 + $0x160] sm:$0xff]
            %v1749 = vld [vmem:[#allocation7 + $0x168] sm:$0xff]
            %v1750 = vld [vmem:[#allocation7 + $0x170] sm:$0xff]
            %v1751 = vld [vmem:[#allocation7 + $0x178] sm:$0xff]
            %v1752 = vld [vmem:[#allocation7 + $0x180] sm:$0xff]
            %v1753 = vld [vmem:[#allocation7 + $0x188] sm:$0xff]
            %v1754 = vld [vmem:[#allocation7 + $0x190] sm:$0xff]
            %v1755 = vld [vmem:[#allocation7 + $0x198] sm:$0xff]
            %v1756 = vld [vmem:[#allocation7 + $0x1a0] sm:$0xff]
            %v1757 = vld [vmem:[#allocation7 + $0x1a8] sm:$0xff]
            %v1758 = vld [vmem:[#allocation7 + $0x1b0] sm:$0xff]
            %v1759 = vld [vmem:[#allocation7 + $0x1b8] sm:$0xff]
            %v1760 = vld [vmem:[#allocation7 + $0x1c0] sm:$0xff]
            %v1761 = vld [vmem:[#allocation7 + $0x1c8] sm:$0xff]
            %v1762 = vld [vmem:[#allocation7 + $0x1d0] sm:$0xff]
            %v1763 = vld [vmem:[#allocation7 + $0x1d8] sm:$0xff]
            %v1764 = vld [vmem:[#allocation7 + $0x1e0] sm:$0xff]
            %v1765 = vld [vmem:[#allocation7 + $0x1e8] sm:$0xff]
            %v1766 = vld [vmem:[#allocation7 + $0x1f0] sm:$0xff]
            %v1767 = vld [vmem:[#allocation7 + $0x1f8] sm:$0xff]
            %v1769 = vperm.slane %v1703, 0
            %v1770 = vperm.slane %v1703, 1
            %1773 = vmatpush.msra.mxu0 %v1734
            %1774 = vmatpush.msra.mxu0 %v1732
            %1775 = vmatpush.msra.mxu0 %v1730
            %1776 = vmatpush.msra.mxu0 %v1728
            %1777 = vmatpush.msra.mxu0 %v1726
            %1778 = vmatpush.msra.mxu0 %v1724
            %1779 = vmatpush.msra.mxu0 %v1722
            %1780 = vmatpush.msra.mxu0 %v1720
            %1781 = vmatpush.msra.mxu0 %v1718
            %1782 = vmatpush.msra.mxu0 %v1716
            %1783 = vmatpush.msra.mxu0 %v1714
            %1784 = vmatpush.msra.mxu0 %v1712
            %1785 = vmatpush.msra.mxu0 %v1710
            %1786 = vmatpush.msra.mxu0 %v1708
            %1787 = vmatpush.msra.mxu0 %v1706
            %1788 = vmatpush.msra.mxu0 %v1704
            %1789 = vmatmul.f32.gmra.mxu0 %v1769
            %v1790 = vpop.f32.mrf.mxu0
            %v1791 = vadd.f32 0.0, %v1790
            %1792 = vdwg.mxu0
            %1793 = vmatpush.msra.mxu0 %v1766
            %1794 = vmatpush.msra.mxu0 %v1764
            %1795 = vmatpush.msra.mxu0 %v1762
            %1796 = vmatpush.msra.mxu0 %v1760
            %1797 = vmatpush.msra.mxu0 %v1758
            %1798 = vmatpush.msra.mxu0 %v1756
            %1799 = vmatpush.msra.mxu0 %v1754
            %1800 = vmatpush.msra.mxu0 %v1752
            %1801 = vmatpush.msra.mxu0 %v1750
            %1802 = vmatpush.msra.mxu0 %v1748
            %1803 = vmatpush.msra.mxu0 %v1746
            %1804 = vmatpush.msra.mxu0 %v1744
            %1805 = vmatpush.msra.mxu0 %v1742
            %1806 = vmatpush.msra.mxu0 %v1740
            %1807 = vmatpush.msra.mxu0 %v1738
            %1808 = vmatpush.msra.mxu0 %v1736
            %1809 = vmatmul.f32.gmra.mxu0 %v1770
            %v1810 = vpop.f32.mrf.mxu0
            %v1811 = vadd.f32 %v1791, %v1810
            %1812 = vdwg.mxu0
            %1813 = vmatpush.msra.mxu0 %v1735
            %1814 = vmatpush.msra.mxu0 %v1733
            %1815 = vmatpush.msra.mxu0 %v1731
            %1816 = vmatpush.msra.mxu0 %v1729
            %1817 = vmatpush.msra.mxu0 %v1727
            %1818 = vmatpush.msra.mxu0 %v1725
            %1819 = vmatpush.msra.mxu0 %v1723
            %1820 = vmatpush.msra.mxu0 %v1721
            %1821 = vmatpush.msra.mxu0 %v1719
            %1822 = vmatpush.msra.mxu0 %v1717
            %1823 = vmatpush.msra.mxu0 %v1715
            %1824 = vmatpush.msra.mxu0 %v1713
            %1825 = vmatpush.msra.mxu0 %v1711
            %1826 = vmatpush.msra.mxu0 %v1709
            %1827 = vmatpush.msra.mxu0 %v1707
            %1828 = vmatpush.msra.mxu0 %v1705
            %1829 = vmatmul.f32.gmra.mxu0 %v1769
            %v1830 = vpop.f32.mrf.mxu0
            %v1831 = vadd.f32 0.0, %v1830
            %1832 = vdwg.mxu0
            %1833 = vmatpush.msra.mxu0 %v1767
            %1834 = vmatpush.msra.mxu0 %v1765
            %1835 = vmatpush.msra.mxu0 %v1763
            %1836 = vmatpush.msra.mxu0 %v1761
            %1837 = vmatpush.msra.mxu0 %v1759
            %1838 = vmatpush.msra.mxu0 %v1757
            %1839 = vmatpush.msra.mxu0 %v1755
            %1840 = vmatpush.msra.mxu0 %v1753
            %1841 = vmatpush.msra.mxu0 %v1751
            %1842 = vmatpush.msra.mxu0 %v1749
            %1843 = vmatpush.msra.mxu0 %v1747
            %1844 = vmatpush.msra.mxu0 %v1745
            %1845 = vmatpush.msra.mxu0 %v1743
            %1846 = vmatpush.msra.mxu0 %v1741
            %1847 = vmatpush.msra.mxu0 %v1739
            %1848 = vmatpush.msra.mxu0 %v1737
            %1849 = vmatmul.f32.gmra.mxu0 %v1770
            %v1850 = vpop.f32.mrf.mxu0
            %v1851 = vadd.f32 %v1831, %v1850
            %1852 = vdwg.mxu0
            %v1853 = vsub.f32 0.0, %v1811
            %v1854 = vsub.f32 0.0, %v1851
            %v1855 = vmul.f32 %v1853, 1.442695
            %v1856 = vpow.pop %v1855
            %v1857 = vmul.f32 %v1854, 1.442695
            %v1858 = vpow.pop %v1857
            %v1859 = vadd.f32 %v1856, 1.0
            %v1860 = vadd.f32 %v1858, 1.0
            %v1861 = vrcp.pop %v1859
            %v1862 = vmul.f32 %v1859, %v1861
            %v1863 = vsub.f32 1.0, %v1862
            %v1864 = vmul.f32 %v1861, %v1863
            %v1865 = vadd.f32 %v1861, %v1864
            %vm1866 = vweird.f32 %v1859
            %vm1867 = vweird.f32 %v1861
            %vm1868 = vmor %vm1866, %vm1867
            %v1869 = vsel %vm1868, %v1861, %v1865
            %v1870 = vand.u32 2147483647, %v1859
            %vm1871 = vcmp.eq.f32.partialorder %v1870, 8.507059e+37
            %v1872 = vand.u32 %v1859, 2147483648
            %v1873 = vor.u32 1.1754944e-38, %v1872
            %v1874 = vsel %vm1871, %v1873, %v1869
            %v1875 = vmul.f32 1.0, %v1874
            %v1876 = vrcp.pop %v1860
            %v1877 = vmul.f32 %v1860, %v1876
            %v1878 = vsub.f32 1.0, %v1877
            %v1879 = vmul.f32 %v1876, %v1878
            %v1880 = vadd.f32 %v1876, %v1879
            %vm1881 = vweird.f32 %v1860
            %vm1882 = vweird.f32 %v1876
            %vm1883 = vmor %vm1881, %vm1882
            %v1884 = vsel %vm1883, %v1876, %v1880
            %v1885 = vand.u32 2147483647, %v1860
            %vm1886 = vcmp.eq.f32.partialorder %v1885, 8.507059e+37
            %v1887 = vand.u32 %v1860, 2147483648
            %v1888 = vor.u32 1.1754944e-38, %v1887
            %v1889 = vsel %vm1886, %v1888, %v1884
            %v1890 = vmul.f32 1.0, %v1889
            %v1893 = vrot.slane %v1890, 7
            %v1894 = vsel %vm1690, %v1875, %v1893
            %1896 = vst.msk [vmem:[#allocation4] sm:$0x3] %vm1697, %v1894
          $region60: #{decoder_forward.3} parent=51 // pred_fallthru
            _
        $region52: #{decoder_forward.3} parent=39 // pred_fallthru
          _
        %p1897 = scmp.eq.s32.totalorder %s22, 1
        // Predicated region
        $region61: #{decoder_forward.3} parent=39 // pred_check
          %p1898 = pneg %p1897
        $region62: #{decoder_forward.3} parent=39 // pred_check_branch
          %1900 = sbr.rel (%p1898) target = $region64
        $region63: #{decoder_forward.3} parent=39 // pred_region
          %s1901 = sshra.s32 %s337, 3
          %s1902 = sand.u32 %s337, 7
          %s1903 = smul.u32 %s1901, 2
          %s1904 = smul.addr %s1903, 8
          %s1905 = scalar_lea.vmem [#allocation2], %s1904
          %v1906 = vld [vmem:[%s1905] sm:$0xff]
          %v1907 = vld [vmem:[%s1905 + $0x8] sm:$0xff]
          %v1908 = vld [vmem:[%s1905 + $0x10] sm:$0xff]
          %v1909 = vld [vmem:[%s1905 + $0x18] sm:$0xff]
          %v1910 = vld [vmem:[#allocation4] sm:$0x3]
          %v1912 = vperm.slane %v1910, 0
          %v1913 = vperm.slane %v1910, 1
          %v1916 = vmul.f32 %v1906, %v1912
          %v1917 = vmul.f32 %v1907, %v1913
          %v1918 = vmul.f32 %v1908, %v1912
          %v1919 = vmul.f32 %v1909, %v1913
          %v1920 = vadd.f32 %v1916, %v1906
          %v1921 = vadd.f32 %v1917, %v1907
          %v1922 = vadd.f32 %v1918, %v1908
          %v1923 = vadd.f32 %v1919, %v1909
          %1924 = vst [vmem:[%s334] sm:$0xff] %v1920
          %1925 = vst [vmem:[%s334 + $0x8] sm:$0xff] %v1921
          %1926 = vst [vmem:[%s334 + $0x10] sm:$0xff] %v1922
          %1927 = vst [vmem:[%s334 + $0x18] sm:$0xff] %v1923
        $region64: #{decoder_forward.3} parent=39 // pred_fallthru
          _
        %s1928 = smul.u32 %s23, %s22
        %s1929 = smul.u32 2, %s1928
        %p1930 = scmp.lt.s32.totalorder %s1929, 1
        %s1931 = scalar_select %p1930, %s1929, 1
        %s1932 = smul.addr %s1931, 2
        %s1933 = smul.addr %s1932, 8
        %s1934 = scalar_lea.vmem %s5, %s1933
        // Predicated region
        $region65: #{decoder_forward.3} parent=39 // pred_check
          %p1935 = pneg %p173
        $region66: #{decoder_forward.3} parent=39 // pred_check_branch
          %1937 = sbr.rel (%p1935) target = $region68
        $region67: #{decoder_forward.3} parent=39 // pred_region
          %s1938 = smul.u32 %s23, %s22
          %s1939 = smul.u32 2, %s1938
        $region68: #{decoder_forward.3} parent=39 // pred_fallthru
          _
      $region40: #{decoder_forward.3} parent=5 // pred_fallthru
        _
      %p1940 = scmp.le.s32.totalorder 2, %s13
      // Predicated region
      $region69: #{decoder_forward.3} parent=5 // pred_check
        %p1941 = pneg %p1940
      $region70: #{decoder_forward.3} parent=5 // pred_check_branch
        %1943 = sbr.rel (%p1941) target = $region72
      $region71: #{decoder_forward.3} parent=5 // pred_region
        %s1944 = ssub.s32 %s13, 2
        // Predicated region
        $region73: #{decoder_forward.3} parent=71 // pred_check
          %p1945 = pneg %p179
        $region74: #{decoder_forward.3} parent=71 // pred_check_branch
          %1947 = sbr.rel (%p1945) target = $region76
        $region75: #{decoder_forward.3} parent=71 // pred_region
          %s1948 = smul.u32 %s25, %s24
          %s1949 = smul.u32 2, %s1948
          %p1950 = scmp.lt.s32.totalorder %s1949, 1
          %s1951 = scalar_select %p1950, %s1949, 1
          %s1952 = smul.addr %s1951, 2
          %s1953 = smul.addr %s1952, 8
          %s1954 = scalar_lea.vmem %s5, %s1953
        $region76: #{decoder_forward.3} parent=71 // pred_fallthru
          _
      $region72: #{decoder_forward.3} parent=5 // pred_fallthru
        _
    $region6: #{decoder_forward.3} parent=1 // loop_footer
      %s17 = sadd.s32 1, %s13
    $region7: #{decoder_forward.3} parent=1 // loop_footer_branch
      %12 = sbr.rel target = $region3
    $region8: #{decoder_forward.3} parent=1 // loop_exit
      _
    %1955 = vsyncpa [#allocation6], 1
    %s1956 = scalar_lea.sflag [#allocation6], 1
    %1957 = vsyncpa %s1956, 1
    %1958 = vsyncpa [#allocation8], 1

// kernel: decoder_forward.5
$region0: #{decoder_forward.5}
  #allocation0 [shape = 'u32[]', space=smem, size = 0x4, offset = 0x4, fixed_abs, tag = 'smem constant byte address 0x4 - core index']
  #allocation1 [shape = 'u32[72,128]{1,0:T(1,128)}', space=vmem, size = 0x9000, scoped, tag = 'internal scratch']
  #allocation2 [shape = 'f32[256,128]{1,0:T(8,128)}', space=vmem, size = 0x20000, scoped, tag = 'scratch operand']
  #allocation3 [shape = 'f32[1,128]{1,0:T(1,128)}', space=vmem, size = 0x200, scoped, tag = 'scratch operand']
  #allocation4 [shape = 'f32[1,128]{1,0:T(1,128)}', space=vmem, size = 0x200, scoped, tag = 'scratch operand']
  %s0 = inlined_call_operand.vmem [shape: bf16[256,256], index: 0, kind: input, shape index: {}]
  %s1 = inlined_call_operand.vmem [shape: bf16[256,256], index: 1, kind: input, shape index: {}]
  %s2 = inlined_call_operand.vmem [shape: bf16[256,128], index: 2, kind: input, shape index: {}]
  %s3 = inlined_call_operand.vmem [shape: bf16[256,128], index: 3, kind: input, shape index: {}]
  %s4 = inlined_call_operand.vmem [shape: f32[128,128], index: 4, kind: input, shape index: {}]
  %s5 = inlined_call_operand.vmem [shape: bf16[128,128], index: 5, kind: input, shape index: {}]
  %s6 = inlined_call_operand.vmem [shape: f32[1,128], index: 6, kind: input, shape index: {}]
  %s7 = inlined_call_operand.vmem [shape: f32[256,128], index: 7, kind: output, shape index: {}]
  %s8 = sld [smem:[#allocation0]]
  $region77: #{decoder_forward.5} parent=0
    _
  %s10 = ssub.s32 1, %s8
  %s11 = scalar_select 0, %s10, %s8
  loop: start=0, step=1, limit=4
  $region2: #{decoder_forward.5} parent=0 // loop_pre_header
    _
  $region3: #{decoder_forward.5} parent=0 // loop_header
    %s13 = sphi 0, %s17
    %p14 = scmp.ge.s32.totalorder %s13, 4
    %s20 = sphi 0, %s32
    %s21 = sphi 0, %s28
    %s22 = sphi 0, %s20
    %s23 = sphi 0, %s21
    %s24 = sphi 0, %s22
    %s25 = sphi 0, %s23
    %s39 = sphi 0, %s41
    %s42 = sphi 0, %s39
    %s43 = sphi 0, %s42
    %s59 = sphi 0, %s43
    %s69 = sphi 0, %s71
    %s72 = sphi 0, %s69
    %s73 = sphi 0, %s72
    %s89 = sphi 0, %s73
    %s93 = sphi 0, %s93
    %s95 = sphi 0, %s93
    %s96 = sphi 0, %s95
    %s110 = sphi 0, %s96
    %s114 = sphi 0, %s114
    %s116 = sphi 0, %s114
    %s117 = sphi 0, %s116
    %s131 = sphi 0, %s117
    %s135 = sphi 0, %s135
    %s137 = sphi 0, %s135
    %s138 = sphi 0, %s137
    %s152 = sphi 0, %s138
    %s156 = sphi 0, %s156
    %s158 = sphi 0, %s156
    %s159 = sphi 0, %s158
    %s173 = sphi 0, %s159
    %s177 = sphi 0, %s177
    %s179 = sphi 0, %s177
    %s180 = sphi 0, %s179
    %s194 = sphi 0, %s180
    %s202 = sphi 0, %s204
    %s205 = sphi 0, %s202
    %s206 = sphi 0, %s205
    %s222 = sphi 0, %s206
  $region4: #{decoder_forward.5} parent=0 // loop_header_branch
    %16 = sbr.rel (%p14) target = $region8
  $region5: #{decoder_forward.5} parent=0 // loop_body
    %s18 = ssub.s32 %s13, 1
    %s19 = ssub.s32 %s13, 2
    %s26 = sadd.s32 1, %s21
    %p27 = scmp.ge.s32.totalorder %s26, 1
    %s28 = scalar_select %p27, 0, %s26
    %s29 = sadd.s32 1, %s20
    %s30 = scalar_select %p27, %s29, %s20
    %p31 = scmp.ge.s32.totalorder %s30, 2
    %s32 = scalar_select %p31, 0, %s30
    %s33 = ssub.s32 1, %s20
    %s34 = smul.u32 %s21, %s33
    %s35 = ssub.s32 1, %s32
    %s36 = smul.u32 %s28, %s35
    %s37 = ssub.s32 %s34, %s36
    %p38 = scmp.eq.s32.totalorder %s37, 0
    %s40 = sadd.s32 %s39, 1
    %s41 = scalar_select %p38, %s39, %s40
    %p44 = pneg %p38
    %p45 = scmp.eq.s32.totalorder %s13, 1
    %p46 = por %p44, %p45
    %p47 = scmp.ne.s32.totalorder %s39, %s42
    %p48 = scmp.eq.s32.totalorder %s13, 0
    %p49 = por %p47, %p48
    %p50 = scmp.ne.s32.totalorder %s39, %s42
    %p51 = scmp.eq.s32.totalorder %s18, 1
    %p52 = por %p50, %p51
    %p53 = scmp.ne.s32.totalorder %s42, %s43
    %p54 = scmp.eq.s32.totalorder %s18, 0
    %p55 = por %p53, %p54
    %p56 = scmp.ne.s32.totalorder %s42, %s43
    %p57 = scmp.eq.s32.totalorder %s19, 1
    %p58 = por %p56, %p57
    %p60 = scmp.ne.s32.totalorder %s43, %s59
    %p61 = scmp.eq.s32.totalorder %s19, 0
    %p62 = por %p60, %p61
    %s63 = ssub.s32 1, %s20
    %s64 = smul.u32 %s21, %s63
    %s65 = ssub.s32 1, %s32
    %s66 = smul.u32 %s28, %s65
    %s67 = ssub.s32 %s64, %s66
    %p68 = scmp.eq.s32.totalorder %s67, 0
    %s70 = sadd.s32 %s69, 1
    %s71 = scalar_select %p68, %s69, %s70
    %p74 = pneg %p68
    %p75 = scmp.eq.s32.totalorder %s13, 1
    %p76 = por %p74, %p75
    %p77 = scmp.ne.s32.totalorder %s69, %s72
    %p78 = scmp.eq.s32.totalorder %s13, 0
    %p79 = por %p77, %p78
    %p80 = scmp.ne.s32.totalorder %s69, %s72
    %p81 = scmp.eq.s32.totalorder %s18, 1
    %p82 = por %p80, %p81
    %p83 = scmp.ne.s32.totalorder %s72, %s73
    %p84 = scmp.eq.s32.totalorder %s18, 0
    %p85 = por %p83, %p84
    %p86 = scmp.ne.s32.totalorder %s72, %s73
    %p87 = scmp.eq.s32.totalorder %s19, 1
    %p88 = por %p86, %p87
    %p90 = scmp.ne.s32.totalorder %s73, %s89
    %p91 = scmp.eq.s32.totalorder %s19, 0
    %p92 = por %p90, %p91
    %s94 = sadd.s32 %s93, 1
    %p97 = scmp.eq.s32.totalorder %s13, 1
    %p98 = scmp.ne.s32.totalorder %s93, %s95
    %p99 = scmp.eq.s32.totalorder %s13, 0
    %p100 = por %p98, %p99
    %p101 = scmp.ne.s32.totalorder %s93, %s95
    %p102 = scmp.eq.s32.totalorder %s18, 1
    %p103 = por %p101, %p102
    %p104 = scmp.ne.s32.totalorder %s95, %s96
    %p105 = scmp.eq.s32.totalorder %s18, 0
    %p106 = por %p104, %p105
    %p107 = scmp.ne.s32.totalorder %s95, %s96
    %p108 = scmp.eq.s32.totalorder %s19, 1
    %p109 = por %p107, %p108
    %p111 = scmp.ne.s32.totalorder %s96, %s110
    %p112 = scmp.eq.s32.totalorder %s19, 0
    %p113 = por %p111, %p112
    %s115 = sadd.s32 %s114, 1
    %p118 = scmp.eq.s32.totalorder %s13, 1
    %p119 = scmp.ne.s32.totalorder %s114, %s116
    %p120 = scmp.eq.s32.totalorder %s13, 0
    %p121 = por %p119, %p120
    %p122 = scmp.ne.s32.totalorder %s114, %s116
    %p123 = scmp.eq.s32.totalorder %s18, 1
    %p124 = por %p122, %p123
    %p125 = scmp.ne.s32.totalorder %s116, %s117
    %p126 = scmp.eq.s32.totalorder %s18, 0
    %p127 = por %p125, %p126
    %p128 = scmp.ne.s32.totalorder %s116, %s117
    %p129 = scmp.eq.s32.totalorder %s19, 1
    %p130 = por %p128, %p129
    %p132 = scmp.ne.s32.totalorder %s117, %s131
    %p133 = scmp.eq.s32.totalorder %s19, 0
    %p134 = por %p132, %p133
    %s136 = sadd.s32 %s135, 1
    %p139 = scmp.eq.s32.totalorder %s13, 1
    %p140 = scmp.ne.s32.totalorder %s135, %s137
    %p141 = scmp.eq.s32.totalorder %s13, 0
    %p142 = por %p140, %p141
    %p143 = scmp.ne.s32.totalorder %s135, %s137
    %p144 = scmp.eq.s32.totalorder %s18, 1
    %p145 = por %p143, %p144
    %p146 = scmp.ne.s32.totalorder %s137, %s138
    %p147 = scmp.eq.s32.totalorder %s18, 0
    %p148 = por %p146, %p147
    %p149 = scmp.ne.s32.totalorder %s137, %s138
    %p150 = scmp.eq.s32.totalorder %s19, 1
    %p151 = por %p149, %p150
    %p153 = scmp.ne.s32.totalorder %s138, %s152
    %p154 = scmp.eq.s32.totalorder %s19, 0
    %p155 = por %p153, %p154
    %s157 = sadd.s32 %s156, 1
    %p160 = scmp.eq.s32.totalorder %s13, 1
    %p161 = scmp.ne.s32.totalorder %s156, %s158
    %p162 = scmp.eq.s32.totalorder %s13, 0
    %p163 = por %p161, %p162
    %p164 = scmp.ne.s32.totalorder %s156, %s158
    %p165 = scmp.eq.s32.totalorder %s18, 1
    %p166 = por %p164, %p165
    %p167 = scmp.ne.s32.totalorder %s158, %s159
    %p168 = scmp.eq.s32.totalorder %s18, 0
    %p169 = por %p167, %p168
    %p170 = scmp.ne.s32.totalorder %s158, %s159
    %p171 = scmp.eq.s32.totalorder %s19, 1
    %p172 = por %p170, %p171
    %p174 = scmp.ne.s32.totalorder %s159, %s173
    %p175 = scmp.eq.s32.totalorder %s19, 0
    %p176 = por %p174, %p175
    %s178 = sadd.s32 %s177, 1
    %p181 = scmp.eq.s32.totalorder %s13, 1
    %p182 = scmp.ne.s32.totalorder %s177, %s179
    %p183 = scmp.eq.s32.totalorder %s13, 0
    %p184 = por %p182, %p183
    %p185 = scmp.ne.s32.totalorder %s177, %s179
    %p186 = scmp.eq.s32.totalorder %s18, 1
    %p187 = por %p185, %p186
    %p188 = scmp.ne.s32.totalorder %s179, %s180
    %p189 = scmp.eq.s32.totalorder %s18, 0
    %p190 = por %p188, %p189
    %p191 = scmp.ne.s32.totalorder %s179, %s180
    %p192 = scmp.eq.s32.totalorder %s19, 1
    %p193 = por %p191, %p192
    %p195 = scmp.ne.s32.totalorder %s180, %s194
    %p196 = scmp.eq.s32.totalorder %s19, 0
    %p197 = por %p195, %p196
    %s198 = smul.u32 %s21, %s20
    %s199 = smul.u32 %s28, %s32
    %s200 = ssub.s32 %s198, %s199
    %p201 = scmp.eq.s32.totalorder %s200, 0
    %s203 = sadd.s32 %s202, 1
    %s204 = scalar_select %p201, %s202, %s203
    %p207 = pneg %p201
    %p208 = scmp.eq.s32.totalorder %s13, 1
    %p209 = por %p207, %p208
    %p210 = scmp.ne.s32.totalorder %s202, %s205
    %p211 = scmp.eq.s32.totalorder %s13, 0
    %p212 = por %p210, %p211
    %p213 = scmp.ne.s32.totalorder %s202, %s205
    %p214 = scmp.eq.s32.totalorder %s18, 1
    %p215 = por %p213, %p214
    %p216 = scmp.ne.s32.totalorder %s205, %s206
    %p217 = scmp.eq.s32.totalorder %s18, 0
    %p218 = por %p216, %p217
    %p219 = scmp.ne.s32.totalorder %s205, %s206
    %p220 = scmp.eq.s32.totalorder %s19, 1
    %p221 = por %p219, %p220
    %p223 = scmp.ne.s32.totalorder %s206, %s222
    %p224 = scmp.eq.s32.totalorder %s19, 0
    %p225 = por %p223, %p224
    %p226 = scmp.le.s32.totalorder 1, %s13
    %p227 = scmp.lt.s32.totalorder %s13, 3
    %p228 = pnand %p226, %p227
    %p229 = pneg %p228
    // Predicated region
    $region9: #{decoder_forward.5} parent=5 // pred_check
      _
    $region10: #{decoder_forward.5} parent=5 // pred_check_branch
      %231 = sbr.rel (%p228) target = $region12
    $region11: #{decoder_forward.5} parent=5 // pred_region
      %s232 = ssub.s32 %s13, 1
      // Predicated region
      $region13: #{decoder_forward.5} parent=11 // pred_check
        %p233 = pneg %p106
      $region14: #{decoder_forward.5} parent=11 // pred_check_branch
        %235 = sbr.rel (%p233) target = $region16
      $region15: #{decoder_forward.5} parent=11 // pred_region
        _
      $region16: #{decoder_forward.5} parent=11 // pred_fallthru
        _
      // Predicated region
      $region17: #{decoder_forward.5} parent=11 // pred_check
        %p236 = pneg %p127
      $region18: #{decoder_forward.5} parent=11 // pred_check_branch
        %238 = sbr.rel (%p236) target = $region20
      $region19: #{decoder_forward.5} parent=11 // pred_region
        _
      $region20: #{decoder_forward.5} parent=11 // pred_fallthru
        _
      // Predicated region
      $region21: #{decoder_forward.5} parent=11 // pred_check
        %p239 = pneg %p148
      $region22: #{decoder_forward.5} parent=11 // pred_check_branch
        %241 = sbr.rel (%p239) target = $region24
      $region23: #{decoder_forward.5} parent=11 // pred_region
        _
      $region24: #{decoder_forward.5} parent=11 // pred_fallthru
        _
      // Predicated region
      $region25: #{decoder_forward.5} parent=11 // pred_check
        %p242 = pneg %p169
      $region26: #{decoder_forward.5} parent=11 // pred_check_branch
        %244 = sbr.rel (%p242) target = $region28
      $region27: #{decoder_forward.5} parent=11 // pred_region
        _
      $region28: #{decoder_forward.5} parent=11 // pred_fallthru
        _
      // Predicated region
      $region29: #{decoder_forward.5} parent=11 // pred_check
        %p245 = pneg %p190
      $region30: #{decoder_forward.5} parent=11 // pred_check_branch
        %247 = sbr.rel (%p245) target = $region32
      $region31: #{decoder_forward.5} parent=11 // pred_region
        _
      $region32: #{decoder_forward.5} parent=11 // pred_fallthru
        _
    $region12: #{decoder_forward.5} parent=5 // pred_fallthru
      _
    %p248 = scmp.lt.s32.totalorder %s13, 2
    // Predicated region
    $region33: #{decoder_forward.5} parent=5 // pred_check
      %p249 = pneg %p248
    $region34: #{decoder_forward.5} parent=5 // pred_check_branch
      %251 = sbr.rel (%p249) target = $region36
    $region35: #{decoder_forward.5} parent=5 // pred_region
      // Predicated region
      $region37: #{decoder_forward.5} parent=35 // pred_check
        %p252 = pneg %p49
      $region38: #{decoder_forward.5} parent=35 // pred_check_branch
        %254 = sbr.rel (%p252) target = $region40
      $region39: #{decoder_forward.5} parent=35 // pred_region
        %s255 = ssub.s32 1, %s20
        %s256 = smul.u32 %s21, %s255
        %s257 = smul.u32 32, %s256
        %p258 = scmp.lt.s32.totalorder %s257, 31
        %s259 = scalar_select %p258, %s257, 31
        %s260 = smul.addr %s259, 2
        %s261 = smul.addr %s260, 4
        %s262 = scalar_lea.vmem %s0, %s261
        %s263 = ssub.s32 1, %s20
        %s264 = smul.u32 %s21, %s263
        %s265 = smul.u32 32, %s264
      $region40: #{decoder_forward.5} parent=35 // pred_fallthru
        _
      // Predicated region
      $region41: #{decoder_forward.5} parent=35 // pred_check
        %p266 = pneg %p79
      $region42: #{decoder_forward.5} parent=35 // pred_check_branch
        %268 = sbr.rel (%p266) target = $region44
      $region43: #{decoder_forward.5} parent=35 // pred_region
        %s269 = ssub.s32 1, %s20
        %s270 = smul.u32 %s21, %s269
        %s271 = smul.u32 32, %s270
        %p272 = scmp.lt.s32.totalorder %s271, 31
        %s273 = scalar_select %p272, %s271, 31
        %s274 = smul.addr %s273, 2
        %s275 = smul.addr %s274, 4
        %s276 = scalar_lea.vmem %s1, %s275
        %s277 = ssub.s32 1, %s20
        %s278 = smul.u32 %s21, %s277
        %s279 = smul.u32 32, %s278
      $region44: #{decoder_forward.5} parent=35 // pred_fallthru
        _
    $region36: #{decoder_forward.5} parent=5 // pred_fallthru
      _
    %p280 = scmp.le.s32.totalorder 1, %s13
    %p281 = scmp.lt.s32.totalorder %s13, 3
    %p282 = pnand %p280, %p281
    %p283 = pneg %p282
    // Predicated region
    $region45: #{decoder_forward.5} parent=5 // pred_check
      _
    $region46: #{decoder_forward.5} parent=5 // pred_check_branch
      %285 = sbr.rel (%p282) target = $region48
    $region47: #{decoder_forward.5} parent=5 // pred_region
      %s286 = ssub.s32 %s13, 1
      %s287 = ssub.s32 1, %s22
      %s288 = smul.u32 %s23, %s287
      %s289 = smul.u32 32, %s288
      %p290 = scmp.lt.s32.totalorder %s289, 31
      %s291 = scalar_select %p290, %s289, 31
      %s292 = smul.addr %s291, 2
      %s293 = smul.addr %s292, 4
      %s294 = scalar_lea.vmem %s0, %s293
      %p295 = pneg %p55
      %p296 = pneg %p52
      %s297 = ssub.s32 1, %s22
      %s298 = smul.u32 %s23, %s297
      %s299 = smul.u32 32, %s298
      %p300 = scmp.lt.s32.totalorder %s299, 31
      %s301 = scalar_select %p300, %s299, 31
      %s302 = smul.addr %s301, 2
      %s303 = smul.addr %s302, 4
      %s304 = scalar_lea.vmem %s1, %s303
      %p305 = pneg %p85
      %p306 = pneg %p82
      %p307 = pneg %p106
      %p308 = pneg %p103
      %p309 = pneg %p127
      %p310 = pneg %p124
      %p311 = pneg %p148
      %p312 = pneg %p145
      %p313 = pneg %p169
      %p314 = pneg %p166
      %p315 = pneg %p190
      %p316 = pneg %p187
      %p317 = pneg %p218
      %p318 = pneg %p215
      %s319 = smul.u32 %s23, %s22
      %s320 = smul.u32 32, %s319
      %p321 = scmp.lt.s32.totalorder %s320, 31
      %s322 = scalar_select %p321, %s320, 31
      %s323 = smul.addr %s322, 8
      %s324 = scalar_lea.vmem %s7, %s323
      %s325 = ssub.s32 1, %s22
      %s326 = smul.u32 %s23, %s325
      %s327 = smul.u32 32, %s326
      %p328 = scmp.lt.s32.totalorder %s327, 31
      %s329 = scalar_select %p328, %s327, 31
      %s330 = smul.addr %s329, 2
      %s331 = smul.addr %s330, 4
      %s332 = scalar_lea.vmem %s0, %s331
      %s333 = ssub.s32 1, %s22
      %s334 = smul.u32 %s23, %s333
      %s335 = smul.u32 32, %s334
      %s336 = ssub.s32 1, %s22
      %s337 = smul.u32 %s23, %s336
      %s338 = smul.u32 32, %s337
      %p339 = scmp.lt.s32.totalorder %s338, 31
      %s340 = scalar_select %p339, %s338, 31
      %s341 = smul.addr %s340, 2
      %s342 = smul.addr %s341, 4
      %s343 = scalar_lea.vmem %s1, %s342
      %s344 = ssub.s32 1, %s22
      %s345 = smul.u32 %s23, %s344
      %s346 = smul.u32 32, %s345
      %s347 = smul.u32 %s23, %s22
      %s348 = smul.u32 32, %s347
      %p349 = scmp.lt.s32.totalorder %s348, 31
      %s350 = scalar_select %p349, %s348, 31
      %s351 = smul.addr %s350, 8
      %s352 = scalar_lea.vmem %s7, %s351
      %s353 = smul.u32 %s23, %s22
      %s354 = smul.u32 32, %s353
      %s355 = smul.u32 %s23, 256
      %p356 = scmp.eq.s32.totalorder %s22, 0
      // Predicated region
      $region49: #{decoder_forward.5} parent=47 // pred_check
        %p357 = pneg %p356
      $region50: #{decoder_forward.5} parent=47 // pred_check_branch
        %359 = sbr.rel (%p357) target = $region52
      $region51: #{decoder_forward.5} parent=47 // pred_region
        %p360 = scmp.eq.s32.totalorder %s23, 0
        // Predicated region
        $region53: #{decoder_forward.5} parent=51 // pred_check
          %p361 = pneg %p360
        $region54: #{decoder_forward.5} parent=51 // pred_check_branch
          %363 = sbr.rel (%p361) target = $region56
        $region55: #{decoder_forward.5} parent=51 // pred_region
          %364 = vst [vmem:[#allocation3] sm:$0x1] 0.0
        $region56: #{decoder_forward.5} parent=51 // pred_fallthru
          _
        %v365 = vld [vmem:[%s332] sm:$0xff]
        %v366 = vld [vmem:[%s332 + $0x8] sm:$0xff]
        %v367 = vld [vmem:[%s332 + $0x10] sm:$0xff]
        %v368 = vld [vmem:[%s332 + $0x18] sm:$0xff]
        %v369 = vld [vmem:[%s332 + $0x20] sm:$0xff]
        %v370 = vld [vmem:[%s332 + $0x28] sm:$0xff]
        %v371 = vld [vmem:[%s332 + $0x30] sm:$0xff]
        %v372 = vld [vmem:[%s332 + $0x38] sm:$0xff]
        %v373 = vld [vmem:[%s332 + $0x40] sm:$0xff]
        %v374 = vld [vmem:[%s332 + $0x48] sm:$0xff]
        %v375 = vld [vmem:[%s332 + $0x50] sm:$0xff]
        %v376 = vld [vmem:[%s332 + $0x58] sm:$0xff]
        %v377 = vld [vmem:[%s332 + $0x60] sm:$0xff]
        %v378 = vld [vmem:[%s332 + $0x68] sm:$0xff]
        %v379 = vld [vmem:[%s332 + $0x70] sm:$0xff]
        %v380 = vld [vmem:[%s332 + $0x78] sm:$0xff]
        %v381 = vld [vmem:[%s332 + $0x80] sm:$0xff]
        %v382 = vld [vmem:[%s332 + $0x88] sm:$0xff]
        %v383 = vld [vmem:[%s332 + $0x90] sm:$0xff]
        %v384 = vld [vmem:[%s332 + $0x98] sm:$0xff]
        %v385 = vld [vmem:[%s332 + $0xa0] sm:$0xff]
        %v386 = vld [vmem:[%s332 + $0xa8] sm:$0xff]
        %v387 = vld [vmem:[%s332 + $0xb0] sm:$0xff]
        %v388 = vld [vmem:[%s332 + $0xb8] sm:$0xff]
        %v389 = vld [vmem:[%s332 + $0xc0] sm:$0xff]
        %v390 = vld [vmem:[%s332 + $0xc8] sm:$0xff]
        %v391 = vld [vmem:[%s332 + $0xd0] sm:$0xff]
        %v392 = vld [vmem:[%s332 + $0xd8] sm:$0xff]
        %v393 = vld [vmem:[%s332 + $0xe0] sm:$0xff]
        %v394 = vld [vmem:[%s332 + $0xe8] sm:$0xff]
        %v395 = vld [vmem:[%s332 + $0xf0] sm:$0xff]
        %v396 = vld [vmem:[%s332 + $0xf8] sm:$0xff]
        %v397 = vld [vmem:[%s2] sm:$0xf]
        %v398 = vld [vmem:[%s2 + $0x4] sm:$0xf]
        %v399 = vld [vmem:[%s2 + $0x8] sm:$0xf]
        %v400 = vld [vmem:[%s2 + $0xc] sm:$0xf]
        %v401 = vld [vmem:[%s2 + $0x10] sm:$0xf]
        %v402 = vld [vmem:[%s2 + $0x14] sm:$0xf]
        %v403 = vld [vmem:[%s2 + $0x18] sm:$0xf]
        %v404 = vld [vmem:[%s2 + $0x1c] sm:$0xf]
        %v405 = vld [vmem:[%s2 + $0x20] sm:$0xf]
        %v406 = vld [vmem:[%s2 + $0x24] sm:$0xf]
        %v407 = vld [vmem:[%s2 + $0x28] sm:$0xf]
        %v408 = vld [vmem:[%s2 + $0x2c] sm:$0xf]
        %v409 = vld [vmem:[%s2 + $0x30] sm:$0xf]
        %v410 = vld [vmem:[%s2 + $0x34] sm:$0xf]
        %v411 = vld [vmem:[%s2 + $0x38] sm:$0xf]
        %v412 = vld [vmem:[%s2 + $0x3c] sm:$0xf]
        %v413 = vld [vmem:[%s2 + $0x40] sm:$0xf]
        %v414 = vld [vmem:[%s2 + $0x44] sm:$0xf]
        %v415 = vld [vmem:[%s2 + $0x48] sm:$0xf]
        %v416 = vld [vmem:[%s2 + $0x4c] sm:$0xf]
        %v417 = vld [vmem:[%s2 + $0x50] sm:$0xf]
        %v418 = vld [vmem:[%s2 + $0x54] sm:$0xf]
        %v419 = vld [vmem:[%s2 + $0x58] sm:$0xf]
        %v420 = vld [vmem:[%s2 + $0x5c] sm:$0xf]
        %v421 = vld [vmem:[%s2 + $0x60] sm:$0xf]
        %v422 = vld [vmem:[%s2 + $0x64] sm:$0xf]
        %v423 = vld [vmem:[%s2 + $0x68] sm:$0xf]
        %v424 = vld [vmem:[%s2 + $0x6c] sm:$0xf]
        %v425 = vld [vmem:[%s2 + $0x70] sm:$0xf]
        %v426 = vld [vmem:[%s2 + $0x74] sm:$0xf]
        %v427 = vld [vmem:[%s2 + $0x78] sm:$0xf]
        %v428 = vld [vmem:[%s2 + $0x7c] sm:$0xf]
        %v461 = vunpack.c.l.b16 %v365
        %v462 = vunpack.c.h.b16 %v365
        %v463 = vunpack.c.l.b16 %v366
        %v464 = vunpack.c.h.b16 %v366
        %v465 = vunpack.c.l.b16 %v367
        %v466 = vunpack.c.h.b16 %v367
        %v467 = vunpack.c.l.b16 %v368
        %v468 = vunpack.c.h.b16 %v368
        %v469 = vunpack.c.l.b16 %v369
        %v470 = vunpack.c.h.b16 %v369
        %v471 = vunpack.c.l.b16 %v370
        %v472 = vunpack.c.h.b16 %v370
        %v473 = vunpack.c.l.b16 %v371
        %v474 = vunpack.c.h.b16 %v371
        %v475 = vunpack.c.l.b16 %v372
        %v476 = vunpack.c.h.b16 %v372
        %v477 = vunpack.c.l.b16 %v373
        %v478 = vunpack.c.h.b16 %v373
        %v479 = vunpack.c.l.b16 %v374
        %v480 = vunpack.c.h.b16 %v374
        %v481 = vunpack.c.l.b16 %v375
        %v482 = vunpack.c.h.b16 %v375
        %v483 = vunpack.c.l.b16 %v376
        %v484 = vunpack.c.h.b16 %v376
        %v485 = vunpack.c.l.b16 %v377
        %v486 = vunpack.c.h.b16 %v377
        %v487 = vunpack.c.l.b16 %v378
        %v488 = vunpack.c.h.b16 %v378
        %v489 = vunpack.c.l.b16 %v379
        %v490 = vunpack.c.h.b16 %v379
        %v491 = vunpack.c.l.b16 %v380
        %v492 = vunpack.c.h.b16 %v380
        %v493 = vunpack.c.l.b16 %v381
        %v494 = vunpack.c.h.b16 %v381
        %v495 = vunpack.c.l.b16 %v382
        %v496 = vunpack.c.h.b16 %v382
        %v497 = vunpack.c.l.b16 %v383
        %v498 = vunpack.c.h.b16 %v383
        %v499 = vunpack.c.l.b16 %v384
        %v500 = vunpack.c.h.b16 %v384
        %v501 = vunpack.c.l.b16 %v385
        %v502 = vunpack.c.h.b16 %v385
        %v503 = vunpack.c.l.b16 %v386
        %v504 = vunpack.c.h.b16 %v386
        %v505 = vunpack.c.l.b16 %v387
        %v506 = vunpack.c.h.b16 %v387
        %v507 = vunpack.c.l.b16 %v388
        %v508 = vunpack.c.h.b16 %v388
        %v509 = vunpack.c.l.b16 %v389
        %v510 = vunpack.c.h.b16 %v389
        %v511 = vunpack.c.l.b16 %v390
        %v512 = vunpack.c.h.b16 %v390
        %v513 = vunpack.c.l.b16 %v391
        %v514 = vunpack.c.h.b16 %v391
        %v515 = vunpack.c.l.b16 %v392
        %v516 = vunpack.c.h.b16 %v392
        %v517 = vunpack.c.l.b16 %v393
        %v518 = vunpack.c.h.b16 %v393
        %v519 = vunpack.c.l.b16 %v394
        %v520 = vunpack.c.h.b16 %v394
        %v521 = vunpack.c.l.b16 %v395
        %v522 = vunpack.c.h.b16 %v395
        %v523 = vunpack.c.l.b16 %v396
        %v524 = vunpack.c.h.b16 %v396
        %v525 = vpack.c.b16 %v463, %v461
        %v526 = vpack.c.b16 %v464, %v462
        %v527 = vpack.c.b16 %v467, %v465
        %v528 = vpack.c.b16 %v468, %v466
        %v529 = vpack.c.b16 %v471, %v469
        %v530 = vpack.c.b16 %v472, %v470
        %v531 = vpack.c.b16 %v475, %v473
        %v532 = vpack.c.b16 %v476, %v474
        %v533 = vpack.c.b16 %v479, %v477
        %v534 = vpack.c.b16 %v480, %v478
        %v535 = vpack.c.b16 %v483, %v481
        %v536 = vpack.c.b16 %v484, %v482
        %v537 = vpack.c.b16 %v487, %v485
        %v538 = vpack.c.b16 %v488, %v486
        %v539 = vpack.c.b16 %v491, %v489
        %v540 = vpack.c.b16 %v492, %v490
        %v541 = vpack.c.b16 %v495, %v493
        %v542 = vpack.c.b16 %v496, %v494
        %v543 = vpack.c.b16 %v499, %v497
        %v544 = vpack.c.b16 %v500, %v498
        %v545 = vpack.c.b16 %v503, %v501
        %v546 = vpack.c.b16 %v504, %v502
        %v547 = vpack.c.b16 %v507, %v505
        %v548 = vpack.c.b16 %v508, %v506
        %v549 = vpack.c.b16 %v511, %v509
        %v550 = vpack.c.b16 %v512, %v510
        %v551 = vpack.c.b16 %v515, %v513
        %v552 = vpack.c.b16 %v516, %v514
        %v553 = vpack.c.b16 %v519, %v517
        %v554 = vpack.c.b16 %v520, %v518
        %v555 = vpack.c.b16 %v523, %v521
        %v556 = vpack.c.b16 %v524, %v522
        %v621 = vunpack.c.l.b16 %v397
        %v622 = vunpack.c.l.b16 %v398
        %v623 = vunpack.c.l.b16 %v399
        %v624 = vunpack.c.l.b16 %v400
        %v625 = vunpack.c.l.b16 %v401
        %v626 = vunpack.c.l.b16 %v402
        %v627 = vunpack.c.l.b16 %v403
        %v628 = vunpack.c.l.b16 %v404
        %v629 = vunpack.c.l.b16 %v405
        %v630 = vunpack.c.l.b16 %v406
        %v631 = vunpack.c.l.b16 %v407
        %v632 = vunpack.c.l.b16 %v408
        %v633 = vunpack.c.l.b16 %v409
        %v634 = vunpack.c.l.b16 %v410
        %v635 = vunpack.c.l.b16 %v411
        %v636 = vunpack.c.l.b16 %v412
        %v637 = vunpack.c.l.b16 %v413
        %v638 = vunpack.c.l.b16 %v414
        %v639 = vunpack.c.l.b16 %v415
        %v640 = vunpack.c.l.b16 %v416
        %v641 = vunpack.c.l.b16 %v417
        %v642 = vunpack.c.l.b16 %v418
        %v643 = vunpack.c.l.b16 %v419
        %v644 = vunpack.c.l.b16 %v420
        %v645 = vunpack.c.l.b16 %v421
        %v646 = vunpack.c.l.b16 %v422
        %v647 = vunpack.c.l.b16 %v423
        %v648 = vunpack.c.l.b16 %v424
        %v649 = vunpack.c.l.b16 %v425
        %v650 = vunpack.c.l.b16 %v426
        %v651 = vunpack.c.l.b16 %v427
        %v652 = vunpack.c.l.b16 %v428
        %v653 = vpack.c.b16 %v622, %v621
        %v654 = vpack.c.b16 %v624, %v623
        %v655 = vpack.c.b16 %v626, %v625
        %v656 = vpack.c.b16 %v628, %v627
        %v657 = vpack.c.b16 %v630, %v629
        %v658 = vpack.c.b16 %v632, %v631
        %v659 = vpack.c.b16 %v634, %v633
        %v660 = vpack.c.b16 %v636, %v635
        %v661 = vpack.c.b16 %v638, %v637
        %v662 = vpack.c.b16 %v640, %v639
        %v663 = vpack.c.b16 %v642, %v641
        %v664 = vpack.c.b16 %v644, %v643
        %v665 = vpack.c.b16 %v646, %v645
        %v666 = vpack.c.b16 %v648, %v647
        %v667 = vpack.c.b16 %v650, %v649
        %v668 = vpack.c.b16 %v652, %v651
        %685 = vmatpush.bf16.msra.mxu0 %v660
        %686 = vmatpush.bf16.msra.mxu0 %v659
        %687 = vmatpush.bf16.msra.mxu0 %v658
        %688 = vmatpush.bf16.msra.mxu0 %v657
        %689 = vmatpush.bf16.msra.mxu0 %v656
        %690 = vmatpush.bf16.msra.mxu0 %v655
        %691 = vmatpush.bf16.msra.mxu0 %v654
        %692 = vmatpush.bf16.msra.mxu0 %v653
        %693 = vmatmul.bf16.gmra.mxu0 %v525
        %v694 = vpop.f32.mrf.mxu0
        %v695 = vadd.f32 0.0, %v694
        %v696 = vpop.f32.mrf.mxu0
        %v697 = vadd.f32 0.0, %v696
        %698 = vmatmul.bf16.gmra.mxu0 %v527
        %v699 = vpop.f32.mrf.mxu0
        %v700 = vadd.f32 0.0, %v699
        %v701 = vpop.f32.mrf.mxu0
        %v702 = vadd.f32 0.0, %v701
        %703 = vmatmul.bf16.gmra.mxu0 %v529
        %v704 = vpop.f32.mrf.mxu0
        %v705 = vadd.f32 0.0, %v704
        %v706 = vpop.f32.mrf.mxu0
        %v707 = vadd.f32 0.0, %v706
        %708 = vmatmul.bf16.gmra.mxu0 %v531
        %v709 = vpop.f32.mrf.mxu0
        %v710 = vadd.f32 0.0, %v709
        %v711 = vpop.f32.mrf.mxu0
        %v712 = vadd.f32 0.0, %v711
        %713 = vmatmul.bf16.gmra.mxu0 %v533
        %v714 = vpop.f32.mrf.mxu0
        %v715 = vadd.f32 0.0, %v714
        %v716 = vpop.f32.mrf.mxu0
        %v717 = vadd.f32 0.0, %v716
        %718 = vmatmul.bf16.gmra.mxu0 %v535
        %v719 = vpop.f32.mrf.mxu0
        %v720 = vadd.f32 0.0, %v719
        %v721 = vpop.f32.mrf.mxu0
        %v722 = vadd.f32 0.0, %v721
        %723 = vmatmul.bf16.gmra.mxu0 %v537
        %v724 = vpop.f32.mrf.mxu0
        %v725 = vadd.f32 0.0, %v724
        %v726 = vpop.f32.mrf.mxu0
        %v727 = vadd.f32 0.0, %v726
        %728 = vmatmul.bf16.gmra.mxu0 %v539
        %v729 = vpop.f32.mrf.mxu0
        %v730 = vadd.f32 0.0, %v729
        %v731 = vpop.f32.mrf.mxu0
        %v732 = vadd.f32 0.0, %v731
        %733 = vmatmul.bf16.gmra.mxu0 %v541
        %v734 = vpop.f32.mrf.mxu0
        %v735 = vadd.f32 0.0, %v734
        %v736 = vpop.f32.mrf.mxu0
        %v737 = vadd.f32 0.0, %v736
        %738 = vmatmul.bf16.gmra.mxu0 %v543
        %v739 = vpop.f32.mrf.mxu0
        %v740 = vadd.f32 0.0, %v739
        %v741 = vpop.f32.mrf.mxu0
        %v742 = vadd.f32 0.0, %v741
        %743 = vmatmul.bf16.gmra.mxu0 %v545
        %v744 = vpop.f32.mrf.mxu0
        %v745 = vadd.f32 0.0, %v744
        %v746 = vpop.f32.mrf.mxu0
        %v747 = vadd.f32 0.0, %v746
        %748 = vmatmul.bf16.gmra.mxu0 %v547
        %v749 = vpop.f32.mrf.mxu0
        %v750 = vadd.f32 0.0, %v749
        %v751 = vpop.f32.mrf.mxu0
        %v752 = vadd.f32 0.0, %v751
        %753 = vmatmul.bf16.gmra.mxu0 %v549
        %v754 = vpop.f32.mrf.mxu0
        %v755 = vadd.f32 0.0, %v754
        %v756 = vpop.f32.mrf.mxu0
        %v757 = vadd.f32 0.0, %v756
        %758 = vmatmul.bf16.gmra.mxu0 %v551
        %v759 = vpop.f32.mrf.mxu0
        %v760 = vadd.f32 0.0, %v759
        %v761 = vpop.f32.mrf.mxu0
        %v762 = vadd.f32 0.0, %v761
        %763 = vmatmul.bf16.gmra.mxu0 %v553
        %v764 = vpop.f32.mrf.mxu0
        %v765 = vadd.f32 0.0, %v764
        %v766 = vpop.f32.mrf.mxu0
        %v767 = vadd.f32 0.0, %v766
        %768 = vmatmul.bf16.gmra.mxu0 %v555
        %v769 = vpop.f32.mrf.mxu0
        %v770 = vadd.f32 0.0, %v769
        %v771 = vpop.f32.mrf.mxu0
        %v772 = vadd.f32 0.0, %v771
        %773 = vdwg.mxu0
        %774 = vmatpush.bf16.msra.mxu0 %v668
        %775 = vmatpush.bf16.msra.mxu0 %v667
        %776 = vmatpush.bf16.msra.mxu0 %v666
        %777 = vmatpush.bf16.msra.mxu0 %v665
        %778 = vmatpush.bf16.msra.mxu0 %v664
        %779 = vmatpush.bf16.msra.mxu0 %v663
        %780 = vmatpush.bf16.msra.mxu0 %v662
        %781 = vmatpush.bf16.msra.mxu0 %v661
        %782 = vmatmul.bf16.gmra.mxu0 %v526
        %v783 = vpop.f32.mrf.mxu0
        %v784 = vadd.f32 %v695, %v783
        %v785 = vpop.f32.mrf.mxu0
        %v786 = vadd.f32 %v697, %v785
        %787 = vmatmul.bf16.gmra.mxu0 %v528
        %v788 = vpop.f32.mrf.mxu0
        %v789 = vadd.f32 %v700, %v788
        %v790 = vpop.f32.mrf.mxu0
        %v791 = vadd.f32 %v702, %v790
        %792 = vmatmul.bf16.gmra.mxu0 %v530
        %v793 = vpop.f32.mrf.mxu0
        %v794 = vadd.f32 %v705, %v793
        %v795 = vpop.f32.mrf.mxu0
        %v796 = vadd.f32 %v707, %v795
        %797 = vmatmul.bf16.gmra.mxu0 %v532
        %v798 = vpop.f32.mrf.mxu0
        %v799 = vadd.f32 %v710, %v798
        %v800 = vpop.f32.mrf.mxu0
        %v801 = vadd.f32 %v712, %v800
        %802 = vmatmul.bf16.gmra.mxu0 %v534
        %v803 = vpop.f32.mrf.mxu0
        %v804 = vadd.f32 %v715, %v803
        %v805 = vpop.f32.mrf.mxu0
        %v806 = vadd.f32 %v717, %v805
        %807 = vmatmul.bf16.gmra.mxu0 %v536
        %v808 = vpop.f32.mrf.mxu0
        %v809 = vadd.f32 %v720, %v808
        %v810 = vpop.f32.mrf.mxu0
        %v811 = vadd.f32 %v722, %v810
        %812 = vmatmul.bf16.gmra.mxu0 %v538
        %v813 = vpop.f32.mrf.mxu0
        %v814 = vadd.f32 %v725, %v813
        %v815 = vpop.f32.mrf.mxu0
        %v816 = vadd.f32 %v727, %v815
        %817 = vmatmul.bf16.gmra.mxu0 %v540
        %v818 = vpop.f32.mrf.mxu0
        %v819 = vadd.f32 %v730, %v818
        %v820 = vpop.f32.mrf.mxu0
        %v821 = vadd.f32 %v732, %v820
        %822 = vmatmul.bf16.gmra.mxu0 %v542
        %v823 = vpop.f32.mrf.mxu0
        %v824 = vadd.f32 %v735, %v823
        %v825 = vpop.f32.mrf.mxu0
        %v826 = vadd.f32 %v737, %v825
        %827 = vmatmul.bf16.gmra.mxu0 %v544
        %v828 = vpop.f32.mrf.mxu0
        %v829 = vadd.f32 %v740, %v828
        %v830 = vpop.f32.mrf.mxu0
        %v831 = vadd.f32 %v742, %v830
        %832 = vmatmul.bf16.gmra.mxu0 %v546
        %v833 = vpop.f32.mrf.mxu0
        %v834 = vadd.f32 %v745, %v833
        %v835 = vpop.f32.mrf.mxu0
        %v836 = vadd.f32 %v747, %v835
        %837 = vmatmul.bf16.gmra.mxu0 %v548
        %v838 = vpop.f32.mrf.mxu0
        %v839 = vadd.f32 %v750, %v838
        %v840 = vpop.f32.mrf.mxu0
        %v841 = vadd.f32 %v752, %v840
        %842 = vmatmul.bf16.gmra.mxu0 %v550
        %v843 = vpop.f32.mrf.mxu0
        %v844 = vadd.f32 %v755, %v843
        %v845 = vpop.f32.mrf.mxu0
        %v846 = vadd.f32 %v757, %v845
        %847 = vmatmul.bf16.gmra.mxu0 %v552
        %v848 = vpop.f32.mrf.mxu0
        %v849 = vadd.f32 %v760, %v848
        %v850 = vpop.f32.mrf.mxu0
        %v851 = vadd.f32 %v762, %v850
        %852 = vmatmul.bf16.gmra.mxu0 %v554
        %v853 = vpop.f32.mrf.mxu0
        %v854 = vadd.f32 %v765, %v853
        %v855 = vpop.f32.mrf.mxu0
        %v856 = vadd.f32 %v767, %v855
        %857 = vmatmul.bf16.gmra.mxu0 %v556
        %v858 = vpop.f32.mrf.mxu0
        %v859 = vadd.f32 %v770, %v858
        %v860 = vpop.f32.mrf.mxu0
        %v861 = vadd.f32 %v772, %v860
        %862 = vdwg.mxu0
        %v863 = vmax.f32 %v784, 0.0
        %v864 = vmax.f32 %v786, 0.0
        %v865 = vmax.f32 %v789, 0.0
        %v866 = vmax.f32 %v791, 0.0
        %v867 = vmax.f32 %v794, 0.0
        %v868 = vmax.f32 %v796, 0.0
        %v869 = vmax.f32 %v799, 0.0
        %v870 = vmax.f32 %v801, 0.0
        %v871 = vmax.f32 %v804, 0.0
        %v872 = vmax.f32 %v806, 0.0
        %v873 = vmax.f32 %v809, 0.0
        %v874 = vmax.f32 %v811, 0.0
        %v875 = vmax.f32 %v814, 0.0
        %v876 = vmax.f32 %v816, 0.0
        %v877 = vmax.f32 %v819, 0.0
        %v878 = vmax.f32 %v821, 0.0
        %v879 = vmax.f32 %v824, 0.0
        %v880 = vmax.f32 %v826, 0.0
        %v881 = vmax.f32 %v829, 0.0
        %v882 = vmax.f32 %v831, 0.0
        %v883 = vmax.f32 %v834, 0.0
        %v884 = vmax.f32 %v836, 0.0
        %v885 = vmax.f32 %v839, 0.0
        %v886 = vmax.f32 %v841, 0.0
        %v887 = vmax.f32 %v844, 0.0
        %v888 = vmax.f32 %v846, 0.0
        %v889 = vmax.f32 %v849, 0.0
        %v890 = vmax.f32 %v851, 0.0
        %v891 = vmax.f32 %v854, 0.0
        %v892 = vmax.f32 %v856, 0.0
        %v893 = vmax.f32 %v859, 0.0
        %v894 = vmax.f32 %v861, 0.0
        %v895 = vld [vmem:[%s343] sm:$0xff]
        %v896 = vld [vmem:[%s343 + $0x8] sm:$0xff]
        %v897 = vld [vmem:[%s343 + $0x10] sm:$0xff]
        %v898 = vld [vmem:[%s343 + $0x18] sm:$0xff]
        %v899 = vld [vmem:[%s343 + $0x20] sm:$0xff]
        %v900 = vld [vmem:[%s343 + $0x28] sm:$0xff]
        %v901 = vld [vmem:[%s343 + $0x30] sm:$0xff]
        %v902 = vld [vmem:[%s343 + $0x38] sm:$0xff]
        %v903 = vld [vmem:[%s343 + $0x40] sm:$0xff]
        %v904 = vld [vmem:[%s343 + $0x48] sm:$0xff]
        %v905 = vld [vmem:[%s343 + $0x50] sm:$0xff]
        %v906 = vld [vmem:[%s343 + $0x58] sm:$0xff]
        %v907 = vld [vmem:[%s343 + $0x60] sm:$0xff]
        %v908 = vld [vmem:[%s343 + $0x68] sm:$0xff]
        %v909 = vld [vmem:[%s343 + $0x70] sm:$0xff]
        %v910 = vld [vmem:[%s343 + $0x78] sm:$0xff]
        %v911 = vld [vmem:[%s343 + $0x80] sm:$0xff]
        %v912 = vld [vmem:[%s343 + $0x88] sm:$0xff]
        %v913 = vld [vmem:[%s343 + $0x90] sm:$0xff]
        %v914 = vld [vmem:[%s343 + $0x98] sm:$0xff]
        %v915 = vld [vmem:[%s343 + $0xa0] sm:$0xff]
        %v916 = vld [vmem:[%s343 + $0xa8] sm:$0xff]
        %v917 = vld [vmem:[%s343 + $0xb0] sm:$0xff]
        %v918 = vld [vmem:[%s343 + $0xb8] sm:$0xff]
        %v919 = vld [vmem:[%s343 + $0xc0] sm:$0xff]
        %v920 = vld [vmem:[%s343 + $0xc8] sm:$0xff]
        %v921 = vld [vmem:[%s343 + $0xd0] sm:$0xff]
        %v922 = vld [vmem:[%s343 + $0xd8] sm:$0xff]
        %v923 = vld [vmem:[%s343 + $0xe0] sm:$0xff]
        %v924 = vld [vmem:[%s343 + $0xe8] sm:$0xff]
        %v925 = vld [vmem:[%s343 + $0xf0] sm:$0xff]
        %v926 = vld [vmem:[%s343 + $0xf8] sm:$0xff]
        %v927 = vld [vmem:[%s3] sm:$0xf]
        %v928 = vld [vmem:[%s3 + $0x4] sm:$0xf]
        %v929 = vld [vmem:[%s3 + $0x8] sm:$0xf]
        %v930 = vld [vmem:[%s3 + $0xc] sm:$0xf]
        %v931 = vld [vmem:[%s3 + $0x10] sm:$0xf]
        %v932 = vld [vmem:[%s3 + $0x14] sm:$0xf]
        %v933 = vld [vmem:[%s3 + $0x18] sm:$0xf]
        %v934 = vld [vmem:[%s3 + $0x1c] sm:$0xf]
        %v935 = vld [vmem:[%s3 + $0x20] sm:$0xf]
        %v936 = vld [vmem:[%s3 + $0x24] sm:$0xf]
        %v937 = vld [vmem:[%s3 + $0x28] sm:$0xf]
        %v938 = vld [vmem:[%s3 + $0x2c] sm:$0xf]
        %v939 = vld [vmem:[%s3 + $0x30] sm:$0xf]
        %v940 = vld [vmem:[%s3 + $0x34] sm:$0xf]
        %v941 = vld [vmem:[%s3 + $0x38] sm:$0xf]
        %v942 = vld [vmem:[%s3 + $0x3c] sm:$0xf]
        %v943 = vld [vmem:[%s3 + $0x40] sm:$0xf]
        %v944 = vld [vmem:[%s3 + $0x44] sm:$0xf]
        %v945 = vld [vmem:[%s3 + $0x48] sm:$0xf]
        %v946 = vld [vmem:[%s3 + $0x4c] sm:$0xf]
        %v947 = vld [vmem:[%s3 + $0x50] sm:$0xf]
        %v948 = vld [vmem:[%s3 + $0x54] sm:$0xf]
        %v949 = vld [vmem:[%s3 + $0x58] sm:$0xf]
        %v950 = vld [vmem:[%s3 + $0x5c] sm:$0xf]
        %v951 = vld [vmem:[%s3 + $0x60] sm:$0xf]
        %v952 = vld [vmem:[%s3 + $0x64] sm:$0xf]
        %v953 = vld [vmem:[%s3 + $0x68] sm:$0xf]
        %v954 = vld [vmem:[%s3 + $0x6c] sm:$0xf]
        %v955 = vld [vmem:[%s3 + $0x70] sm:$0xf]
        %v956 = vld [vmem:[%s3 + $0x74] sm:$0xf]
        %v957 = vld [vmem:[%s3 + $0x78] sm:$0xf]
        %v958 = vld [vmem:[%s3 + $0x7c] sm:$0xf]
        %v991 = vunpack.c.l.b16 %v895
        %v992 = vunpack.c.h.b16 %v895
        %v993 = vunpack.c.l.b16 %v896
        %v994 = vunpack.c.h.b16 %v896
        %v995 = vunpack.c.l.b16 %v897
        %v996 = vunpack.c.h.b16 %v897
        %v997 = vunpack.c.l.b16 %v898
        %v998 = vunpack.c.h.b16 %v898
        %v999 = vunpack.c.l.b16 %v899
        %v1000 = vunpack.c.h.b16 %v899
        %v1001 = vunpack.c.l.b16 %v900
        %v1002 = vunpack.c.h.b16 %v900
        %v1003 = vunpack.c.l.b16 %v901
        %v1004 = vunpack.c.h.b16 %v901
        %v1005 = vunpack.c.l.b16 %v902
        %v1006 = vunpack.c.h.b16 %v902
        %v1007 = vunpack.c.l.b16 %v903
        %v1008 = vunpack.c.h.b16 %v903
        %v1009 = vunpack.c.l.b16 %v904
        %v1010 = vunpack.c.h.b16 %v904
        %v1011 = vunpack.c.l.b16 %v905
        %v1012 = vunpack.c.h.b16 %v905
        %v1013 = vunpack.c.l.b16 %v906
        %v1014 = vunpack.c.h.b16 %v906
        %v1015 = vunpack.c.l.b16 %v907
        %v1016 = vunpack.c.h.b16 %v907
        %v1017 = vunpack.c.l.b16 %v908
        %v1018 = vunpack.c.h.b16 %v908
        %v1019 = vunpack.c.l.b16 %v909
        %v1020 = vunpack.c.h.b16 %v909
        %v1021 = vunpack.c.l.b16 %v910
        %v1022 = vunpack.c.h.b16 %v910
        %v1023 = vunpack.c.l.b16 %v911
        %v1024 = vunpack.c.h.b16 %v911
        %v1025 = vunpack.c.l.b16 %v912
        %v1026 = vunpack.c.h.b16 %v912
        %v1027 = vunpack.c.l.b16 %v913
        %v1028 = vunpack.c.h.b16 %v913
        %v1029 = vunpack.c.l.b16 %v914
        %v1030 = vunpack.c.h.b16 %v914
        %v1031 = vunpack.c.l.b16 %v915
        %v1032 = vunpack.c.h.b16 %v915
        %v1033 = vunpack.c.l.b16 %v916
        %v1034 = vunpack.c.h.b16 %v916
        %v1035 = vunpack.c.l.b16 %v917
        %v1036 = vunpack.c.h.b16 %v917
        %v1037 = vunpack.c.l.b16 %v918
        %v1038 = vunpack.c.h.b16 %v918
        %v1039 = vunpack.c.l.b16 %v919
        %v1040 = vunpack.c.h.b16 %v919
        %v1041 = vunpack.c.l.b16 %v920
        %v1042 = vunpack.c.h.b16 %v920
        %v1043 = vunpack.c.l.b16 %v921
        %v1044 = vunpack.c.h.b16 %v921
        %v1045 = vunpack.c.l.b16 %v922
        %v1046 = vunpack.c.h.b16 %v922
        %v1047 = vunpack.c.l.b16 %v923
        %v1048 = vunpack.c.h.b16 %v923
        %v1049 = vunpack.c.l.b16 %v924
        %v1050 = vunpack.c.h.b16 %v924
        %v1051 = vunpack.c.l.b16 %v925
        %v1052 = vunpack.c.h.b16 %v925
        %v1053 = vunpack.c.l.b16 %v926
        %v1054 = vunpack.c.h.b16 %v926
        %v1055 = vpack.c.b16 %v993, %v991
        %v1056 = vpack.c.b16 %v994, %v992
        %v1057 = vpack.c.b16 %v997, %v995
        %v1058 = vpack.c.b16 %v998, %v996
        %v1059 = vpack.c.b16 %v1001, %v999
        %v1060 = vpack.c.b16 %v1002, %v1000
        %v1061 = vpack.c.b16 %v1005, %v1003
        %v1062 = vpack.c.b16 %v1006, %v1004
        %v1063 = vpack.c.b16 %v1009, %v1007
        %v1064 = vpack.c.b16 %v1010, %v1008
        %v1065 = vpack.c.b16 %v1013, %v1011
        %v1066 = vpack.c.b16 %v1014, %v1012
        %v1067 = vpack.c.b16 %v1017, %v1015
        %v1068 = vpack.c.b16 %v1018, %v1016
        %v1069 = vpack.c.b16 %v1021, %v1019
        %v1070 = vpack.c.b16 %v1022, %v1020
        %v1071 = vpack.c.b16 %v1025, %v1023
        %v1072 = vpack.c.b16 %v1026, %v1024
        %v1073 = vpack.c.b16 %v1029, %v1027
        %v1074 = vpack.c.b16 %v1030, %v1028
        %v1075 = vpack.c.b16 %v1033, %v1031
        %v1076 = vpack.c.b16 %v1034, %v1032
        %v1077 = vpack.c.b16 %v1037, %v1035
        %v1078 = vpack.c.b16 %v1038, %v1036
        %v1079 = vpack.c.b16 %v1041, %v1039
        %v1080 = vpack.c.b16 %v1042, %v1040
        %v1081 = vpack.c.b16 %v1045, %v1043
        %v1082 = vpack.c.b16 %v1046, %v1044
        %v1083 = vpack.c.b16 %v1049, %v1047
        %v1084 = vpack.c.b16 %v1050, %v1048
        %v1085 = vpack.c.b16 %v1053, %v1051
        %v1086 = vpack.c.b16 %v1054, %v1052
        %v1151 = vunpack.c.l.b16 %v927
        %v1152 = vunpack.c.l.b16 %v928
        %v1153 = vunpack.c.l.b16 %v929
        %v1154 = vunpack.c.l.b16 %v930
        %v1155 = vunpack.c.l.b16 %v931
        %v1156 = vunpack.c.l.b16 %v932
        %v1157 = vunpack.c.l.b16 %v933
        %v1158 = vunpack.c.l.b16 %v934
        %v1159 = vunpack.c.l.b16 %v935
        %v1160 = vunpack.c.l.b16 %v936
        %v1161 = vunpack.c.l.b16 %v937
        %v1162 = vunpack.c.l.b16 %v938
        %v1163 = vunpack.c.l.b16 %v939
        %v1164 = vunpack.c.l.b16 %v940
        %v1165 = vunpack.c.l.b16 %v941
        %v1166 = vunpack.c.l.b16 %v942
        %v1167 = vunpack.c.l.b16 %v943
        %v1168 = vunpack.c.l.b16 %v944
        %v1169 = vunpack.c.l.b16 %v945
        %v1170 = vunpack.c.l.b16 %v946
        %v1171 = vunpack.c.l.b16 %v947
        %v1172 = vunpack.c.l.b16 %v948
        %v1173 = vunpack.c.l.b16 %v949
        %v1174 = vunpack.c.l.b16 %v950
        %v1175 = vunpack.c.l.b16 %v951
        %v1176 = vunpack.c.l.b16 %v952
        %v1177 = vunpack.c.l.b16 %v953
        %v1178 = vunpack.c.l.b16 %v954
        %v1179 = vunpack.c.l.b16 %v955
        %v1180 = vunpack.c.l.b16 %v956
        %v1181 = vunpack.c.l.b16 %v957
        %v1182 = vunpack.c.l.b16 %v958
        %v1183 = vpack.c.b16 %v1152, %v1151
        %v1184 = vpack.c.b16 %v1154, %v1153
        %v1185 = vpack.c.b16 %v1156, %v1155
        %v1186 = vpack.c.b16 %v1158, %v1157
        %v1187 = vpack.c.b16 %v1160, %v1159
        %v1188 = vpack.c.b16 %v1162, %v1161
        %v1189 = vpack.c.b16 %v1164, %v1163
        %v1190 = vpack.c.b16 %v1166, %v1165
        %v1191 = vpack.c.b16 %v1168, %v1167
        %v1192 = vpack.c.b16 %v1170, %v1169
        %v1193 = vpack.c.b16 %v1172, %v1171
        %v1194 = vpack.c.b16 %v1174, %v1173
        %v1195 = vpack.c.b16 %v1176, %v1175
        %v1196 = vpack.c.b16 %v1178, %v1177
        %v1197 = vpack.c.b16 %v1180, %v1179
        %v1198 = vpack.c.b16 %v1182, %v1181
        %1215 = vmatpush.bf16.msra.mxu0 %v1190
        %1216 = vmatpush.bf16.msra.mxu0 %v1189
        %1217 = vmatpush.bf16.msra.mxu0 %v1188
        %1218 = vmatpush.bf16.msra.mxu0 %v1187
        %1219 = vmatpush.bf16.msra.mxu0 %v1186
        %1220 = vmatpush.bf16.msra.mxu0 %v1185
        %1221 = vmatpush.bf16.msra.mxu0 %v1184
        %1222 = vmatpush.bf16.msra.mxu0 %v1183
        %1223 = vmatmul.bf16.gmra.mxu0 %v1055
        %v1224 = vpop.f32.mrf.mxu0
        %v1225 = vadd.f32 0.0, %v1224
        %v1226 = vpop.f32.mrf.mxu0
        %v1227 = vadd.f32 0.0, %v1226
        %1228 = vmatmul.bf16.gmra.mxu0 %v1057
        %v1229 = vpop.f32.mrf.mxu0
        %v1230 = vadd.f32 0.0, %v1229
        %v1231 = vpop.f32.mrf.mxu0
        %v1232 = vadd.f32 0.0, %v1231
        %1233 = vmatmul.bf16.gmra.mxu0 %v1059
        %v1234 = vpop.f32.mrf.mxu0
        %v1235 = vadd.f32 0.0, %v1234
        %v1236 = vpop.f32.mrf.mxu0
        %v1237 = vadd.f32 0.0, %v1236
        %1238 = vmatmul.bf16.gmra.mxu0 %v1061
        %v1239 = vpop.f32.mrf.mxu0
        %v1240 = vadd.f32 0.0, %v1239
        %v1241 = vpop.f32.mrf.mxu0
        %v1242 = vadd.f32 0.0, %v1241
        %1243 = vmatmul.bf16.gmra.mxu0 %v1063
        %v1244 = vpop.f32.mrf.mxu0
        %v1245 = vadd.f32 0.0, %v1244
        %v1246 = vpop.f32.mrf.mxu0
        %v1247 = vadd.f32 0.0, %v1246
        %1248 = vmatmul.bf16.gmra.mxu0 %v1065
        %v1249 = vpop.f32.mrf.mxu0
        %v1250 = vadd.f32 0.0, %v1249
        %v1251 = vpop.f32.mrf.mxu0
        %v1252 = vadd.f32 0.0, %v1251
        %1253 = vmatmul.bf16.gmra.mxu0 %v1067
        %v1254 = vpop.f32.mrf.mxu0
        %v1255 = vadd.f32 0.0, %v1254
        %v1256 = vpop.f32.mrf.mxu0
        %v1257 = vadd.f32 0.0, %v1256
        %1258 = vmatmul.bf16.gmra.mxu0 %v1069
        %v1259 = vpop.f32.mrf.mxu0
        %v1260 = vadd.f32 0.0, %v1259
        %v1261 = vpop.f32.mrf.mxu0
        %v1262 = vadd.f32 0.0, %v1261
        %1263 = vmatmul.bf16.gmra.mxu0 %v1071
        %v1264 = vpop.f32.mrf.mxu0
        %v1265 = vadd.f32 0.0, %v1264
        %v1266 = vpop.f32.mrf.mxu0
        %v1267 = vadd.f32 0.0, %v1266
        %1268 = vmatmul.bf16.gmra.mxu0 %v1073
        %v1269 = vpop.f32.mrf.mxu0
        %v1270 = vadd.f32 0.0, %v1269
        %v1271 = vpop.f32.mrf.mxu0
        %v1272 = vadd.f32 0.0, %v1271
        %1273 = vmatmul.bf16.gmra.mxu0 %v1075
        %v1274 = vpop.f32.mrf.mxu0
        %v1275 = vadd.f32 0.0, %v1274
        %v1276 = vpop.f32.mrf.mxu0
        %v1277 = vadd.f32 0.0, %v1276
        %1278 = vmatmul.bf16.gmra.mxu0 %v1077
        %v1279 = vpop.f32.mrf.mxu0
        %v1280 = vadd.f32 0.0, %v1279
        %v1281 = vpop.f32.mrf.mxu0
        %v1282 = vadd.f32 0.0, %v1281
        %1283 = vmatmul.bf16.gmra.mxu0 %v1079
        %v1284 = vpop.f32.mrf.mxu0
        %v1285 = vadd.f32 0.0, %v1284
        %v1286 = vpop.f32.mrf.mxu0
        %v1287 = vadd.f32 0.0, %v1286
        %1288 = vmatmul.bf16.gmra.mxu0 %v1081
        %v1289 = vpop.f32.mrf.mxu0
        %v1290 = vadd.f32 0.0, %v1289
        %v1291 = vpop.f32.mrf.mxu0
        %v1292 = vadd.f32 0.0, %v1291
        %1293 = vmatmul.bf16.gmra.mxu0 %v1083
        %v1294 = vpop.f32.mrf.mxu0
        %v1295 = vadd.f32 0.0, %v1294
        %v1296 = vpop.f32.mrf.mxu0
        %v1297 = vadd.f32 0.0, %v1296
        %1298 = vmatmul.bf16.gmra.mxu0 %v1085
        %v1299 = vpop.f32.mrf.mxu0
        %v1300 = vadd.f32 0.0, %v1299
        %v1301 = vpop.f32.mrf.mxu0
        %v1302 = vadd.f32 0.0, %v1301
        %1303 = vdwg.mxu0
        %1304 = vmatpush.bf16.msra.mxu0 %v1198
        %1305 = vmatpush.bf16.msra.mxu0 %v1197
        %1306 = vmatpush.bf16.msra.mxu0 %v1196
        %1307 = vmatpush.bf16.msra.mxu0 %v1195
        %1308 = vmatpush.bf16.msra.mxu0 %v1194
        %1309 = vmatpush.bf16.msra.mxu0 %v1193
        %1310 = vmatpush.bf16.msra.mxu0 %v1192
        %1311 = vmatpush.bf16.msra.mxu0 %v1191
        %1312 = vmatmul.bf16.gmra.mxu0 %v1056
        %v1313 = vpop.f32.mrf.mxu0
        %v1314 = vadd.f32 %v1225, %v1313
        %v1315 = vpop.f32.mrf.mxu0
        %v1316 = vadd.f32 %v1227, %v1315
        %1317 = vmatmul.bf16.gmra.mxu0 %v1058
        %v1318 = vpop.f32.mrf.mxu0
        %v1319 = vadd.f32 %v1230, %v1318
        %v1320 = vpop.f32.mrf.mxu0
        %v1321 = vadd.f32 %v1232, %v1320
        %1322 = vmatmul.bf16.gmra.mxu0 %v1060
        %v1323 = vpop.f32.mrf.mxu0
        %v1324 = vadd.f32 %v1235, %v1323
        %v1325 = vpop.f32.mrf.mxu0
        %v1326 = vadd.f32 %v1237, %v1325
        %1327 = vmatmul.bf16.gmra.mxu0 %v1062
        %v1328 = vpop.f32.mrf.mxu0
        %v1329 = vadd.f32 %v1240, %v1328
        %v1330 = vpop.f32.mrf.mxu0
        %v1331 = vadd.f32 %v1242, %v1330
        %1332 = vmatmul.bf16.gmra.mxu0 %v1064
        %v1333 = vpop.f32.mrf.mxu0
        %v1334 = vadd.f32 %v1245, %v1333
        %v1335 = vpop.f32.mrf.mxu0
        %v1336 = vadd.f32 %v1247, %v1335
        %1337 = vmatmul.bf16.gmra.mxu0 %v1066
        %v1338 = vpop.f32.mrf.mxu0
        %v1339 = vadd.f32 %v1250, %v1338
        %v1340 = vpop.f32.mrf.mxu0
        %v1341 = vadd.f32 %v1252, %v1340
        %1342 = vmatmul.bf16.gmra.mxu0 %v1068
        %v1343 = vpop.f32.mrf.mxu0
        %v1344 = vadd.f32 %v1255, %v1343
        %v1345 = vpop.f32.mrf.mxu0
        %v1346 = vadd.f32 %v1257, %v1345
        %1347 = vmatmul.bf16.gmra.mxu0 %v1070
        %v1348 = vpop.f32.mrf.mxu0
        %v1349 = vadd.f32 %v1260, %v1348
        %v1350 = vpop.f32.mrf.mxu0
        %v1351 = vadd.f32 %v1262, %v1350
        %1352 = vmatmul.bf16.gmra.mxu0 %v1072
        %v1353 = vpop.f32.mrf.mxu0
        %v1354 = vadd.f32 %v1265, %v1353
        %v1355 = vpop.f32.mrf.mxu0
        %v1356 = vadd.f32 %v1267, %v1355
        %1357 = vmatmul.bf16.gmra.mxu0 %v1074
        %v1358 = vpop.f32.mrf.mxu0
        %v1359 = vadd.f32 %v1270, %v1358
        %v1360 = vpop.f32.mrf.mxu0
        %v1361 = vadd.f32 %v1272, %v1360
        %1362 = vmatmul.bf16.gmra.mxu0 %v1076
        %v1363 = vpop.f32.mrf.mxu0
        %v1364 = vadd.f32 %v1275, %v1363
        %v1365 = vpop.f32.mrf.mxu0
        %v1366 = vadd.f32 %v1277, %v1365
        %1367 = vmatmul.bf16.gmra.mxu0 %v1078
        %v1368 = vpop.f32.mrf.mxu0
        %v1369 = vadd.f32 %v1280, %v1368
        %v1370 = vpop.f32.mrf.mxu0
        %v1371 = vadd.f32 %v1282, %v1370
        %1372 = vmatmul.bf16.gmra.mxu0 %v1080
        %v1373 = vpop.f32.mrf.mxu0
        %v1374 = vadd.f32 %v1285, %v1373
        %v1375 = vpop.f32.mrf.mxu0
        %v1376 = vadd.f32 %v1287, %v1375
        %1377 = vmatmul.bf16.gmra.mxu0 %v1082
        %v1378 = vpop.f32.mrf.mxu0
        %v1379 = vadd.f32 %v1290, %v1378
        %v1380 = vpop.f32.mrf.mxu0
        %v1381 = vadd.f32 %v1292, %v1380
        %1382 = vmatmul.bf16.gmra.mxu0 %v1084
        %v1383 = vpop.f32.mrf.mxu0
        %v1384 = vadd.f32 %v1295, %v1383
        %v1385 = vpop.f32.mrf.mxu0
        %v1386 = vadd.f32 %v1297, %v1385
        %1387 = vmatmul.bf16.gmra.mxu0 %v1086
        %v1388 = vpop.f32.mrf.mxu0
        %v1389 = vadd.f32 %v1300, %v1388
        %v1390 = vpop.f32.mrf.mxu0
        %v1391 = vadd.f32 %v1302, %v1390
        %1392 = vdwg.mxu0
        %v1393 = vmax.f32 %v1314, 0.0
        %v1394 = vmax.f32 %v1316, 0.0
        %v1395 = vmax.f32 %v1319, 0.0
        %v1396 = vmax.f32 %v1321, 0.0
        %v1397 = vmax.f32 %v1324, 0.0
        %v1398 = vmax.f32 %v1326, 0.0
        %v1399 = vmax.f32 %v1329, 0.0
        %v1400 = vmax.f32 %v1331, 0.0
        %v1401 = vmax.f32 %v1334, 0.0
        %v1402 = vmax.f32 %v1336, 0.0
        %v1403 = vmax.f32 %v1339, 0.0
        %v1404 = vmax.f32 %v1341, 0.0
        %v1405 = vmax.f32 %v1344, 0.0
        %v1406 = vmax.f32 %v1346, 0.0
        %v1407 = vmax.f32 %v1349, 0.0
        %v1408 = vmax.f32 %v1351, 0.0
        %v1409 = vmax.f32 %v1354, 0.0
        %v1410 = vmax.f32 %v1356, 0.0
        %v1411 = vmax.f32 %v1359, 0.0
        %v1412 = vmax.f32 %v1361, 0.0
        %v1413 = vmax.f32 %v1364, 0.0
        %v1414 = vmax.f32 %v1366, 0.0
        %v1415 = vmax.f32 %v1369, 0.0
        %v1416 = vmax.f32 %v1371, 0.0
        %v1417 = vmax.f32 %v1374, 0.0
        %v1418 = vmax.f32 %v1376, 0.0
        %v1419 = vmax.f32 %v1379, 0.0
        %v1420 = vmax.f32 %v1381, 0.0
        %v1421 = vmax.f32 %v1384, 0.0
        %v1422 = vmax.f32 %v1386, 0.0
        %v1423 = vmax.f32 %v1389, 0.0
        %v1424 = vmax.f32 %v1391, 0.0
        %v1425 = vadd.f32 %v863, %v1393
        %v1426 = vadd.f32 %v864, %v1394
        %v1427 = vadd.f32 %v865, %v1395
        %v1428 = vadd.f32 %v866, %v1396
        %v1429 = vadd.f32 %v867, %v1397
        %v1430 = vadd.f32 %v868, %v1398
        %v1431 = vadd.f32 %v869, %v1399
        %v1432 = vadd.f32 %v870, %v1400
        %v1433 = vadd.f32 %v871, %v1401
        %v1434 = vadd.f32 %v872, %v1402
        %v1435 = vadd.f32 %v873, %v1403
        %v1436 = vadd.f32 %v874, %v1404
        %v1437 = vadd.f32 %v875, %v1405
        %v1438 = vadd.f32 %v876, %v1406
        %v1439 = vadd.f32 %v877, %v1407
        %v1440 = vadd.f32 %v878, %v1408
        %v1441 = vadd.f32 %v879, %v1409
        %v1442 = vadd.f32 %v880, %v1410
        %v1443 = vadd.f32 %v881, %v1411
        %v1444 = vadd.f32 %v882, %v1412
        %v1445 = vadd.f32 %v883, %v1413
        %v1446 = vadd.f32 %v884, %v1414
        %v1447 = vadd.f32 %v885, %v1415
        %v1448 = vadd.f32 %v886, %v1416
        %v1449 = vadd.f32 %v887, %v1417
        %v1450 = vadd.f32 %v888, %v1418
        %v1451 = vadd.f32 %v889, %v1419
        %v1452 = vadd.f32 %v890, %v1420
        %v1453 = vadd.f32 %v891, %v1421
        %v1454 = vadd.f32 %v892, %v1422
        %v1455 = vadd.f32 %v893, %v1423
        %v1456 = vadd.f32 %v894, %v1424
        %s1457 = scalar_lea.vmem [#allocation2], %s355
        %1458 = vst [vmem:[%s1457] sm:$0xff] %v1425
        %1459 = vst [vmem:[%s1457 + $0x8] sm:$0xff] %v1426
        %1460 = vst [vmem:[%s1457 + $0x10] sm:$0xff] %v1427
        %1461 = vst [vmem:[%s1457 + $0x18] sm:$0xff] %v1428
        %1462 = vst [vmem:[%s1457 + $0x20] sm:$0xff] %v1429
        %1463 = vst [vmem:[%s1457 + $0x28] sm:$0xff] %v1430
        %1464 = vst [vmem:[%s1457 + $0x30] sm:$0xff] %v1431
        %1465 = vst [vmem:[%s1457 + $0x38] sm:$0xff] %v1432
        %1466 = vst [vmem:[%s1457 + $0x40] sm:$0xff] %v1433
        %1467 = vst [vmem:[%s1457 + $0x48] sm:$0xff] %v1434
        %1468 = vst [vmem:[%s1457 + $0x50] sm:$0xff] %v1435
        %1469 = vst [vmem:[%s1457 + $0x58] sm:$0xff] %v1436
        %1470 = vst [vmem:[%s1457 + $0x60] sm:$0xff] %v1437
        %1471 = vst [vmem:[%s1457 + $0x68] sm:$0xff] %v1438
        %1472 = vst [vmem:[%s1457 + $0x70] sm:$0xff] %v1439
        %1473 = vst [vmem:[%s1457 + $0x78] sm:$0xff] %v1440
        %1474 = vst [vmem:[%s1457 + $0x80] sm:$0xff] %v1441
        %1475 = vst [vmem:[%s1457 + $0x88] sm:$0xff] %v1442
        %1476 = vst [vmem:[%s1457 + $0x90] sm:$0xff] %v1443
        %1477 = vst [vmem:[%s1457 + $0x98] sm:$0xff] %v1444
        %1478 = vst [vmem:[%s1457 + $0xa0] sm:$0xff] %v1445
        %1479 = vst [vmem:[%s1457 + $0xa8] sm:$0xff] %v1446
        %1480 = vst [vmem:[%s1457 + $0xb0] sm:$0xff] %v1447
        %1481 = vst [vmem:[%s1457 + $0xb8] sm:$0xff] %v1448
        %1482 = vst [vmem:[%s1457 + $0xc0] sm:$0xff] %v1449
        %1483 = vst [vmem:[%s1457 + $0xc8] sm:$0xff] %v1450
        %1484 = vst [vmem:[%s1457 + $0xd0] sm:$0xff] %v1451
        %1485 = vst [vmem:[%s1457 + $0xd8] sm:$0xff] %v1452
        %1486 = vst [vmem:[%s1457 + $0xe0] sm:$0xff] %v1453
        %1487 = vst [vmem:[%s1457 + $0xe8] sm:$0xff] %v1454
        %1488 = vst [vmem:[%s1457 + $0xf0] sm:$0xff] %v1455
        %1489 = vst [vmem:[%s1457 + $0xf8] sm:$0xff] %v1456
        %v1490 = vld [vmem:[#allocation3] sm:$0x1]
        %v1491 = vadd.f32 %v1425, %v1426
        %v1492 = vadd.f32 %v1491, %v1427
        %v1493 = vadd.f32 %v1492, %v1428
        %v1494 = vadd.f32 %v1493, %v1429
        %v1495 = vadd.f32 %v1494, %v1430
        %v1496 = vadd.f32 %v1495, %v1431
        %v1497 = vadd.f32 %v1496, %v1432
        %v1498 = vadd.f32 %v1497, %v1433
        %v1499 = vadd.f32 %v1498, %v1434
        %v1500 = vadd.f32 %v1499, %v1435
        %v1501 = vadd.f32 %v1500, %v1436
        %v1502 = vadd.f32 %v1501, %v1437
        %v1503 = vadd.f32 %v1502, %v1438
        %v1504 = vadd.f32 %v1503, %v1439
        %v1505 = vadd.f32 %v1504, %v1440
        %v1506 = vadd.f32 %v1505, %v1441
        %v1507 = vadd.f32 %v1506, %v1442
        %v1508 = vadd.f32 %v1507, %v1443
        %v1509 = vadd.f32 %v1508, %v1444
        %v1510 = vadd.f32 %v1509, %v1445
        %v1511 = vadd.f32 %v1510, %v1446
        %v1512 = vadd.f32 %v1511, %v1447
        %v1513 = vadd.f32 %v1512, %v1448
        %v1514 = vadd.f32 %v1513, %v1449
        %v1515 = vadd.f32 %v1514, %v1450
        %v1516 = vadd.f32 %v1515, %v1451
        %v1517 = vadd.f32 %v1516, %v1452
        %v1518 = vadd.f32 %v1517, %v1453
        %v1519 = vadd.f32 %v1518, %v1454
        %v1520 = vadd.f32 %v1519, %v1455
        %v1521 = vadd.f32 %v1520, %v1456
        %v1522 = vrot.slane %v1521, 4
        %v1523 = vadd.f32 %v1521, %v1522
        %v1524 = vrot.slane %v1523, 2
        %v1525 = vadd.f32 %v1523, %v1524
        %v1526 = vrot.slane %v1525, 1
        %v1527 = vadd.f32 %v1525, %v1526
        %v1528 = vadd.f32 %v1490, %v1527
        %1529 = vst [vmem:[#allocation3] sm:$0x1] %v1528
        // Predicated region
        $region57: #{decoder_forward.5} parent=51 // pred_check
          %p1530 = pneg %p360
        $region58: #{decoder_forward.5} parent=51 // pred_check_branch
          %1532 = sbr.rel (%p1530) target = $region60
        $region59: #{decoder_forward.5} parent=51 // pred_region
          %v1533 = vld [vmem:[#allocation3] sm:$0x1]
          %v1534 = vmul.f32 %v1533, 0.00390625
          %v1535 = vld [vmem:[%s4] sm:$0xff]
          %v1536 = vld [vmem:[%s4 + $0x8] sm:$0xff]
          %v1537 = vld [vmem:[%s4 + $0x10] sm:$0xff]
          %v1538 = vld [vmem:[%s4 + $0x18] sm:$0xff]
          %v1539 = vld [vmem:[%s4 + $0x20] sm:$0xff]
          %v1540 = vld [vmem:[%s4 + $0x28] sm:$0xff]
          %v1541 = vld [vmem:[%s4 + $0x30] sm:$0xff]
          %v1542 = vld [vmem:[%s4 + $0x38] sm:$0xff]
          %v1543 = vld [vmem:[%s4 + $0x40] sm:$0xff]
          %v1544 = vld [vmem:[%s4 + $0x48] sm:$0xff]
          %v1545 = vld [vmem:[%s4 + $0x50] sm:$0xff]
          %v1546 = vld [vmem:[%s4 + $0x58] sm:$0xff]
          %v1547 = vld [vmem:[%s4 + $0x60] sm:$0xff]
          %v1548 = vld [vmem:[%s4 + $0x68] sm:$0xff]
          %v1549 = vld [vmem:[%s4 + $0x70] sm:$0xff]
          %v1550 = vld [vmem:[%s4 + $0x78] sm:$0xff]
          %1551 = vmatpush.msra.mxu0 %v1550
          %1552 = vmatpush.msra.mxu0 %v1549
          %1553 = vmatpush.msra.mxu0 %v1548
          %1554 = vmatpush.msra.mxu0 %v1547
          %1555 = vmatpush.msra.mxu0 %v1546
          %1556 = vmatpush.msra.mxu0 %v1545
          %1557 = vmatpush.msra.mxu0 %v1544
          %1558 = vmatpush.msra.mxu0 %v1543
          %1559 = vmatpush.msra.mxu0 %v1542
          %1560 = vmatpush.msra.mxu0 %v1541
          %1561 = vmatpush.msra.mxu0 %v1540
          %1562 = vmatpush.msra.mxu0 %v1539
          %1563 = vmatpush.msra.mxu0 %v1538
          %1564 = vmatpush.msra.mxu0 %v1537
          %1565 = vmatpush.msra.mxu0 %v1536
          %1566 = vmatpush.msra.mxu0 %v1535
          %1567 = vmatmul.f32.gmra.mxu0 %v1534
          %v1568 = vpop.f32.mrf.mxu0
          %v1569 = vadd.f32 0.0, %v1568
          %1570 = vdwg.mxu0
          %v1571 = vsub.f32 0.0, %v1569
          %v1572 = vmul.f32 %v1571, 1.442695
          %v1573 = vpow.pop %v1572
          %v1574 = vadd.f32 %v1573, 1.0
          %v1575 = vrcp.pop %v1574
          %v1576 = vmul.f32 %v1574, %v1575
          %v1577 = vsub.f32 1.0, %v1576
          %v1578 = vmul.f32 %v1575, %v1577
          %v1579 = vadd.f32 %v1575, %v1578
          %vm1580 = vweird.f32 %v1574
          %vm1581 = vweird.f32 %v1575
          %vm1582 = vmor %vm1580, %vm1581
          %v1583 = vsel %vm1582, %v1575, %v1579
          %v1584 = vand.u32 2147483647, %v1574
          %vm1585 = vcmp.eq.f32.partialorder %v1584, 8.507059e+37
          %v1586 = vand.u32 %v1574, 2147483648
          %v1587 = vor.u32 1.1754944e-38, %v1586
          %v1588 = vsel %vm1585, %v1587, %v1583
          %v1589 = vmul.f32 1.0, %v1588
          %1590 = vst [vmem:[#allocation4] sm:$0x1] %v1589
        $region60: #{decoder_forward.5} parent=51 // pred_fallthru
          _
      $region52: #{decoder_forward.5} parent=47 // pred_fallthru
        _
      %p1591 = scmp.eq.s32.totalorder %s22, 1
      // Predicated region
      $region61: #{decoder_forward.5} parent=47 // pred_check
        %p1592 = pneg %p1591
      $region62: #{decoder_forward.5} parent=47 // pred_check_branch
        %1594 = sbr.rel (%p1592) target = $region64
      $region63: #{decoder_forward.5} parent=47 // pred_region
        %s1595 = scalar_lea.vmem [#allocation2], %s355
        %v1596 = vld [vmem:[%s1595] sm:$0xff]
        %v1597 = vld [vmem:[%s1595 + $0x8] sm:$0xff]
        %v1598 = vld [vmem:[%s1595 + $0x10] sm:$0xff]
        %v1599 = vld [vmem:[%s1595 + $0x18] sm:$0xff]
        %v1600 = vld [vmem:[%s1595 + $0x20] sm:$0xff]
        %v1601 = vld [vmem:[%s1595 + $0x28] sm:$0xff]
        %v1602 = vld [vmem:[%s1595 + $0x30] sm:$0xff]
        %v1603 = vld [vmem:[%s1595 + $0x38] sm:$0xff]
        %v1604 = vld [vmem:[%s1595 + $0x40] sm:$0xff]
        %v1605 = vld [vmem:[%s1595 + $0x48] sm:$0xff]
        %v1606 = vld [vmem:[%s1595 + $0x50] sm:$0xff]
        %v1607 = vld [vmem:[%s1595 + $0x58] sm:$0xff]
        %v1608 = vld [vmem:[%s1595 + $0x60] sm:$0xff]
        %v1609 = vld [vmem:[%s1595 + $0x68] sm:$0xff]
        %v1610 = vld [vmem:[%s1595 + $0x70] sm:$0xff]
        %v1611 = vld [vmem:[%s1595 + $0x78] sm:$0xff]
        %v1612 = vld [vmem:[%s1595 + $0x80] sm:$0xff]
        %v1613 = vld [vmem:[%s1595 + $0x88] sm:$0xff]
        %v1614 = vld [vmem:[%s1595 + $0x90] sm:$0xff]
        %v1615 = vld [vmem:[%s1595 + $0x98] sm:$0xff]
        %v1616 = vld [vmem:[%s1595 + $0xa0] sm:$0xff]
        %v1617 = vld [vmem:[%s1595 + $0xa8] sm:$0xff]
        %v1618 = vld [vmem:[%s1595 + $0xb0] sm:$0xff]
        %v1619 = vld [vmem:[%s1595 + $0xb8] sm:$0xff]
        %v1620 = vld [vmem:[%s1595 + $0xc0] sm:$0xff]
        %v1621 = vld [vmem:[%s1595 + $0xc8] sm:$0xff]
        %v1622 = vld [vmem:[%s1595 + $0xd0] sm:$0xff]
        %v1623 = vld [vmem:[%s1595 + $0xd8] sm:$0xff]
        %v1624 = vld [vmem:[%s1595 + $0xe0] sm:$0xff]
        %v1625 = vld [vmem:[%s1595 + $0xe8] sm:$0xff]
        %v1626 = vld [vmem:[%s1595 + $0xf0] sm:$0xff]
        %v1627 = vld [vmem:[%s1595 + $0xf8] sm:$0xff]
        %v1628 = vld [vmem:[#allocation4] sm:$0x1]
        %v1630 = vperm.slane %v1628, 0
        %v1632 = vmul.f32 %v1596, %v1630
        %v1633 = vmul.f32 %v1597, %v1630
        %v1634 = vmul.f32 %v1598, %v1630
        %v1635 = vmul.f32 %v1599, %v1630
        %v1636 = vmul.f32 %v1600, %v1630
        %v1637 = vmul.f32 %v1601, %v1630
        %v1638 = vmul.f32 %v1602, %v1630
        %v1639 = vmul.f32 %v1603, %v1630
        %v1640 = vmul.f32 %v1604, %v1630
        %v1641 = vmul.f32 %v1605, %v1630
        %v1642 = vmul.f32 %v1606, %v1630
        %v1643 = vmul.f32 %v1607, %v1630
        %v1644 = vmul.f32 %v1608, %v1630
        %v1645 = vmul.f32 %v1609, %v1630
        %v1646 = vmul.f32 %v1610, %v1630
        %v1647 = vmul.f32 %v1611, %v1630
        %v1648 = vmul.f32 %v1612, %v1630
        %v1649 = vmul.f32 %v1613, %v1630
        %v1650 = vmul.f32 %v1614, %v1630
        %v1651 = vmul.f32 %v1615, %v1630
        %v1652 = vmul.f32 %v1616, %v1630
        %v1653 = vmul.f32 %v1617, %v1630
        %v1654 = vmul.f32 %v1618, %v1630
        %v1655 = vmul.f32 %v1619, %v1630
        %v1656 = vmul.f32 %v1620, %v1630
        %v1657 = vmul.f32 %v1621, %v1630
        %v1658 = vmul.f32 %v1622, %v1630
        %v1659 = vmul.f32 %v1623, %v1630
        %v1660 = vmul.f32 %v1624, %v1630
        %v1661 = vmul.f32 %v1625, %v1630
        %v1662 = vmul.f32 %v1626, %v1630
        %v1663 = vmul.f32 %v1627, %v1630
        %v1664 = vadd.f32 %v1632, %v1596
        %v1665 = vadd.f32 %v1633, %v1597
        %v1666 = vadd.f32 %v1634, %v1598
        %v1667 = vadd.f32 %v1635, %v1599
        %v1668 = vadd.f32 %v1636, %v1600
        %v1669 = vadd.f32 %v1637, %v1601
        %v1670 = vadd.f32 %v1638, %v1602
        %v1671 = vadd.f32 %v1639, %v1603
        %v1672 = vadd.f32 %v1640, %v1604
        %v1673 = vadd.f32 %v1641, %v1605
        %v1674 = vadd.f32 %v1642, %v1606
        %v1675 = vadd.f32 %v1643, %v1607
        %v1676 = vadd.f32 %v1644, %v1608
        %v1677 = vadd.f32 %v1645, %v1609
        %v1678 = vadd.f32 %v1646, %v1610
        %v1679 = vadd.f32 %v1647, %v1611
        %v1680 = vadd.f32 %v1648, %v1612
        %v1681 = vadd.f32 %v1649, %v1613
        %v1682 = vadd.f32 %v1650, %v1614
        %v1683 = vadd.f32 %v1651, %v1615
        %v1684 = vadd.f32 %v1652, %v1616
        %v1685 = vadd.f32 %v1653, %v1617
        %v1686 = vadd.f32 %v1654, %v1618
        %v1687 = vadd.f32 %v1655, %v1619
        %v1688 = vadd.f32 %v1656, %v1620
        %v1689 = vadd.f32 %v1657, %v1621
        %v1690 = vadd.f32 %v1658, %v1622
        %v1691 = vadd.f32 %v1659, %v1623
        %v1692 = vadd.f32 %v1660, %v1624
        %v1693 = vadd.f32 %v1661, %v1625
        %v1694 = vadd.f32 %v1662, %v1626
        %v1695 = vadd.f32 %v1663, %v1627
        %v1696 = vpack.c.bf16 %v1665, %v1664
        %v1697 = vpack.c.bf16 %v1667, %v1666
        %v1698 = vpack.c.bf16 %v1669, %v1668
        %v1699 = vpack.c.bf16 %v1671, %v1670
        %v1700 = vpack.c.bf16 %v1673, %v1672
        %v1701 = vpack.c.bf16 %v1675, %v1674
        %v1702 = vpack.c.bf16 %v1677, %v1676
        %v1703 = vpack.c.bf16 %v1679, %v1678
        %v1704 = vpack.c.bf16 %v1681, %v1680
        %v1705 = vpack.c.bf16 %v1683, %v1682
        %v1706 = vpack.c.bf16 %v1685, %v1684
        %v1707 = vpack.c.bf16 %v1687, %v1686
        %v1708 = vpack.c.bf16 %v1689, %v1688
        %v1709 = vpack.c.bf16 %v1691, %v1690
        %v1710 = vpack.c.bf16 %v1693, %v1692
        %v1711 = vpack.c.bf16 %v1695, %v1694
        %v1712 = vld [vmem:[%s5] sm:$0xf]
        %v1713 = vld [vmem:[%s5 + $0x4] sm:$0xf]
        %v1714 = vld [vmem:[%s5 + $0x8] sm:$0xf]
        %v1715 = vld [vmem:[%s5 + $0xc] sm:$0xf]
        %v1716 = vld [vmem:[%s5 + $0x10] sm:$0xf]
        %v1717 = vld [vmem:[%s5 + $0x14] sm:$0xf]
        %v1718 = vld [vmem:[%s5 + $0x18] sm:$0xf]
        %v1719 = vld [vmem:[%s5 + $0x1c] sm:$0xf]
        %v1720 = vld [vmem:[%s5 + $0x20] sm:$0xf]
        %v1721 = vld [vmem:[%s5 + $0x24] sm:$0xf]
        %v1722 = vld [vmem:[%s5 + $0x28] sm:$0xf]
        %v1723 = vld [vmem:[%s5 + $0x2c] sm:$0xf]
        %v1724 = vld [vmem:[%s5 + $0x30] sm:$0xf]
        %v1725 = vld [vmem:[%s5 + $0x34] sm:$0xf]
        %v1726 = vld [vmem:[%s5 + $0x38] sm:$0xf]
        %v1727 = vld [vmem:[%s5 + $0x3c] sm:$0xf]
        %v1728 = vld [vmem:[%s6] sm:$0x1]
        %v1730 = vperm.slane %v1728, 0
        %v1748 = vunpack.c.l.b16 %v1712
        %v1749 = vunpack.c.l.b16 %v1713
        %v1750 = vunpack.c.l.b16 %v1714
        %v1751 = vunpack.c.l.b16 %v1715
        %v1752 = vunpack.c.l.b16 %v1716
        %v1753 = vunpack.c.l.b16 %v1717
        %v1754 = vunpack.c.l.b16 %v1718
        %v1755 = vunpack.c.l.b16 %v1719
        %v1756 = vunpack.c.l.b16 %v1720
        %v1757 = vunpack.c.l.b16 %v1721
        %v1758 = vunpack.c.l.b16 %v1722
        %v1759 = vunpack.c.l.b16 %v1723
        %v1760 = vunpack.c.l.b16 %v1724
        %v1761 = vunpack.c.l.b16 %v1725
        %v1762 = vunpack.c.l.b16 %v1726
        %v1763 = vunpack.c.l.b16 %v1727
        %v1764 = vpack.c.b16 %v1749, %v1748
        %v1765 = vpack.c.b16 %v1751, %v1750
        %v1766 = vpack.c.b16 %v1753, %v1752
        %v1767 = vpack.c.b16 %v1755, %v1754
        %v1768 = vpack.c.b16 %v1757, %v1756
        %v1769 = vpack.c.b16 %v1759, %v1758
        %v1770 = vpack.c.b16 %v1761, %v1760
        %v1771 = vpack.c.b16 %v1763, %v1762
        %1780 = vmatpush.bf16.msra.mxu0 %v1771
        %1781 = vmatpush.bf16.msra.mxu0 %v1770
        %1782 = vmatpush.bf16.msra.mxu0 %v1769
        %1783 = vmatpush.bf16.msra.mxu0 %v1768
        %1784 = vmatpush.bf16.msra.mxu0 %v1767
        %1785 = vmatpush.bf16.msra.mxu0 %v1766
        %1786 = vmatpush.bf16.msra.mxu0 %v1765
        %1787 = vmatpush.bf16.msra.mxu0 %v1764
        %1788 = vmatmul.bf16.gmra.mxu0 %v1696
        %v1789 = vpop.f32.mrf.mxu0
        %v1790 = vadd.f32 %v1730, %v1789
        %v1791 = vpop.f32.mrf.mxu0
        %v1792 = vadd.f32 %v1730, %v1791
        %1793 = vmatmul.bf16.gmra.mxu0 %v1697
        %v1794 = vpop.f32.mrf.mxu0
        %v1795 = vadd.f32 %v1730, %v1794
        %v1796 = vpop.f32.mrf.mxu0
        %v1797 = vadd.f32 %v1730, %v1796
        %1798 = vmatmul.bf16.gmra.mxu0 %v1698
        %v1799 = vpop.f32.mrf.mxu0
        %v1800 = vadd.f32 %v1730, %v1799
        %v1801 = vpop.f32.mrf.mxu0
        %v1802 = vadd.f32 %v1730, %v1801
        %1803 = vmatmul.bf16.gmra.mxu0 %v1699
        %v1804 = vpop.f32.mrf.mxu0
        %v1805 = vadd.f32 %v1730, %v1804
        %v1806 = vpop.f32.mrf.mxu0
        %v1807 = vadd.f32 %v1730, %v1806
        %1808 = vmatmul.bf16.gmra.mxu0 %v1700
        %v1809 = vpop.f32.mrf.mxu0
        %v1810 = vadd.f32 %v1730, %v1809
        %v1811 = vpop.f32.mrf.mxu0
        %v1812 = vadd.f32 %v1730, %v1811
        %1813 = vmatmul.bf16.gmra.mxu0 %v1701
        %v1814 = vpop.f32.mrf.mxu0
        %v1815 = vadd.f32 %v1730, %v1814
        %v1816 = vpop.f32.mrf.mxu0
        %v1817 = vadd.f32 %v1730, %v1816
        %1818 = vmatmul.bf16.gmra.mxu0 %v1702
        %v1819 = vpop.f32.mrf.mxu0
        %v1820 = vadd.f32 %v1730, %v1819
        %v1821 = vpop.f32.mrf.mxu0
        %v1822 = vadd.f32 %v1730, %v1821
        %1823 = vmatmul.bf16.gmra.mxu0 %v1703
        %v1824 = vpop.f32.mrf.mxu0
        %v1825 = vadd.f32 %v1730, %v1824
        %v1826 = vpop.f32.mrf.mxu0
        %v1827 = vadd.f32 %v1730, %v1826
        %1828 = vmatmul.bf16.gmra.mxu0 %v1704
        %v1829 = vpop.f32.mrf.mxu0
        %v1830 = vadd.f32 %v1730, %v1829
        %v1831 = vpop.f32.mrf.mxu0
        %v1832 = vadd.f32 %v1730, %v1831
        %1833 = vmatmul.bf16.gmra.mxu0 %v1705
        %v1834 = vpop.f32.mrf.mxu0
        %v1835 = vadd.f32 %v1730, %v1834
        %v1836 = vpop.f32.mrf.mxu0
        %v1837 = vadd.f32 %v1730, %v1836
        %1838 = vmatmul.bf16.gmra.mxu0 %v1706
        %v1839 = vpop.f32.mrf.mxu0
        %v1840 = vadd.f32 %v1730, %v1839
        %v1841 = vpop.f32.mrf.mxu0
        %v1842 = vadd.f32 %v1730, %v1841
        %1843 = vmatmul.bf16.gmra.mxu0 %v1707
        %v1844 = vpop.f32.mrf.mxu0
        %v1845 = vadd.f32 %v1730, %v1844
        %v1846 = vpop.f32.mrf.mxu0
        %v1847 = vadd.f32 %v1730, %v1846
        %1848 = vmatmul.bf16.gmra.mxu0 %v1708
        %v1849 = vpop.f32.mrf.mxu0
        %v1850 = vadd.f32 %v1730, %v1849
        %v1851 = vpop.f32.mrf.mxu0
        %v1852 = vadd.f32 %v1730, %v1851
        %1853 = vmatmul.bf16.gmra.mxu0 %v1709
        %v1854 = vpop.f32.mrf.mxu0
        %v1855 = vadd.f32 %v1730, %v1854
        %v1856 = vpop.f32.mrf.mxu0
        %v1857 = vadd.f32 %v1730, %v1856
        %1858 = vmatmul.bf16.gmra.mxu0 %v1710
        %v1859 = vpop.f32.mrf.mxu0
        %v1860 = vadd.f32 %v1730, %v1859
        %v1861 = vpop.f32.mrf.mxu0
        %v1862 = vadd.f32 %v1730, %v1861
        %1863 = vmatmul.bf16.gmra.mxu0 %v1711
        %v1864 = vpop.f32.mrf.mxu0
        %v1865 = vadd.f32 %v1730, %v1864
        %v1866 = vpop.f32.mrf.mxu0
        %v1867 = vadd.f32 %v1730, %v1866
        %1868 = vdwg.mxu0
        %1869 = vst [vmem:[%s352] sm:$0xff] %v1790
        %1870 = vst [vmem:[%s352 + $0x8] sm:$0xff] %v1792
        %1871 = vst [vmem:[%s352 + $0x10] sm:$0xff] %v1795
        %1872 = vst [vmem:[%s352 + $0x18] sm:$0xff] %v1797
        %1873 = vst [vmem:[%s352 + $0x20] sm:$0xff] %v1800
        %1874 = vst [vmem:[%s352 + $0x28] sm:$0xff] %v1802
        %1875 = vst [vmem:[%s352 + $0x30] sm:$0xff] %v1805
        %1876 = vst [vmem:[%s352 + $0x38] sm:$0xff] %v1807
        %1877 = vst [vmem:[%s352 + $0x40] sm:$0xff] %v1810
        %1878 = vst [vmem:[%s352 + $0x48] sm:$0xff] %v1812
        %1879 = vst [vmem:[%s352 + $0x50] sm:$0xff] %v1815
        %1880 = vst [vmem:[%s352 + $0x58] sm:$0xff] %v1817
        %1881 = vst [vmem:[%s352 + $0x60] sm:$0xff] %v1820
        %1882 = vst [vmem:[%s352 + $0x68] sm:$0xff] %v1822
        %1883 = vst [vmem:[%s352 + $0x70] sm:$0xff] %v1825
        %1884 = vst [vmem:[%s352 + $0x78] sm:$0xff] %v1827
        %1885 = vst [vmem:[%s352 + $0x80] sm:$0xff] %v1830
        %1886 = vst [vmem:[%s352 + $0x88] sm:$0xff] %v1832
        %1887 = vst [vmem:[%s352 + $0x90] sm:$0xff] %v1835
        %1888 = vst [vmem:[%s352 + $0x98] sm:$0xff] %v1837
        %1889 = vst [vmem:[%s352 + $0xa0] sm:$0xff] %v1840
        %1890 = vst [vmem:[%s352 + $0xa8] sm:$0xff] %v1842
        %1891 = vst [vmem:[%s352 + $0xb0] sm:$0xff] %v1845
        %1892 = vst [vmem:[%s352 + $0xb8] sm:$0xff] %v1847
        %1893 = vst [vmem:[%s352 + $0xc0] sm:$0xff] %v1850
        %1894 = vst [vmem:[%s352 + $0xc8] sm:$0xff] %v1852
        %1895 = vst [vmem:[%s352 + $0xd0] sm:$0xff] %v1855
        %1896 = vst [vmem:[%s352 + $0xd8] sm:$0xff] %v1857
        %1897 = vst [vmem:[%s352 + $0xe0] sm:$0xff] %v1860
        %1898 = vst [vmem:[%s352 + $0xe8] sm:$0xff] %v1862
        %1899 = vst [vmem:[%s352 + $0xf0] sm:$0xff] %v1865
        %1900 = vst [vmem:[%s352 + $0xf8] sm:$0xff] %v1867
      $region64: #{decoder_forward.5} parent=47 // pred_fallthru
        _
      %s1901 = smul.u32 %s23, %s22
      %s1902 = smul.u32 32, %s1901
      %p1903 = scmp.lt.s32.totalorder %s1902, 31
      %s1904 = scalar_select %p1903, %s1902, 31
      %s1905 = smul.addr %s1904, 8
      %s1906 = scalar_lea.vmem %s7, %s1905
      // Predicated region
      $region65: #{decoder_forward.5} parent=47 // pred_check
        %p1907 = pneg %p215
      $region66: #{decoder_forward.5} parent=47 // pred_check_branch
        %1909 = sbr.rel (%p1907) target = $region68
      $region67: #{decoder_forward.5} parent=47 // pred_region
        %s1910 = smul.u32 %s23, %s22
        %s1911 = smul.u32 32, %s1910
      $region68: #{decoder_forward.5} parent=47 // pred_fallthru
        _
    $region48: #{decoder_forward.5} parent=5 // pred_fallthru
      _
    %p1912 = scmp.le.s32.totalorder 2, %s13
    // Predicated region
    $region69: #{decoder_forward.5} parent=5 // pred_check
      %p1913 = pneg %p1912
    $region70: #{decoder_forward.5} parent=5 // pred_check_branch
      %1915 = sbr.rel (%p1913) target = $region72
    $region71: #{decoder_forward.5} parent=5 // pred_region
      %s1916 = ssub.s32 %s13, 2
      // Predicated region
      $region73: #{decoder_forward.5} parent=71 // pred_check
        %p1917 = pneg %p221
      $region74: #{decoder_forward.5} parent=71 // pred_check_branch
        %1919 = sbr.rel (%p1917) target = $region76
      $region75: #{decoder_forward.5} parent=71 // pred_region
        %s1920 = smul.u32 %s25, %s24
        %s1921 = smul.u32 32, %s1920
        %p1922 = scmp.lt.s32.totalorder %s1921, 31
        %s1923 = scalar_select %p1922, %s1921, 31
        %s1924 = smul.addr %s1923, 8
        %s1925 = scalar_lea.vmem %s7, %s1924
      $region76: #{decoder_forward.5} parent=71 // pred_fallthru
        _
    $region72: #{decoder_forward.5} parent=5 // pred_fallthru
      _
  $region6: #{decoder_forward.5} parent=0 // loop_footer
    %s17 = sadd.s32 1, %s13
  $region7: #{decoder_forward.5} parent=0 // loop_footer_branch
    %12 = sbr.rel target = $region3
  $region8: #{decoder_forward.5} parent=0 // loop_exit
    _

</llo_original>
